<compile_context>
chip_gen: v6e
topology: v6e:2x2x1
jax: 0.10.0
libtpu: 0.0.40
codegen_flags: <defaults>
</compile_context>

<pallas_src>
import math

import jax
import jax.numpy as jnp
from jax import lax
from jax.experimental import pallas as pl
from jax.experimental.pallas import tpu as pltpu

# ---- model hyperparameters (small, consistent with the module's __init__) ----
EMB = 32          # embedding_dim
HEADS = 4         # head_num
QKV = 8           # qkv_dim
MS_HIDDEN = 16    # ms_hidden_dim (MixedScore MLP hidden)
FF_HIDDEN = 64    # ff_hidden_dim
INV_SQRT_QKV = 1.0 / math.sqrt(QKV)
SQRT_QKV = math.sqrt(QKV)
EPS = 1e-5        # InstanceNorm1d default eps
N_TILE = 128      # rows of N per inner attention step (flash-style row tiling)


def _instance_norm(x, gamma, beta):
    # x: (Bb, N, E). InstanceNorm1d over the token dim (N) per embedding channel,
    # biased variance, affine gamma/beta of shape (1, 1, E).
    mean = jnp.mean(x, axis=1, keepdims=True)
    cen = x - mean
    var = jnp.mean(cen * cen, axis=1, keepdims=True)
    # gamma folded into the rsqrt factor: one (Bb,1,E) mul instead of a full-slab mul.
    scale = lax.rsqrt(var + EPS) * gamma
    return cen * scale + beta


def encoding_block_kernel(
    row_ref, col_ref, cost_ref,
    wq_t_ref, wkv_t_ref,                       # bf16 (E, H*D), (E, 2*H*D) weights
    m1wd_ref, m1wc_ref, m1b_ref,               # SMEM: (H, MS) mixed-score layer 1
    m2w_ref, m2b_ref,                          # SMEM: (H, MS), (H, 1) mixed-score layer 2
    wc_t_ref, bc_ref,                          # combine: bf16 (H*D, E), f32 (1, E)
    g1_ref, be1_ref,                           # instance-norm 1 affine (1, 1, E)
    w1_t_ref, b1_ref, w2_t_ref, b2_ref,        # FF: bf16 (E, FF), f32 (1, FF), bf16 (FF, E), f32 (1, E)
    g2_ref, be2_ref,                           # instance-norm 2 affine (1, 1, E)
    out_ref,
    att_ref,                                   # VMEM scratch (Bb, N, H*D) f32
):
    Bb, N, E = row_ref.shape
    M = col_ref.shape[1]
    HD = HEADS * QKV

    row = row_ref[...]     # (Bb, N, E) f32
    col = col_ref[...]     # (Bb, M, E) f32
    cost = cost_ref[...]   # (Bb, N, M) f32

    row_b = row.reshape(Bb * N, E).astype(jnp.bfloat16)
    col_b = col.reshape(Bb * M, E).astype(jnp.bfloat16)

    # Q projection (1/sqrt(qkv) already folded into Wq host-side) and fused K|V
    # projection; bf16 operands, f32 accumulation on the MXU.
    q = jnp.dot(row_b, wq_t_ref[...], preferred_element_type=jnp.float32)
    q_b = q.reshape(Bb, N, HD).astype(jnp.bfloat16)
    kv = jnp.dot(col_b, wkv_t_ref[...],
                 preferred_element_type=jnp.float32).reshape(Bb, M, 2 * HD)
    k_b = kv[:, :, :HD].astype(jnp.bfloat16)
    v_b = kv[:, :, HD:].astype(jnp.bfloat16)

    # Hoist all MixedScore SMEM scalar reads out of the loops (once per grid step).
    m1_wd = [[m1wd_ref[h, j] for j in range(MS_HIDDEN)] for h in range(HEADS)]
    m1_wc = [[m1wc_ref[h, j] for j in range(MS_HIDDEN)] for h in range(HEADS)]
    m1_b = [[m1b_ref[h, j] for j in range(MS_HIDDEN)] for h in range(HEADS)]
    m2_w = [[m2w_ref[h, j] for j in range(MS_HIDDEN)] for h in range(HEADS)]
    m2_b = [m2b_ref[h, 0] for h in range(HEADS)]

    # Flash-style row tiling over N: per-head (rows, M) intermediates stay bounded.
    for n0 in range(0, N, N_TILE):
        n1 = min(n0 + N_TILE, N)
        cost_c = cost[:, n0:n1, :]                       # (Bb, rows, M)
        for h in range(HEADS):                           # static unroll over heads
            sl = slice(h * QKV, (h + 1) * QKV)
            qc = q_b[:, n0:n1, sl]                       # (Bb, rows, D) bf16
            kh = k_b[:, :, sl]                           # (Bb, M,    D) bf16
            vh = v_b[:, :, sl]                           # (Bb, M,    D) bf16

            # Batched score (contraction over D); scale pre-folded into Wq.
            dot = jnp.einsum("bnd,bmd->bnm", qc, kh,
                             preferred_element_type=jnp.float32)

            # MixedScore MLP (2 -> MS_HIDDEN -> 1), scalar coefficients from SMEM.
            mixed = jnp.full(dot.shape, m2_b[h], jnp.float32)
            for j in range(MS_HIDDEN):
                a = dot * m1_wd[h][j] + cost_c * m1_wc[h][j] + m1_b[h][j]
                mixed = mixed + jnp.maximum(a, 0.0) * m2_w[h][j]

            # softmax over columns (reciprocal on the EUP slot)
            mx = jnp.max(mixed, axis=-1, keepdims=True)
            ex = jnp.exp(mixed - mx)
            inv_den = pl.reciprocal(jnp.sum(ex, axis=-1, keepdims=True), approx=True)
            weights = (ex * inv_den).astype(jnp.bfloat16)

            # Write this head's output into its static column slice of the
            # (Bb, N, H*D) scratch -> no lane-repack concatenate afterwards.
            att_ref[:, n0:n1, sl] = jnp.einsum(
                "bnm,bmd->bnd", weights, vh, preferred_element_type=jnp.float32)

    # Single fused combine matmul on the already-concatenated scratch.
    out_concat = att_ref[...].reshape(Bb * N, HD).astype(jnp.bfloat16)
    mh = jnp.dot(out_concat, wc_t_ref[...],
                 preferred_element_type=jnp.float32) + bc_ref[...]   # (Bb*N, E)

    # Add & InstanceNorm 1
    out1 = _instance_norm(row + mh.reshape(Bb, N, E), g1_ref[...], be1_ref[...])

    # FeedForward: W2(relu(W1(x))) on the flattened slab, bf16 operands / f32 acc.
    out1_b = out1.reshape(Bb * N, E).astype(jnp.bfloat16)
    h1 = jnp.maximum(
        jnp.dot(out1_b, w1_t_ref[...], preferred_element_type=jnp.float32) + b1_ref[...],
        0.0)
    out2 = jnp.dot(h1.astype(jnp.bfloat16), w2_t_ref[...],
                   preferred_element_type=jnp.float32) + b2_ref[...]

    # Add & InstanceNorm 2
    out3 = _instance_norm(out1 + out2.reshape(Bb, N, E), g2_ref[...], be2_ref[...])
    out_ref[...] = out3


def _pick_block_batch(B, N, target_rows=512):
    # Largest divisor Bb of B with Bb*N <= ~target_rows (amortize per-step
    # overhead) while keeping B // Bb >= 2 so the "parallel" batch axis can be
    # sharded across v7x's two TensorCores (neutral on v5e/v6e).
    bb = 1
    for d in range(1, B + 1):
        if B % d:
            continue
        if d * N > target_rows:
            continue
        if B >= 2 and B // d < 2:
            continue
        bb = max(bb, d)
    return bb


def encoding_block(row_emb, col_emb, cost_mat, p):
    B, N, E = row_emb.shape
    M = col_emb.shape[1]
    assert E == EMB

    Bb = _pick_block_batch(B, N)
    bf16 = jnp.bfloat16

    # glue: pre-transpose linear weights (cast to bf16 for MXU-native matmuls),
    # fold the 1/sqrt(qkv) attention scale into Wq, fuse K|V weights, reshape
    # biases, split mixed-score weights.
    wq_t = (p["Wq"] * INV_SQRT_QKV).T.astype(bf16)                   # (E, H*D)
    wkv_t = jnp.concatenate([p["Wk"].T, p["Wv"].T], axis=1).astype(bf16)  # (E, 2*H*D)
    wc_t = p["Wc"].T.astype(bf16)                                    # (H*D, E)
    bc = p["bc"].reshape(1, -1)
    w1_t = p["W1"].T.astype(bf16)                                    # (E, FF)
    b1 = p["b1"].reshape(1, -1)
    w2_t = p["W2"].T.astype(bf16)                                    # (FF, E)
    b2 = p["b2"].reshape(1, -1)
    g1 = p["g1"].reshape(1, 1, -1)
    be1 = p["be1"].reshape(1, 1, -1)
    g2 = p["g2"].reshape(1, 1, -1)
    be2 = p["be2"].reshape(1, 1, -1)
    m1wd = p["mix1_w"][:, 0, :]   # (H, MS)
    m1wc = p["mix1_w"][:, 1, :]   # (H, MS)
    m1b = p["mix1_b"]             # (H, MS)
    m2w = p["mix2_w"][:, :, 0]    # (H, MS)
    m2b = p["mix2_b"]             # (H, 1)

    def vspec(a):
        nd = a.ndim
        return pl.BlockSpec(a.shape, lambda g, _nd=nd: (0,) * _nd)

    def sspec():
        return pl.BlockSpec(memory_space=pltpu.MemorySpace.SMEM)

    in_specs = [
        pl.BlockSpec((Bb, N, E), lambda g: (g, 0, 0)),   # row_emb
        pl.BlockSpec((Bb, M, E), lambda g: (g, 0, 0)),   # col_emb
        pl.BlockSpec((Bb, N, M), lambda g: (g, 0, 0)),   # cost_mat
        vspec(wq_t), vspec(wkv_t),
        sspec(), sspec(), sspec(), sspec(), sspec(),     # mixed-score params in SMEM
        vspec(wc_t), vspec(bc),
        vspec(g1), vspec(be1),
        vspec(w1_t), vspec(b1), vspec(w2_t), vspec(b2),
        vspec(g2), vspec(be2),
    ]
    out_spec = pl.BlockSpec((Bb, N, E), lambda g: (g, 0, 0))

    return pl.pallas_call(
        encoding_block_kernel,
        out_shape=jax.ShapeDtypeStruct((B, N, E), jnp.float32),
        grid=(B // Bb,),
        in_specs=in_specs,
        out_specs=out_spec,
        scratch_shapes=[pltpu.VMEM((Bb, N, HEADS * QKV), jnp.float32)],
        compiler_params=pltpu.CompilerParams(
            dimension_semantics=("parallel",),            # batch axis is independent
            vmem_limit_bytes=32 * 1024 * 1024),           # >= v5e default, < v7x physical
    )(row_emb, col_emb, cost_mat,
      wq_t, wkv_t,
      m1wd, m1wc, m1b, m2w, m2b,
      wc_t, bc, g1, be1, w1_t, b1, w2_t, b2, g2, be2)


# ---------------------- deterministic parameter init --------------------------
def init_params(key):
    ks = jax.random.split(key, 16)

    def lin_w(k, out_dim, in_dim):
        bound = 1.0 / math.sqrt(in_dim)
        return jax.random.uniform(k, (out_dim, in_dim), jnp.float32, -bound, bound)

    def lin_b(k, out_dim, in_dim):
        bound = 1.0 / math.sqrt(in_dim)
        return jax.random.uniform(k, (out_dim,), jnp.float32, -bound, bound)

    mix1_init = math.sqrt(1.0 / 2.0)
    mix2_init = math.sqrt(1.0 / 16.0)
    return {
        "Wq": lin_w(ks[0], HEADS * QKV, EMB),
        "Wk": lin_w(ks[1], HEADS * QKV, EMB),
        "Wv": lin_w(ks[2], HEADS * QKV, EMB),
        "mix1_w": jax.random.uniform(ks[3], (HEADS, 2, MS_HIDDEN), jnp.float32,
                                     -mix1_init, mix1_init),
        "mix1_b": jax.random.uniform(ks[4], (HEADS, MS_HIDDEN), jnp.float32,
                                     -mix1_init, mix1_init),
        "mix2_w": jax.random.uniform(ks[5], (HEADS, MS_HIDDEN, 1), jnp.float32,
                                     -mix2_init, mix2_init),
        "mix2_b": jax.random.uniform(ks[6], (HEADS, 1), jnp.float32,
                                     -mix2_init, mix2_init),
        "Wc": lin_w(ks[7], EMB, HEADS * QKV),
        "bc": lin_b(ks[8], EMB, HEADS * QKV),
        "g1": jnp.ones((EMB,), jnp.float32),
        "be1": jnp.zeros((EMB,), jnp.float32),
        "W1": lin_w(ks[9], FF_HIDDEN, EMB),
        "b1": lin_b(ks[10], FF_HIDDEN, EMB),
        "W2": lin_w(ks[11], EMB, FF_HIDDEN),
        "b2": lin_b(ks[12], EMB, FF_HIDDEN),
        "g2": jnp.ones((EMB,), jnp.float32),
        "be2": jnp.zeros((EMB,), jnp.float32),
    }


# ---------------------- pure-JAX reference for verification -------------------
def reference(row_emb, col_emb, cost_mat, p):
    B, N, E = row_emb.shape

    def rbh(x):  # reshape_by_heads
        return x.reshape(B, -1, HEADS, QKV).transpose(0, 2, 1, 3)

    q = rbh(jnp.einsum("bne,oe->bno", row_emb, p["Wq"]))
    k = rbh(jnp.einsum("bme,oe->bmo", col_emb, p["Wk"]))
    v = rbh(jnp.einsum("bme,oe->bmo", col_emb, p["Wv"]))

    dot = jnp.einsum("bhnd,bhmd->bhnm", q, k) / SQRT_QKV
    cost = jnp.broadcast_to(cost_mat[:, None, :, :], dot.shape)
    two = jnp.stack([dot, cost], axis=-1)                                   # (B,H,N,M,2)
    ms1 = jnp.einsum("bhnmt,htk->bhnmk", two, p["mix1_w"]) \
        + p["mix1_b"][None, :, None, None, :]
    ms1 = jnp.maximum(ms1, 0.0)
    ms2 = jnp.einsum("bhnmk,hko->bhnmo", ms1, p["mix2_w"])[..., 0] \
        + p["mix2_b"][None, :, None, None, 0]
    w = jax.nn.softmax(ms2, axis=-1)
    out = jnp.einsum("bhnm,bhmd->bhnd", w, v)
    out_concat = out.transpose(0, 2, 1, 3).reshape(B, N, HEADS * QKV)
    mh = jnp.einsum("bnk,ek->bne", out_concat, p["Wc"]) + p["bc"]

    def inorm(x, g, b):
        mean = x.mean(axis=1, keepdims=True)
        var = ((x - mean) ** 2).mean(axis=1, keepdims=True)
        return (x - mean) / jnp.sqrt(var + EPS) * g + b

    out1 = inorm(row_emb + mh, p["g1"], p["be1"])
    h1 = jnp.maximum(jnp.einsum("bne,fe->bnf", out1, p["W1"]) + p["b1"], 0.0)
    out2 = jnp.einsum("bnf,ef->bne", h1, p["W2"]) + p["b2"]
    return inorm(out1 + out2, p["g2"], p["be2"])


if __name__ == "__main__":
    key = jax.random.PRNGKey(0)
    kp, k1, k2, k3 = jax.random.split(key, 4)
    params = init_params(kp)

    B, N, M = 2, 8, 8
    row_emb = jax.random.normal(k1, (B, N, EMB), jnp.float32)
    col_emb = jax.random.normal(k2, (B, M, EMB), jnp.float32)
    cost_mat = jax.random.uniform(k3, (B, N, M), jnp.float32)

    out = encoding_block(row_emb, col_emb, cost_mat, params)
    out = jax.block_until_ready(out)

    ref = reference(row_emb, col_emb, cost_mat, params)
    assert out.shape == (B, N, EMB)
    max_err = float(jnp.max(jnp.abs(out - ref)))
    assert jnp.allclose(out, ref, atol=2e-2, rtol=2e-2), f"max abs err = {max_err}"
    print("KERNEL_OK")
</pallas_src>

<mosaic_0001>
module attributes {stable_mosaic.version = 11 : i64} {
  func.func @encoding_block_kernel(%arg0: i32, %arg1: memref<1x8x32xf32, #tpu.memory_space<vmem>>, %arg2: memref<1x8x32xf32, #tpu.memory_space<vmem>>, %arg3: memref<1x8x8xf32, #tpu.memory_space<vmem>>, %arg4: memref<32x32xbf16, #tpu.memory_space<vmem>>, %arg5: memref<32x64xbf16, #tpu.memory_space<vmem>>, %arg6: memref<4x16xf32, #tpu.memory_space<smem>>, %arg7: memref<4x16xf32, #tpu.memory_space<smem>>, %arg8: memref<4x16xf32, #tpu.memory_space<smem>>, %arg9: memref<4x16xf32, #tpu.memory_space<smem>>, %arg10: memref<4x1xf32, #tpu.memory_space<smem>>, %arg11: memref<32x32xbf16, #tpu.memory_space<vmem>>, %arg12: memref<1x32xf32, #tpu.memory_space<vmem>>, %arg13: memref<1x1x32xf32, #tpu.memory_space<vmem>>, %arg14: memref<1x1x32xf32, #tpu.memory_space<vmem>>, %arg15: memref<32x64xbf16, #tpu.memory_space<vmem>>, %arg16: memref<1x64xf32, #tpu.memory_space<vmem>>, %arg17: memref<64x32xbf16, #tpu.memory_space<vmem>>, %arg18: memref<1x32xf32, #tpu.memory_space<vmem>>, %arg19: memref<1x1x32xf32, #tpu.memory_space<vmem>>, %arg20: memref<1x1x32xf32, #tpu.memory_space<vmem>>, %arg21: memref<1x8x32xf32, #tpu.memory_space<vmem>>, %arg22: memref<1x8x32xf32, #tpu.memory_space<vmem>>) attributes {dimension_semantics = [#tpu.dimension_semantics<parallel>], iteration_bounds = array<i64: 2>, scalar_prefetch = 0 : i64, scratch_operands = 1 : i64, tpu.core_type = #tpu.core_type<tc>, window_params = [{transform_indices = @transform_0, window_bounds = array<i64: 1, 8, 32>}, {transform_indices = @transform_1, window_bounds = array<i64: 1, 8, 32>}, {transform_indices = @transform_2, window_bounds = array<i64: 1, 8, 8>}, {pipeline_mode = #tpu.pipeline_mode<synchronous>, transform_indices = @transform_3, window_bounds = array<i64: 32, 32>}, {pipeline_mode = #tpu.pipeline_mode<synchronous>, transform_indices = @transform_4, window_bounds = array<i64: 32, 64>}, {transform_indices = @transform_5, window_bounds = array<i64: 4, 16>}, {transform_indices = @transform_6, window_bounds = array<i64: 4, 16>}, {transform_indices = @transform_7, window_bounds = array<i64: 4, 16>}, {transform_indices = @transform_8, window_bounds = array<i64: 4, 16>}, {transform_indices = @transform_9, window_bounds = array<i64: 4, 1>}, {pipeline_mode = #tpu.pipeline_mode<synchronous>, transform_indices = @transform_10, window_bounds = array<i64: 32, 32>}, {pipeline_mode = #tpu.pipeline_mode<synchronous>, transform_indices = @transform_11, window_bounds = array<i64: 1, 32>}, {pipeline_mode = #tpu.pipeline_mode<synchronous>, transform_indices = @transform_12, window_bounds = array<i64: 1, 1, 32>}, {pipeline_mode = #tpu.pipeline_mode<synchronous>, transform_indices = @transform_13, window_bounds = array<i64: 1, 1, 32>}, {pipeline_mode = #tpu.pipeline_mode<synchronous>, transform_indices = @transform_14, window_bounds = array<i64: 32, 64>}, {pipeline_mode = #tpu.pipeline_mode<synchronous>, transform_indices = @transform_15, window_bounds = array<i64: 1, 64>}, {pipeline_mode = #tpu.pipeline_mode<synchronous>, transform_indices = @transform_16, window_bounds = array<i64: 64, 32>}, {pipeline_mode = #tpu.pipeline_mode<synchronous>, transform_indices = @transform_17, window_bounds = array<i64: 1, 32>}, {pipeline_mode = #tpu.pipeline_mode<synchronous>, transform_indices = @transform_18, window_bounds = array<i64: 1, 1, 32>}, {pipeline_mode = #tpu.pipeline_mode<synchronous>, transform_indices = @transform_19, window_bounds = array<i64: 1, 1, 32>}, {transform_indices = @transform_20, window_bounds = array<i64: 1, 8, 32>}]} {
    %c0 = arith.constant 0 : index
    %c0_0 = arith.constant 0 : index
    %c0_1 = arith.constant 0 : index
    %0 = vector.load %arg1[%c0, %c0_0, %c0_1] : memref<1x8x32xf32, #tpu.memory_space<vmem>>, vector<1x8x32xf32>
    %c0_2 = arith.constant 0 : index
    %c0_3 = arith.constant 0 : index
    %c0_4 = arith.constant 0 : index
    %1 = vector.load %arg2[%c0_2, %c0_3, %c0_4] : memref<1x8x32xf32, #tpu.memory_space<vmem>>, vector<1x8x32xf32>
    %c0_5 = arith.constant 0 : index
    %c0_6 = arith.constant 0 : index
    %c0_7 = arith.constant 0 : index
    %2 = vector.load %arg3[%c0_5, %c0_6, %c0_7] : memref<1x8x8xf32, #tpu.memory_space<vmem>>, vector<1x8x8xf32>
    %3 = vector.shape_cast %0 : vector<1x8x32xf32> to vector<8x32xf32>
    %4 = arith.truncf %3 : vector<8x32xf32> to vector<8x32xbf16>
    %5 = vector.shape_cast %1 : vector<1x8x32xf32> to vector<8x32xf32>
    %6 = arith.truncf %5 : vector<8x32xf32> to vector<8x32xbf16>
    %c0_8 = arith.constant 0 : index
    %c0_9 = arith.constant 0 : index
    %7 = vector.load %arg4[%c0_8, %c0_9] : memref<32x32xbf16, #tpu.memory_space<vmem>>, vector<32x32xbf16>
    %cst = arith.constant dense<0.000000e+00> : vector<8x32xf32>
    %8 = tpu.matmul %4, %7, %cst {dimension_numbers = #tpu.dot_dimension_numbers<[1], [0], [0], [1], [0, 0, 1, 1], [], []>} : vector<8x32xbf16>, vector<32x32xbf16>, vector<8x32xf32> -> vector<8x32xf32>
    %9 = vector.shape_cast %8 : vector<8x32xf32> to vector<1x8x32xf32>
    %10 = arith.truncf %9 : vector<1x8x32xf32> to vector<1x8x32xbf16>
    %c0_10 = arith.constant 0 : index
    %c0_11 = arith.constant 0 : index
    %11 = vector.load %arg5[%c0_10, %c0_11] : memref<32x64xbf16, #tpu.memory_space<vmem>>, vector<32x64xbf16>
    %cst_12 = arith.constant dense<0.000000e+00> : vector<8x64xf32>
    %12 = tpu.matmul %6, %11, %cst_12 {dimension_numbers = #tpu.dot_dimension_numbers<[1], [0], [0], [1], [0, 0, 1, 1], [], []>} : vector<8x32xbf16>, vector<32x64xbf16>, vector<8x64xf32> -> vector<8x64xf32>
    %13 = vector.shape_cast %12 : vector<8x64xf32> to vector<1x8x64xf32>
    %14 = vector.extract_strided_slice %13 {offsets = [0, 0, 0], sizes = [1, 8, 32], strides = [1, 1, 1]} : vector<1x8x64xf32> to vector<1x8x32xf32>
    %15 = arith.truncf %14 : vector<1x8x32xf32> to vector<1x8x32xbf16>
    %16 = vector.extract_strided_slice %13 {offsets = [0, 0, 32], sizes = [1, 8, 32], strides = [1, 1, 1]} : vector<1x8x64xf32> to vector<1x8x32xf32>
    %17 = arith.truncf %16 : vector<1x8x32xf32> to vector<1x8x32xbf16>
    %c0_13 = arith.constant 0 : index
    %c0_14 = arith.constant 0 : index
    %18 = memref.load %arg6[%c0_13, %c0_14] : memref<4x16xf32, #tpu.memory_space<smem>>
    %c0_15 = arith.constant 0 : index
    %c1 = arith.constant 1 : index
    %19 = memref.load %arg6[%c0_15, %c1] : memref<4x16xf32, #tpu.memory_space<smem>>
    %c0_16 = arith.constant 0 : index
    %c2 = arith.constant 2 : index
    %20 = memref.load %arg6[%c0_16, %c2] : memref<4x16xf32, #tpu.memory_space<smem>>
    %c0_17 = arith.constant 0 : index
    %c3 = arith.constant 3 : index
    %21 = memref.load %arg6[%c0_17, %c3] : memref<4x16xf32, #tpu.memory_space<smem>>
    %c0_18 = arith.constant 0 : index
    %c4 = arith.constant 4 : index
    %22 = memref.load %arg6[%c0_18, %c4] : memref<4x16xf32, #tpu.memory_space<smem>>
    %c0_19 = arith.constant 0 : index
    %c5 = arith.constant 5 : index
    %23 = memref.load %arg6[%c0_19, %c5] : memref<4x16xf32, #tpu.memory_space<smem>>
    %c0_20 = arith.constant 0 : index
    %c6 = arith.constant 6 : index
    %24 = memref.load %arg6[%c0_20, %c6] : memref<4x16xf32, #tpu.memory_space<smem>>
    %c0_21 = arith.constant 0 : index
    %c7 = arith.constant 7 : index
    %25 = memref.load %arg6[%c0_21, %c7] : memref<4x16xf32, #tpu.memory_space<smem>>
    %c0_22 = arith.constant 0 : index
    %c8 = arith.constant 8 : index
    %26 = memref.load %arg6[%c0_22, %c8] : memref<4x16xf32, #tpu.memory_space<smem>>
    %c0_23 = arith.constant 0 : index
    %c9 = arith.constant 9 : index
    %27 = memref.load %arg6[%c0_23, %c9] : memref<4x16xf32, #tpu.memory_space<smem>>
    %c0_24 = arith.constant 0 : index
    %c10 = arith.constant 10 : index
    %28 = memref.load %arg6[%c0_24, %c10] : memref<4x16xf32, #tpu.memory_space<smem>>
    %c0_25 = arith.constant 0 : index
    %c11 = arith.constant 11 : index
    %29 = memref.load %arg6[%c0_25, %c11] : memref<4x16xf32, #tpu.memory_space<smem>>
    %c0_26 = arith.constant 0 : index
    %c12 = arith.constant 12 : index
    %30 = memref.load %arg6[%c0_26, %c12] : memref<4x16xf32, #tpu.memory_space<smem>>
    %c0_27 = arith.constant 0 : index
    %c13 = arith.constant 13 : index
    %31 = memref.load %arg6[%c0_27, %c13] : memref<4x16xf32, #tpu.memory_space<smem>>
    %c0_28 = arith.constant 0 : index
    %c14 = arith.constant 14 : index
    %32 = memref.load %arg6[%c0_28, %c14] : memref<4x16xf32, #tpu.memory_space<smem>>
    %c0_29 = arith.constant 0 : index
    %c15 = arith.constant 15 : index
    %33 = memref.load %arg6[%c0_29, %c15] : memref<4x16xf32, #tpu.memory_space<smem>>
    %c1_30 = arith.constant 1 : index
    %c0_31 = arith.constant 0 : index
    %34 = memref.load %arg6[%c1_30, %c0_31] : memref<4x16xf32, #tpu.memory_space<smem>>
    %c1_32 = arith.constant 1 : index
    %c1_33 = arith.constant 1 : index
    %35 = memref.load %arg6[%c1_32, %c1_33] : memref<4x16xf32, #tpu.memory_space<smem>>
    %c1_34 = arith.constant 1 : index
    %c2_35 = arith.constant 2 : index
    %36 = memref.load %arg6[%c1_34, %c2_35] : memref<4x16xf32, #tpu.memory_space<smem>>
    %c1_36 = arith.constant 1 : index
    %c3_37 = arith.constant 3 : index
    %37 = memref.load %arg6[%c1_36, %c3_37] : memref<4x16xf32, #tpu.memory_space<smem>>
    %c1_38 = arith.constant 1 : index
    %c4_39 = arith.constant 4 : index
    %38 = memref.load %arg6[%c1_38, %c4_39] : memref<4x16xf32, #tpu.memory_space<smem>>
    %c1_40 = arith.constant 1 : index
    %c5_41 = arith.constant 5 : index
    %39 = memref.load %arg6[%c1_40, %c5_41] : memref<4x16xf32, #tpu.memory_space<smem>>
    %c1_42 = arith.constant 1 : index
    %c6_43 = arith.constant 6 : index
    %40 = memref.load %arg6[%c1_42, %c6_43] : memref<4x16xf32, #tpu.memory_space<smem>>
    %c1_44 = arith.constant 1 : index
    %c7_45 = arith.constant 7 : index
    %41 = memref.load %arg6[%c1_44, %c7_45] : memref<4x16xf32, #tpu.memory_space<smem>>
    %c1_46 = arith.constant 1 : index
    %c8_47 = arith.constant 8 : index
    %42 = memref.load %arg6[%c1_46, %c8_47] : memref<4x16xf32, #tpu.memory_space<smem>>
    %c1_48 = arith.constant 1 : index
    %c9_49 = arith.constant 9 : index
    %43 = memref.load %arg6[%c1_48, %c9_49] : memref<4x16xf32, #tpu.memory_space<smem>>
    %c1_50 = arith.constant 1 : index
    %c10_51 = arith.constant 10 : index
    %44 = memref.load %arg6[%c1_50, %c10_51] : memref<4x16xf32, #tpu.memory_space<smem>>
    %c1_52 = arith.constant 1 : index
    %c11_53 = arith.constant 11 : index
    %45 = memref.load %arg6[%c1_52, %c11_53] : memref<4x16xf32, #tpu.memory_space<smem>>
    %c1_54 = arith.constant 1 : index
    %c12_55 = arith.constant 12 : index
    %46 = memref.load %arg6[%c1_54, %c12_55] : memref<4x16xf32, #tpu.memory_space<smem>>
    %c1_56 = arith.constant 1 : index
    %c13_57 = arith.constant 13 : index
    %47 = memref.load %arg6[%c1_56, %c13_57] : memref<4x16xf32, #tpu.memory_space<smem>>
    %c1_58 = arith.constant 1 : index
    %c14_59 = arith.constant 14 : index
    %48 = memref.load %arg6[%c1_58, %c14_59] : memref<4x16xf32, #tpu.memory_space<smem>>
    %c1_60 = arith.constant 1 : index
    %c15_61 = arith.constant 15 : index
    %49 = memref.load %arg6[%c1_60, %c15_61] : memref<4x16xf32, #tpu.memory_space<smem>>
    %c2_62 = arith.constant 2 : index
    %c0_63 = arith.constant 0 : index
    %50 = memref.load %arg6[%c2_62, %c0_63] : memref<4x16xf32, #tpu.memory_space<smem>>
    %c2_64 = arith.constant 2 : index
    %c1_65 = arith.constant 1 : index
    %51 = memref.load %arg6[%c2_64, %c1_65] : memref<4x16xf32, #tpu.memory_space<smem>>
    %c2_66 = arith.constant 2 : index
    %c2_67 = arith.constant 2 : index
    %52 = memref.load %arg6[%c2_66, %c2_67] : memref<4x16xf32, #tpu.memory_space<smem>>
    %c2_68 = arith.constant 2 : index
    %c3_69 = arith.constant 3 : index
    %53 = memref.load %arg6[%c2_68, %c3_69] : memref<4x16xf32, #tpu.memory_space<smem>>
    %c2_70 = arith.constant 2 : index
    %c4_71 = arith.constant 4 : index
    %54 = memref.load %arg6[%c2_70, %c4_71] : memref<4x16xf32, #tpu.memory_space<smem>>
    %c2_72 = arith.constant 2 : index
    %c5_73 = arith.constant 5 : index
    %55 = memref.load %arg6[%c2_72, %c5_73] : memref<4x16xf32, #tpu.memory_space<smem>>
    %c2_74 = arith.constant 2 : index
    %c6_75 = arith.constant 6 : index
    %56 = memref.load %arg6[%c2_74, %c6_75] : memref<4x16xf32, #tpu.memory_space<smem>>
    %c2_76 = arith.constant 2 : index
    %c7_77 = arith.constant 7 : index
    %57 = memref.load %arg6[%c2_76, %c7_77] : memref<4x16xf32, #tpu.memory_space<smem>>
    %c2_78 = arith.constant 2 : index
    %c8_79 = arith.constant 8 : index
    %58 = memref.load %arg6[%c2_78, %c8_79] : memref<4x16xf32, #tpu.memory_space<smem>>
    %c2_80 = arith.constant 2 : index
    %c9_81 = arith.constant 9 : index
    %59 = memref.load %arg6[%c2_80, %c9_81] : memref<4x16xf32, #tpu.memory_space<smem>>
    %c2_82 = arith.constant 2 : index
    %c10_83 = arith.constant 10 : index
    %60 = memref.load %arg6[%c2_82, %c10_83] : memref<4x16xf32, #tpu.memory_space<smem>>
    %c2_84 = arith.constant 2 : index
    %c11_85 = arith.constant 11 : index
    %61 = memref.load %arg6[%c2_84, %c11_85] : memref<4x16xf32, #tpu.memory_space<smem>>
    %c2_86 = arith.constant 2 : index
    %c12_87 = arith.constant 12 : index
    %62 = memref.load %arg6[%c2_86, %c12_87] : memref<4x16xf32, #tpu.memory_space<smem>>
    %c2_88 = arith.constant 2 : index
    %c13_89 = arith.constant 13 : index
    %63 = memref.load %arg6[%c2_88, %c13_89] : memref<4x16xf32, #tpu.memory_space<smem>>
    %c2_90 = arith.constant 2 : index
    %c14_91 = arith.constant 14 : index
    %64 = memref.load %arg6[%c2_90, %c14_91] : memref<4x16xf32, #tpu.memory_space<smem>>
    %c2_92 = arith.constant 2 : index
    %c15_93 = arith.constant 15 : index
    %65 = memref.load %arg6[%c2_92, %c15_93] : memref<4x16xf32, #tpu.memory_space<smem>>
    %c3_94 = arith.constant 3 : index
    %c0_95 = arith.constant 0 : index
    %66 = memref.load %arg6[%c3_94, %c0_95] : memref<4x16xf32, #tpu.memory_space<smem>>
    %c3_96 = arith.constant 3 : index
    %c1_97 = arith.constant 1 : index
    %67 = memref.load %arg6[%c3_96, %c1_97] : memref<4x16xf32, #tpu.memory_space<smem>>
    %c3_98 = arith.constant 3 : index
    %c2_99 = arith.constant 2 : index
    %68 = memref.load %arg6[%c3_98, %c2_99] : memref<4x16xf32, #tpu.memory_space<smem>>
    %c3_100 = arith.constant 3 : index
    %c3_101 = arith.constant 3 : index
    %69 = memref.load %arg6[%c3_100, %c3_101] : memref<4x16xf32, #tpu.memory_space<smem>>
    %c3_102 = arith.constant 3 : index
    %c4_103 = arith.constant 4 : index
    %70 = memref.load %arg6[%c3_102, %c4_103] : memref<4x16xf32, #tpu.memory_space<smem>>
    %c3_104 = arith.constant 3 : index
    %c5_105 = arith.constant 5 : index
    %71 = memref.load %arg6[%c3_104, %c5_105] : memref<4x16xf32, #tpu.memory_space<smem>>
    %c3_106 = arith.constant 3 : index
    %c6_107 = arith.constant 6 : index
    %72 = memref.load %arg6[%c3_106, %c6_107] : memref<4x16xf32, #tpu.memory_space<smem>>
    %c3_108 = arith.constant 3 : index
    %c7_109 = arith.constant 7 : index
    %73 = memref.load %arg6[%c3_108, %c7_109] : memref<4x16xf32, #tpu.memory_space<smem>>
    %c3_110 = arith.constant 3 : index
    %c8_111 = arith.constant 8 : index
    %74 = memref.load %arg6[%c3_110, %c8_111] : memref<4x16xf32, #tpu.memory_space<smem>>
    %c3_112 = arith.constant 3 : index
    %c9_113 = arith.constant 9 : index
    %75 = memref.load %arg6[%c3_112, %c9_113] : memref<4x16xf32, #tpu.memory_space<smem>>
    %c3_114 = arith.constant 3 : index
    %c10_115 = arith.constant 10 : index
    %76 = memref.load %arg6[%c3_114, %c10_115] : memref<4x16xf32, #tpu.memory_space<smem>>
    %c3_116 = arith.constant 3 : index
    %c11_117 = arith.constant 11 : index
    %77 = memref.load %arg6[%c3_116, %c11_117] : memref<4x16xf32, #tpu.memory_space<smem>>
    %c3_118 = arith.constant 3 : index
    %c12_119 = arith.constant 12 : index
    %78 = memref.load %arg6[%c3_118, %c12_119] : memref<4x16xf32, #tpu.memory_space<smem>>
    %c3_120 = arith.constant 3 : index
    %c13_121 = arith.constant 13 : index
    %79 = memref.load %arg6[%c3_120, %c13_121] : memref<4x16xf32, #tpu.memory_space<smem>>
    %c3_122 = arith.constant 3 : index
    %c14_123 = arith.constant 14 : index
    %80 = memref.load %arg6[%c3_122, %c14_123] : memref<4x16xf32, #tpu.memory_space<smem>>
    %c3_124 = arith.constant 3 : index
    %c15_125 = arith.constant 15 : index
    %81 = memref.load %arg6[%c3_124, %c15_125] : memref<4x16xf32, #tpu.memory_space<smem>>
    %c0_126 = arith.constant 0 : index
    %c0_127 = arith.constant 0 : index
    %82 = memref.load %arg7[%c0_126, %c0_127] : memref<4x16xf32, #tpu.memory_space<smem>>
    %c0_128 = arith.constant 0 : index
    %c1_129 = arith.constant 1 : index
    %83 = memref.load %arg7[%c0_128, %c1_129] : memref<4x16xf32, #tpu.memory_space<smem>>
    %c0_130 = arith.constant 0 : index
    %c2_131 = arith.constant 2 : index
    %84 = memref.load %arg7[%c0_130, %c2_131] : memref<4x16xf32, #tpu.memory_space<smem>>
    %c0_132 = arith.constant 0 : index
    %c3_133 = arith.constant 3 : index
    %85 = memref.load %arg7[%c0_132, %c3_133] : memref<4x16xf32, #tpu.memory_space<smem>>
    %c0_134 = arith.constant 0 : index
    %c4_135 = arith.constant 4 : index
    %86 = memref.load %arg7[%c0_134, %c4_135] : memref<4x16xf32, #tpu.memory_space<smem>>
    %c0_136 = arith.constant 0 : index
    %c5_137 = arith.constant 5 : index
    %87 = memref.load %arg7[%c0_136, %c5_137] : memref<4x16xf32, #tpu.memory_space<smem>>
    %c0_138 = arith.constant 0 : index
    %c6_139 = arith.constant 6 : index
    %88 = memref.load %arg7[%c0_138, %c6_139] : memref<4x16xf32, #tpu.memory_space<smem>>
    %c0_140 = arith.constant 0 : index
    %c7_141 = arith.constant 7 : index
    %89 = memref.load %arg7[%c0_140, %c7_141] : memref<4x16xf32, #tpu.memory_space<smem>>
    %c0_142 = arith.constant 0 : index
    %c8_143 = arith.constant 8 : index
    %90 = memref.load %arg7[%c0_142, %c8_143] : memref<4x16xf32, #tpu.memory_space<smem>>
    %c0_144 = arith.constant 0 : index
    %c9_145 = arith.constant 9 : index
    %91 = memref.load %arg7[%c0_144, %c9_145] : memref<4x16xf32, #tpu.memory_space<smem>>
    %c0_146 = arith.constant 0 : index
    %c10_147 = arith.constant 10 : index
    %92 = memref.load %arg7[%c0_146, %c10_147] : memref<4x16xf32, #tpu.memory_space<smem>>
    %c0_148 = arith.constant 0 : index
    %c11_149 = arith.constant 11 : index
    %93 = memref.load %arg7[%c0_148, %c11_149] : memref<4x16xf32, #tpu.memory_space<smem>>
    %c0_150 = arith.constant 0 : index
    %c12_151 = arith.constant 12 : index
    %94 = memref.load %arg7[%c0_150, %c12_151] : memref<4x16xf32, #tpu.memory_space<smem>>
    %c0_152 = arith.constant 0 : index
    %c13_153 = arith.constant 13 : index
    %95 = memref.load %arg7[%c0_152, %c13_153] : memref<4x16xf32, #tpu.memory_space<smem>>
    %c0_154 = arith.constant 0 : index
    %c14_155 = arith.constant 14 : index
    %96 = memref.load %arg7[%c0_154, %c14_155] : memref<4x16xf32, #tpu.memory_space<smem>>
    %c0_156 = arith.constant 0 : index
    %c15_157 = arith.constant 15 : index
    %97 = memref.load %arg7[%c0_156, %c15_157] : memref<4x16xf32, #tpu.memory_space<smem>>
    %c1_158 = arith.constant 1 : index
    %c0_159 = arith.constant 0 : index
    %98 = memref.load %arg7[%c1_158, %c0_159] : memref<4x16xf32, #tpu.memory_space<smem>>
    %c1_160 = arith.constant 1 : index
    %c1_161 = arith.constant 1 : index
    %99 = memref.load %arg7[%c1_160, %c1_161] : memref<4x16xf32, #tpu.memory_space<smem>>
    %c1_162 = arith.constant 1 : index
    %c2_163 = arith.constant 2 : index
    %100 = memref.load %arg7[%c1_162, %c2_163] : memref<4x16xf32, #tpu.memory_space<smem>>
    %c1_164 = arith.constant 1 : index
    %c3_165 = arith.constant 3 : index
    %101 = memref.load %arg7[%c1_164, %c3_165] : memref<4x16xf32, #tpu.memory_space<smem>>
    %c1_166 = arith.constant 1 : index
    %c4_167 = arith.constant 4 : index
    %102 = memref.load %arg7[%c1_166, %c4_167] : memref<4x16xf32, #tpu.memory_space<smem>>
    %c1_168 = arith.constant 1 : index
    %c5_169 = arith.constant 5 : index
    %103 = memref.load %arg7[%c1_168, %c5_169] : memref<4x16xf32, #tpu.memory_space<smem>>
    %c1_170 = arith.constant 1 : index
    %c6_171 = arith.constant 6 : index
    %104 = memref.load %arg7[%c1_170, %c6_171] : memref<4x16xf32, #tpu.memory_space<smem>>
    %c1_172 = arith.constant 1 : index
    %c7_173 = arith.constant 7 : index
    %105 = memref.load %arg7[%c1_172, %c7_173] : memref<4x16xf32, #tpu.memory_space<smem>>
    %c1_174 = arith.constant 1 : index
    %c8_175 = arith.constant 8 : index
    %106 = memref.load %arg7[%c1_174, %c8_175] : memref<4x16xf32, #tpu.memory_space<smem>>
    %c1_176 = arith.constant 1 : index
    %c9_177 = arith.constant 9 : index
    %107 = memref.load %arg7[%c1_176, %c9_177] : memref<4x16xf32, #tpu.memory_space<smem>>
    %c1_178 = arith.constant 1 : index
    %c10_179 = arith.constant 10 : index
    %108 = memref.load %arg7[%c1_178, %c10_179] : memref<4x16xf32, #tpu.memory_space<smem>>
    %c1_180 = arith.constant 1 : index
    %c11_181 = arith.constant 11 : index
    %109 = memref.load %arg7[%c1_180, %c11_181] : memref<4x16xf32, #tpu.memory_space<smem>>
    %c1_182 = arith.constant 1 : index
    %c12_183 = arith.constant 12 : index
    %110 = memref.load %arg7[%c1_182, %c12_183] : memref<4x16xf32, #tpu.memory_space<smem>>
    %c1_184 = arith.constant 1 : index
    %c13_185 = arith.constant 13 : index
    %111 = memref.load %arg7[%c1_184, %c13_185] : memref<4x16xf32, #tpu.memory_space<smem>>
    %c1_186 = arith.constant 1 : index
    %c14_187 = arith.constant 14 : index
    %112 = memref.load %arg7[%c1_186, %c14_187] : memref<4x16xf32, #tpu.memory_space<smem>>
    %c1_188 = arith.constant 1 : index
    %c15_189 = arith.constant 15 : index
    %113 = memref.load %arg7[%c1_188, %c15_189] : memref<4x16xf32, #tpu.memory_space<smem>>
    %c2_190 = arith.constant 2 : index
    %c0_191 = arith.constant 0 : index
    %114 = memref.load %arg7[%c2_190, %c0_191] : memref<4x16xf32, #tpu.memory_space<smem>>
    %c2_192 = arith.constant 2 : index
    %c1_193 = arith.constant 1 : index
    %115 = memref.load %arg7[%c2_192, %c1_193] : memref<4x16xf32, #tpu.memory_space<smem>>
    %c2_194 = arith.constant 2 : index
    %c2_195 = arith.constant 2 : index
    %116 = memref.load %arg7[%c2_194, %c2_195] : memref<4x16xf32, #tpu.memory_space<smem>>
    %c2_196 = arith.constant 2 : index
    %c3_197 = arith.constant 3 : index
    %117 = memref.load %arg7[%c2_196, %c3_197] : memref<4x16xf32, #tpu.memory_space<smem>>
    %c2_198 = arith.constant 2 : index
    %c4_199 = arith.constant 4 : index
    %118 = memref.load %arg7[%c2_198, %c4_199] : memref<4x16xf32, #tpu.memory_space<smem>>
    %c2_200 = arith.constant 2 : index
    %c5_201 = arith.constant 5 : index
    %119 = memref.load %arg7[%c2_200, %c5_201] : memref<4x16xf32, #tpu.memory_space<smem>>
    %c2_202 = arith.constant 2 : index
    %c6_203 = arith.constant 6 : index
    %120 = memref.load %arg7[%c2_202, %c6_203] : memref<4x16xf32, #tpu.memory_space<smem>>
    %c2_204 = arith.constant 2 : index
    %c7_205 = arith.constant 7 : index
    %121 = memref.load %arg7[%c2_204, %c7_205] : memref<4x16xf32, #tpu.memory_space<smem>>
    %c2_206 = arith.constant 2 : index
    %c8_207 = arith.constant 8 : index
    %122 = memref.load %arg7[%c2_206, %c8_207] : memref<4x16xf32, #tpu.memory_space<smem>>
    %c2_208 = arith.constant 2 : index
    %c9_209 = arith.constant 9 : index
    %123 = memref.load %arg7[%c2_208, %c9_209] : memref<4x16xf32, #tpu.memory_space<smem>>
    %c2_210 = arith.constant 2 : index
    %c10_211 = arith.constant 10 : index
    %124 = memref.load %arg7[%c2_210, %c10_211] : memref<4x16xf32, #tpu.memory_space<smem>>
    %c2_212 = arith.constant 2 : index
    %c11_213 = arith.constant 11 : index
    %125 = memref.load %arg7[%c2_212, %c11_213] : memref<4x16xf32, #tpu.memory_space<smem>>
    %c2_214 = arith.constant 2 : index
    %c12_215 = arith.constant 12 : index
    %126 = memref.load %arg7[%c2_214, %c12_215] : memref<4x16xf32, #tpu.memory_space<smem>>
    %c2_216 = arith.constant 2 : index
    %c13_217 = arith.constant 13 : index
    %127 = memref.load %arg7[%c2_216, %c13_217] : memref<4x16xf32, #tpu.memory_space<smem>>
    %c2_218 = arith.constant 2 : index
    %c14_219 = arith.constant 14 : index
    %128 = memref.load %arg7[%c2_218, %c14_219] : memref<4x16xf32, #tpu.memory_space<smem>>
    %c2_220 = arith.constant 2 : index
    %c15_221 = arith.constant 15 : index
    %129 = memref.load %arg7[%c2_220, %c15_221] : memref<4x16xf32, #tpu.memory_space<smem>>
    %c3_222 = arith.constant 3 : index
    %c0_223 = arith.constant 0 : index
    %130 = memref.load %arg7[%c3_222, %c0_223] : memref<4x16xf32, #tpu.memory_space<smem>>
    %c3_224 = arith.constant 3 : index
    %c1_225 = arith.constant 1 : index
    %131 = memref.load %arg7[%c3_224, %c1_225] : memref<4x16xf32, #tpu.memory_space<smem>>
    %c3_226 = arith.constant 3 : index
    %c2_227 = arith.constant 2 : index
    %132 = memref.load %arg7[%c3_226, %c2_227] : memref<4x16xf32, #tpu.memory_space<smem>>
    %c3_228 = arith.constant 3 : index
    %c3_229 = arith.constant 3 : index
    %133 = memref.load %arg7[%c3_228, %c3_229] : memref<4x16xf32, #tpu.memory_space<smem>>
    %c3_230 = arith.constant 3 : index
    %c4_231 = arith.constant 4 : index
    %134 = memref.load %arg7[%c3_230, %c4_231] : memref<4x16xf32, #tpu.memory_space<smem>>
    %c3_232 = arith.constant 3 : index
    %c5_233 = arith.constant 5 : index
    %135 = memref.load %arg7[%c3_232, %c5_233] : memref<4x16xf32, #tpu.memory_space<smem>>
    %c3_234 = arith.constant 3 : index
    %c6_235 = arith.constant 6 : index
    %136 = memref.load %arg7[%c3_234, %c6_235] : memref<4x16xf32, #tpu.memory_space<smem>>
    %c3_236 = arith.constant 3 : index
    %c7_237 = arith.constant 7 : index
    %137 = memref.load %arg7[%c3_236, %c7_237] : memref<4x16xf32, #tpu.memory_space<smem>>
    %c3_238 = arith.constant 3 : index
    %c8_239 = arith.constant 8 : index
    %138 = memref.load %arg7[%c3_238, %c8_239] : memref<4x16xf32, #tpu.memory_space<smem>>
    %c3_240 = arith.constant 3 : index
    %c9_241 = arith.constant 9 : index
    %139 = memref.load %arg7[%c3_240, %c9_241] : memref<4x16xf32, #tpu.memory_space<smem>>
    %c3_242 = arith.constant 3 : index
    %c10_243 = arith.constant 10 : index
    %140 = memref.load %arg7[%c3_242, %c10_243] : memref<4x16xf32, #tpu.memory_space<smem>>
    %c3_244 = arith.constant 3 : index
    %c11_245 = arith.constant 11 : index
    %141 = memref.load %arg7[%c3_244, %c11_245] : memref<4x16xf32, #tpu.memory_space<smem>>
    %c3_246 = arith.constant 3 : index
    %c12_247 = arith.constant 12 : index
    %142 = memref.load %arg7[%c3_246, %c12_247] : memref<4x16xf32, #tpu.memory_space<smem>>
    %c3_248 = arith.constant 3 : index
    %c13_249 = arith.constant 13 : index
    %143 = memref.load %arg7[%c3_248, %c13_249] : memref<4x16xf32, #tpu.memory_space<smem>>
    %c3_250 = arith.constant 3 : index
    %c14_251 = arith.constant 14 : index
    %144 = memref.load %arg7[%c3_250, %c14_251] : memref<4x16xf32, #tpu.memory_space<smem>>
    %c3_252 = arith.constant 3 : index
    %c15_253 = arith.constant 15 : index
    %145 = memref.load %arg7[%c3_252, %c15_253] : memref<4x16xf32, #tpu.memory_space<smem>>
    %c0_254 = arith.constant 0 : index
    %c0_255 = arith.constant 0 : index
    %146 = memref.load %arg8[%c0_254, %c0_255] : memref<4x16xf32, #tpu.memory_space<smem>>
    %c0_256 = arith.constant 0 : index
    %c1_257 = arith.constant 1 : index
    %147 = memref.load %arg8[%c0_256, %c1_257] : memref<4x16xf32, #tpu.memory_space<smem>>
    %c0_258 = arith.constant 0 : index
    %c2_259 = arith.constant 2 : index
    %148 = memref.load %arg8[%c0_258, %c2_259] : memref<4x16xf32, #tpu.memory_space<smem>>
    %c0_260 = arith.constant 0 : index
    %c3_261 = arith.constant 3 : index
    %149 = memref.load %arg8[%c0_260, %c3_261] : memref<4x16xf32, #tpu.memory_space<smem>>
    %c0_262 = arith.constant 0 : index
    %c4_263 = arith.constant 4 : index
    %150 = memref.load %arg8[%c0_262, %c4_263] : memref<4x16xf32, #tpu.memory_space<smem>>
    %c0_264 = arith.constant 0 : index
    %c5_265 = arith.constant 5 : index
    %151 = memref.load %arg8[%c0_264, %c5_265] : memref<4x16xf32, #tpu.memory_space<smem>>
    %c0_266 = arith.constant 0 : index
    %c6_267 = arith.constant 6 : index
    %152 = memref.load %arg8[%c0_266, %c6_267] : memref<4x16xf32, #tpu.memory_space<smem>>
    %c0_268 = arith.constant 0 : index
    %c7_269 = arith.constant 7 : index
    %153 = memref.load %arg8[%c0_268, %c7_269] : memref<4x16xf32, #tpu.memory_space<smem>>
    %c0_270 = arith.constant 0 : index
    %c8_271 = arith.constant 8 : index
    %154 = memref.load %arg8[%c0_270, %c8_271] : memref<4x16xf32, #tpu.memory_space<smem>>
    %c0_272 = arith.constant 0 : index
    %c9_273 = arith.constant 9 : index
    %155 = memref.load %arg8[%c0_272, %c9_273] : memref<4x16xf32, #tpu.memory_space<smem>>
    %c0_274 = arith.constant 0 : index
    %c10_275 = arith.constant 10 : index
    %156 = memref.load %arg8[%c0_274, %c10_275] : memref<4x16xf32, #tpu.memory_space<smem>>
    %c0_276 = arith.constant 0 : index
    %c11_277 = arith.constant 11 : index
    %157 = memref.load %arg8[%c0_276, %c11_277] : memref<4x16xf32, #tpu.memory_space<smem>>
    %c0_278 = arith.constant 0 : index
    %c12_279 = arith.constant 12 : index
    %158 = memref.load %arg8[%c0_278, %c12_279] : memref<4x16xf32, #tpu.memory_space<smem>>
    %c0_280 = arith.constant 0 : index
    %c13_281 = arith.constant 13 : index
    %159 = memref.load %arg8[%c0_280, %c13_281] : memref<4x16xf32, #tpu.memory_space<smem>>
    %c0_282 = arith.constant 0 : index
    %c14_283 = arith.constant 14 : index
    %160 = memref.load %arg8[%c0_282, %c14_283] : memref<4x16xf32, #tpu.memory_space<smem>>
    %c0_284 = arith.constant 0 : index
    %c15_285 = arith.constant 15 : index
    %161 = memref.load %arg8[%c0_284, %c15_285] : memref<4x16xf32, #tpu.memory_space<smem>>
    %c1_286 = arith.constant 1 : index
    %c0_287 = arith.constant 0 : index
    %162 = memref.load %arg8[%c1_286, %c0_287] : memref<4x16xf32, #tpu.memory_space<smem>>
    %c1_288 = arith.constant 1 : index
    %c1_289 = arith.constant 1 : index
    %163 = memref.load %arg8[%c1_288, %c1_289] : memref<4x16xf32, #tpu.memory_space<smem>>
    %c1_290 = arith.constant 1 : index
    %c2_291 = arith.constant 2 : index
    %164 = memref.load %arg8[%c1_290, %c2_291] : memref<4x16xf32, #tpu.memory_space<smem>>
    %c1_292 = arith.constant 1 : index
    %c3_293 = arith.constant 3 : index
    %165 = memref.load %arg8[%c1_292, %c3_293] : memref<4x16xf32, #tpu.memory_space<smem>>
    %c1_294 = arith.constant 1 : index
    %c4_295 = arith.constant 4 : index
    %166 = memref.load %arg8[%c1_294, %c4_295] : memref<4x16xf32, #tpu.memory_space<smem>>
    %c1_296 = arith.constant 1 : index
    %c5_297 = arith.constant 5 : index
    %167 = memref.load %arg8[%c1_296, %c5_297] : memref<4x16xf32, #tpu.memory_space<smem>>
    %c1_298 = arith.constant 1 : index
    %c6_299 = arith.constant 6 : index
    %168 = memref.load %arg8[%c1_298, %c6_299] : memref<4x16xf32, #tpu.memory_space<smem>>
    %c1_300 = arith.constant 1 : index
    %c7_301 = arith.constant 7 : index
    %169 = memref.load %arg8[%c1_300, %c7_301] : memref<4x16xf32, #tpu.memory_space<smem>>
    %c1_302 = arith.constant 1 : index
    %c8_303 = arith.constant 8 : index
    %170 = memref.load %arg8[%c1_302, %c8_303] : memref<4x16xf32, #tpu.memory_space<smem>>
    %c1_304 = arith.constant 1 : index
    %c9_305 = arith.constant 9 : index
    %171 = memref.load %arg8[%c1_304, %c9_305] : memref<4x16xf32, #tpu.memory_space<smem>>
    %c1_306 = arith.constant 1 : index
    %c10_307 = arith.constant 10 : index
    %172 = memref.load %arg8[%c1_306, %c10_307] : memref<4x16xf32, #tpu.memory_space<smem>>
    %c1_308 = arith.constant 1 : index
    %c11_309 = arith.constant 11 : index
    %173 = memref.load %arg8[%c1_308, %c11_309] : memref<4x16xf32, #tpu.memory_space<smem>>
    %c1_310 = arith.constant 1 : index
    %c12_311 = arith.constant 12 : index
    %174 = memref.load %arg8[%c1_310, %c12_311] : memref<4x16xf32, #tpu.memory_space<smem>>
    %c1_312 = arith.constant 1 : index
    %c13_313 = arith.constant 13 : index
    %175 = memref.load %arg8[%c1_312, %c13_313] : memref<4x16xf32, #tpu.memory_space<smem>>
    %c1_314 = arith.constant 1 : index
    %c14_315 = arith.constant 14 : index
    %176 = memref.load %arg8[%c1_314, %c14_315] : memref<4x16xf32, #tpu.memory_space<smem>>
    %c1_316 = arith.constant 1 : index
    %c15_317 = arith.constant 15 : index
    %177 = memref.load %arg8[%c1_316, %c15_317] : memref<4x16xf32, #tpu.memory_space<smem>>
    %c2_318 = arith.constant 2 : index
    %c0_319 = arith.constant 0 : index
    %178 = memref.load %arg8[%c2_318, %c0_319] : memref<4x16xf32, #tpu.memory_space<smem>>
    %c2_320 = arith.constant 2 : index
    %c1_321 = arith.constant 1 : index
    %179 = memref.load %arg8[%c2_320, %c1_321] : memref<4x16xf32, #tpu.memory_space<smem>>
    %c2_322 = arith.constant 2 : index
    %c2_323 = arith.constant 2 : index
    %180 = memref.load %arg8[%c2_322, %c2_323] : memref<4x16xf32, #tpu.memory_space<smem>>
    %c2_324 = arith.constant 2 : index
    %c3_325 = arith.constant 3 : index
    %181 = memref.load %arg8[%c2_324, %c3_325] : memref<4x16xf32, #tpu.memory_space<smem>>
    %c2_326 = arith.constant 2 : index
    %c4_327 = arith.constant 4 : index
    %182 = memref.load %arg8[%c2_326, %c4_327] : memref<4x16xf32, #tpu.memory_space<smem>>
    %c2_328 = arith.constant 2 : index
    %c5_329 = arith.constant 5 : index
    %183 = memref.load %arg8[%c2_328, %c5_329] : memref<4x16xf32, #tpu.memory_space<smem>>
    %c2_330 = arith.constant 2 : index
    %c6_331 = arith.constant 6 : index
    %184 = memref.load %arg8[%c2_330, %c6_331] : memref<4x16xf32, #tpu.memory_space<smem>>
    %c2_332 = arith.constant 2 : index
    %c7_333 = arith.constant 7 : index
    %185 = memref.load %arg8[%c2_332, %c7_333] : memref<4x16xf32, #tpu.memory_space<smem>>
    %c2_334 = arith.constant 2 : index
    %c8_335 = arith.constant 8 : index
    %186 = memref.load %arg8[%c2_334, %c8_335] : memref<4x16xf32, #tpu.memory_space<smem>>
    %c2_336 = arith.constant 2 : index
    %c9_337 = arith.constant 9 : index
    %187 = memref.load %arg8[%c2_336, %c9_337] : memref<4x16xf32, #tpu.memory_space<smem>>
    %c2_338 = arith.constant 2 : index
    %c10_339 = arith.constant 10 : index
    %188 = memref.load %arg8[%c2_338, %c10_339] : memref<4x16xf32, #tpu.memory_space<smem>>
    %c2_340 = arith.constant 2 : index
    %c11_341 = arith.constant 11 : index
    %189 = memref.load %arg8[%c2_340, %c11_341] : memref<4x16xf32, #tpu.memory_space<smem>>
    %c2_342 = arith.constant 2 : index
    %c12_343 = arith.constant 12 : index
    %190 = memref.load %arg8[%c2_342, %c12_343] : memref<4x16xf32, #tpu.memory_space<smem>>
    %c2_344 = arith.constant 2 : index
    %c13_345 = arith.constant 13 : index
    %191 = memref.load %arg8[%c2_344, %c13_345] : memref<4x16xf32, #tpu.memory_space<smem>>
    %c2_346 = arith.constant 2 : index
    %c14_347 = arith.constant 14 : index
    %192 = memref.load %arg8[%c2_346, %c14_347] : memref<4x16xf32, #tpu.memory_space<smem>>
    %c2_348 = arith.constant 2 : index
    %c15_349 = arith.constant 15 : index
    %193 = memref.load %arg8[%c2_348, %c15_349] : memref<4x16xf32, #tpu.memory_space<smem>>
    %c3_350 = arith.constant 3 : index
    %c0_351 = arith.constant 0 : index
    %194 = memref.load %arg8[%c3_350, %c0_351] : memref<4x16xf32, #tpu.memory_space<smem>>
    %c3_352 = arith.constant 3 : index
    %c1_353 = arith.constant 1 : index
    %195 = memref.load %arg8[%c3_352, %c1_353] : memref<4x16xf32, #tpu.memory_space<smem>>
    %c3_354 = arith.constant 3 : index
    %c2_355 = arith.constant 2 : index
    %196 = memref.load %arg8[%c3_354, %c2_355] : memref<4x16xf32, #tpu.memory_space<smem>>
    %c3_356 = arith.constant 3 : index
    %c3_357 = arith.constant 3 : index
    %197 = memref.load %arg8[%c3_356, %c3_357] : memref<4x16xf32, #tpu.memory_space<smem>>
    %c3_358 = arith.constant 3 : index
    %c4_359 = arith.constant 4 : index
    %198 = memref.load %arg8[%c3_358, %c4_359] : memref<4x16xf32, #tpu.memory_space<smem>>
    %c3_360 = arith.constant 3 : index
    %c5_361 = arith.constant 5 : index
    %199 = memref.load %arg8[%c3_360, %c5_361] : memref<4x16xf32, #tpu.memory_space<smem>>
    %c3_362 = arith.constant 3 : index
    %c6_363 = arith.constant 6 : index
    %200 = memref.load %arg8[%c3_362, %c6_363] : memref<4x16xf32, #tpu.memory_space<smem>>
    %c3_364 = arith.constant 3 : index
    %c7_365 = arith.constant 7 : index
    %201 = memref.load %arg8[%c3_364, %c7_365] : memref<4x16xf32, #tpu.memory_space<smem>>
    %c3_366 = arith.constant 3 : index
    %c8_367 = arith.constant 8 : index
    %202 = memref.load %arg8[%c3_366, %c8_367] : memref<4x16xf32, #tpu.memory_space<smem>>
    %c3_368 = arith.constant 3 : index
    %c9_369 = arith.constant 9 : index
    %203 = memref.load %arg8[%c3_368, %c9_369] : memref<4x16xf32, #tpu.memory_space<smem>>
    %c3_370 = arith.constant 3 : index
    %c10_371 = arith.constant 10 : index
    %204 = memref.load %arg8[%c3_370, %c10_371] : memref<4x16xf32, #tpu.memory_space<smem>>
    %c3_372 = arith.constant 3 : index
    %c11_373 = arith.constant 11 : index
    %205 = memref.load %arg8[%c3_372, %c11_373] : memref<4x16xf32, #tpu.memory_space<smem>>
    %c3_374 = arith.constant 3 : index
    %c12_375 = arith.constant 12 : index
    %206 = memref.load %arg8[%c3_374, %c12_375] : memref<4x16xf32, #tpu.memory_space<smem>>
    %c3_376 = arith.constant 3 : index
    %c13_377 = arith.constant 13 : index
    %207 = memref.load %arg8[%c3_376, %c13_377] : memref<4x16xf32, #tpu.memory_space<smem>>
    %c3_378 = arith.constant 3 : index
    %c14_379 = arith.constant 14 : index
    %208 = memref.load %arg8[%c3_378, %c14_379] : memref<4x16xf32, #tpu.memory_space<smem>>
    %c3_380 = arith.constant 3 : index
    %c15_381 = arith.constant 15 : index
    %209 = memref.load %arg8[%c3_380, %c15_381] : memref<4x16xf32, #tpu.memory_space<smem>>
    %c0_382 = arith.constant 0 : index
    %c0_383 = arith.constant 0 : index
    %210 = memref.load %arg9[%c0_382, %c0_383] : memref<4x16xf32, #tpu.memory_space<smem>>
    %c0_384 = arith.constant 0 : index
    %c1_385 = arith.constant 1 : index
    %211 = memref.load %arg9[%c0_384, %c1_385] : memref<4x16xf32, #tpu.memory_space<smem>>
    %c0_386 = arith.constant 0 : index
    %c2_387 = arith.constant 2 : index
    %212 = memref.load %arg9[%c0_386, %c2_387] : memref<4x16xf32, #tpu.memory_space<smem>>
    %c0_388 = arith.constant 0 : index
    %c3_389 = arith.constant 3 : index
    %213 = memref.load %arg9[%c0_388, %c3_389] : memref<4x16xf32, #tpu.memory_space<smem>>
    %c0_390 = arith.constant 0 : index
    %c4_391 = arith.constant 4 : index
    %214 = memref.load %arg9[%c0_390, %c4_391] : memref<4x16xf32, #tpu.memory_space<smem>>
    %c0_392 = arith.constant 0 : index
    %c5_393 = arith.constant 5 : index
    %215 = memref.load %arg9[%c0_392, %c5_393] : memref<4x16xf32, #tpu.memory_space<smem>>
    %c0_394 = arith.constant 0 : index
    %c6_395 = arith.constant 6 : index
    %216 = memref.load %arg9[%c0_394, %c6_395] : memref<4x16xf32, #tpu.memory_space<smem>>
    %c0_396 = arith.constant 0 : index
    %c7_397 = arith.constant 7 : index
    %217 = memref.load %arg9[%c0_396, %c7_397] : memref<4x16xf32, #tpu.memory_space<smem>>
    %c0_398 = arith.constant 0 : index
    %c8_399 = arith.constant 8 : index
    %218 = memref.load %arg9[%c0_398, %c8_399] : memref<4x16xf32, #tpu.memory_space<smem>>
    %c0_400 = arith.constant 0 : index
    %c9_401 = arith.constant 9 : index
    %219 = memref.load %arg9[%c0_400, %c9_401] : memref<4x16xf32, #tpu.memory_space<smem>>
    %c0_402 = arith.constant 0 : index
    %c10_403 = arith.constant 10 : index
    %220 = memref.load %arg9[%c0_402, %c10_403] : memref<4x16xf32, #tpu.memory_space<smem>>
    %c0_404 = arith.constant 0 : index
    %c11_405 = arith.constant 11 : index
    %221 = memref.load %arg9[%c0_404, %c11_405] : memref<4x16xf32, #tpu.memory_space<smem>>
    %c0_406 = arith.constant 0 : index
    %c12_407 = arith.constant 12 : index
    %222 = memref.load %arg9[%c0_406, %c12_407] : memref<4x16xf32, #tpu.memory_space<smem>>
    %c0_408 = arith.constant 0 : index
    %c13_409 = arith.constant 13 : index
    %223 = memref.load %arg9[%c0_408, %c13_409] : memref<4x16xf32, #tpu.memory_space<smem>>
    %c0_410 = arith.constant 0 : index
    %c14_411 = arith.constant 14 : index
    %224 = memref.load %arg9[%c0_410, %c14_411] : memref<4x16xf32, #tpu.memory_space<smem>>
    %c0_412 = arith.constant 0 : index
    %c15_413 = arith.constant 15 : index
    %225 = memref.load %arg9[%c0_412, %c15_413] : memref<4x16xf32, #tpu.memory_space<smem>>
    %c1_414 = arith.constant 1 : index
    %c0_415 = arith.constant 0 : index
    %226 = memref.load %arg9[%c1_414, %c0_415] : memref<4x16xf32, #tpu.memory_space<smem>>
    %c1_416 = arith.constant 1 : index
    %c1_417 = arith.constant 1 : index
    %227 = memref.load %arg9[%c1_416, %c1_417] : memref<4x16xf32, #tpu.memory_space<smem>>
    %c1_418 = arith.constant 1 : index
    %c2_419 = arith.constant 2 : index
    %228 = memref.load %arg9[%c1_418, %c2_419] : memref<4x16xf32, #tpu.memory_space<smem>>
    %c1_420 = arith.constant 1 : index
    %c3_421 = arith.constant 3 : index
    %229 = memref.load %arg9[%c1_420, %c3_421] : memref<4x16xf32, #tpu.memory_space<smem>>
    %c1_422 = arith.constant 1 : index
    %c4_423 = arith.constant 4 : index
    %230 = memref.load %arg9[%c1_422, %c4_423] : memref<4x16xf32, #tpu.memory_space<smem>>
    %c1_424 = arith.constant 1 : index
    %c5_425 = arith.constant 5 : index
    %231 = memref.load %arg9[%c1_424, %c5_425] : memref<4x16xf32, #tpu.memory_space<smem>>
    %c1_426 = arith.constant 1 : index
    %c6_427 = arith.constant 6 : index
    %232 = memref.load %arg9[%c1_426, %c6_427] : memref<4x16xf32, #tpu.memory_space<smem>>
    %c1_428 = arith.constant 1 : index
    %c7_429 = arith.constant 7 : index
    %233 = memref.load %arg9[%c1_428, %c7_429] : memref<4x16xf32, #tpu.memory_space<smem>>
    %c1_430 = arith.constant 1 : index
    %c8_431 = arith.constant 8 : index
    %234 = memref.load %arg9[%c1_430, %c8_431] : memref<4x16xf32, #tpu.memory_space<smem>>
    %c1_432 = arith.constant 1 : index
    %c9_433 = arith.constant 9 : index
    %235 = memref.load %arg9[%c1_432, %c9_433] : memref<4x16xf32, #tpu.memory_space<smem>>
    %c1_434 = arith.constant 1 : index
    %c10_435 = arith.constant 10 : index
    %236 = memref.load %arg9[%c1_434, %c10_435] : memref<4x16xf32, #tpu.memory_space<smem>>
    %c1_436 = arith.constant 1 : index
    %c11_437 = arith.constant 11 : index
    %237 = memref.load %arg9[%c1_436, %c11_437] : memref<4x16xf32, #tpu.memory_space<smem>>
    %c1_438 = arith.constant 1 : index
    %c12_439 = arith.constant 12 : index
    %238 = memref.load %arg9[%c1_438, %c12_439] : memref<4x16xf32, #tpu.memory_space<smem>>
    %c1_440 = arith.constant 1 : index
    %c13_441 = arith.constant 13 : index
    %239 = memref.load %arg9[%c1_440, %c13_441] : memref<4x16xf32, #tpu.memory_space<smem>>
    %c1_442 = arith.constant 1 : index
    %c14_443 = arith.constant 14 : index
    %240 = memref.load %arg9[%c1_442, %c14_443] : memref<4x16xf32, #tpu.memory_space<smem>>
    %c1_444 = arith.constant 1 : index
    %c15_445 = arith.constant 15 : index
    %241 = memref.load %arg9[%c1_444, %c15_445] : memref<4x16xf32, #tpu.memory_space<smem>>
    %c2_446 = arith.constant 2 : index
    %c0_447 = arith.constant 0 : index
    %242 = memref.load %arg9[%c2_446, %c0_447] : memref<4x16xf32, #tpu.memory_space<smem>>
    %c2_448 = arith.constant 2 : index
    %c1_449 = arith.constant 1 : index
    %243 = memref.load %arg9[%c2_448, %c1_449] : memref<4x16xf32, #tpu.memory_space<smem>>
    %c2_450 = arith.constant 2 : index
    %c2_451 = arith.constant 2 : index
    %244 = memref.load %arg9[%c2_450, %c2_451] : memref<4x16xf32, #tpu.memory_space<smem>>
    %c2_452 = arith.constant 2 : index
    %c3_453 = arith.constant 3 : index
    %245 = memref.load %arg9[%c2_452, %c3_453] : memref<4x16xf32, #tpu.memory_space<smem>>
    %c2_454 = arith.constant 2 : index
    %c4_455 = arith.constant 4 : index
    %246 = memref.load %arg9[%c2_454, %c4_455] : memref<4x16xf32, #tpu.memory_space<smem>>
    %c2_456 = arith.constant 2 : index
    %c5_457 = arith.constant 5 : index
    %247 = memref.load %arg9[%c2_456, %c5_457] : memref<4x16xf32, #tpu.memory_space<smem>>
    %c2_458 = arith.constant 2 : index
    %c6_459 = arith.constant 6 : index
    %248 = memref.load %arg9[%c2_458, %c6_459] : memref<4x16xf32, #tpu.memory_space<smem>>
    %c2_460 = arith.constant 2 : index
    %c7_461 = arith.constant 7 : index
    %249 = memref.load %arg9[%c2_460, %c7_461] : memref<4x16xf32, #tpu.memory_space<smem>>
    %c2_462 = arith.constant 2 : index
    %c8_463 = arith.constant 8 : index
    %250 = memref.load %arg9[%c2_462, %c8_463] : memref<4x16xf32, #tpu.memory_space<smem>>
    %c2_464 = arith.constant 2 : index
    %c9_465 = arith.constant 9 : index
    %251 = memref.load %arg9[%c2_464, %c9_465] : memref<4x16xf32, #tpu.memory_space<smem>>
    %c2_466 = arith.constant 2 : index
    %c10_467 = arith.constant 10 : index
    %252 = memref.load %arg9[%c2_466, %c10_467] : memref<4x16xf32, #tpu.memory_space<smem>>
    %c2_468 = arith.constant 2 : index
    %c11_469 = arith.constant 11 : index
    %253 = memref.load %arg9[%c2_468, %c11_469] : memref<4x16xf32, #tpu.memory_space<smem>>
    %c2_470 = arith.constant 2 : index
    %c12_471 = arith.constant 12 : index
    %254 = memref.load %arg9[%c2_470, %c12_471] : memref<4x16xf32, #tpu.memory_space<smem>>
    %c2_472 = arith.constant 2 : index
    %c13_473 = arith.constant 13 : index
    %255 = memref.load %arg9[%c2_472, %c13_473] : memref<4x16xf32, #tpu.memory_space<smem>>
    %c2_474 = arith.constant 2 : index
    %c14_475 = arith.constant 14 : index
    %256 = memref.load %arg9[%c2_474, %c14_475] : memref<4x16xf32, #tpu.memory_space<smem>>
    %c2_476 = arith.constant 2 : index
    %c15_477 = arith.constant 15 : index
    %257 = memref.load %arg9[%c2_476, %c15_477] : memref<4x16xf32, #tpu.memory_space<smem>>
    %c3_478 = arith.constant 3 : index
    %c0_479 = arith.constant 0 : index
    %258 = memref.load %arg9[%c3_478, %c0_479] : memref<4x16xf32, #tpu.memory_space<smem>>
    %c3_480 = arith.constant 3 : index
    %c1_481 = arith.constant 1 : index
    %259 = memref.load %arg9[%c3_480, %c1_481] : memref<4x16xf32, #tpu.memory_space<smem>>
    %c3_482 = arith.constant 3 : index
    %c2_483 = arith.constant 2 : index
    %260 = memref.load %arg9[%c3_482, %c2_483] : memref<4x16xf32, #tpu.memory_space<smem>>
    %c3_484 = arith.constant 3 : index
    %c3_485 = arith.constant 3 : index
    %261 = memref.load %arg9[%c3_484, %c3_485] : memref<4x16xf32, #tpu.memory_space<smem>>
    %c3_486 = arith.constant 3 : index
    %c4_487 = arith.constant 4 : index
    %262 = memref.load %arg9[%c3_486, %c4_487] : memref<4x16xf32, #tpu.memory_space<smem>>
    %c3_488 = arith.constant 3 : index
    %c5_489 = arith.constant 5 : index
    %263 = memref.load %arg9[%c3_488, %c5_489] : memref<4x16xf32, #tpu.memory_space<smem>>
    %c3_490 = arith.constant 3 : index
    %c6_491 = arith.constant 6 : index
    %264 = memref.load %arg9[%c3_490, %c6_491] : memref<4x16xf32, #tpu.memory_space<smem>>
    %c3_492 = arith.constant 3 : index
    %c7_493 = arith.constant 7 : index
    %265 = memref.load %arg9[%c3_492, %c7_493] : memref<4x16xf32, #tpu.memory_space<smem>>
    %c3_494 = arith.constant 3 : index
    %c8_495 = arith.constant 8 : index
    %266 = memref.load %arg9[%c3_494, %c8_495] : memref<4x16xf32, #tpu.memory_space<smem>>
    %c3_496 = arith.constant 3 : index
    %c9_497 = arith.constant 9 : index
    %267 = memref.load %arg9[%c3_496, %c9_497] : memref<4x16xf32, #tpu.memory_space<smem>>
    %c3_498 = arith.constant 3 : index
    %c10_499 = arith.constant 10 : index
    %268 = memref.load %arg9[%c3_498, %c10_499] : memref<4x16xf32, #tpu.memory_space<smem>>
    %c3_500 = arith.constant 3 : index
    %c11_501 = arith.constant 11 : index
    %269 = memref.load %arg9[%c3_500, %c11_501] : memref<4x16xf32, #tpu.memory_space<smem>>
    %c3_502 = arith.constant 3 : index
    %c12_503 = arith.constant 12 : index
    %270 = memref.load %arg9[%c3_502, %c12_503] : memref<4x16xf32, #tpu.memory_space<smem>>
    %c3_504 = arith.constant 3 : index
    %c13_505 = arith.constant 13 : index
    %271 = memref.load %arg9[%c3_504, %c13_505] : memref<4x16xf32, #tpu.memory_space<smem>>
    %c3_506 = arith.constant 3 : index
    %c14_507 = arith.constant 14 : index
    %272 = memref.load %arg9[%c3_506, %c14_507] : memref<4x16xf32, #tpu.memory_space<smem>>
    %c3_508 = arith.constant 3 : index
    %c15_509 = arith.constant 15 : index
    %273 = memref.load %arg9[%c3_508, %c15_509] : memref<4x16xf32, #tpu.memory_space<smem>>
    %c0_510 = arith.constant 0 : index
    %c0_511 = arith.constant 0 : index
    %274 = memref.load %arg10[%c0_510, %c0_511] : memref<4x1xf32, #tpu.memory_space<smem>>
    %c1_512 = arith.constant 1 : index
    %c0_513 = arith.constant 0 : index
    %275 = memref.load %arg10[%c1_512, %c0_513] : memref<4x1xf32, #tpu.memory_space<smem>>
    %c2_514 = arith.constant 2 : index
    %c0_515 = arith.constant 0 : index
    %276 = memref.load %arg10[%c2_514, %c0_515] : memref<4x1xf32, #tpu.memory_space<smem>>
    %c3_516 = arith.constant 3 : index
    %c0_517 = arith.constant 0 : index
    %277 = memref.load %arg10[%c3_516, %c0_517] : memref<4x1xf32, #tpu.memory_space<smem>>
    %278 = vector.extract_strided_slice %10 {offsets = [0, 0, 0], sizes = [1, 8, 8], strides = [1, 1, 1]} : vector<1x8x32xbf16> to vector<1x8x8xbf16>
    %279 = vector.extract_strided_slice %15 {offsets = [0, 0, 0], sizes = [1, 8, 8], strides = [1, 1, 1]} : vector<1x8x32xbf16> to vector<1x8x8xbf16>
    %280 = vector.extract_strided_slice %17 {offsets = [0, 0, 0], sizes = [1, 8, 8], strides = [1, 1, 1]} : vector<1x8x32xbf16> to vector<1x8x8xbf16>
    "tpu.trace_start"() <{level = 10 : i32, message = "bnd,bmd->bnm"}> : () -> ()
    %cst_518 = arith.constant dense<0.000000e+00> : vector<1x8x8xf32>
    %281 = tpu.matmul %278, %279, %cst_518 {dimension_numbers = #tpu.dot_dimension_numbers<[2], [2], [1], [1], [0, 0, 0, 1, 1, 1], [0], [0]>} : vector<1x8x8xbf16>, vector<1x8x8xbf16>, vector<1x8x8xf32> -> vector<1x8x8xf32>
    "tpu.trace_stop"() : () -> ()
    %282 = vector.broadcast %274 : f32 to vector<1x8x8xf32>
    %283 = vector.broadcast %18 : f32 to vector<1x8x8xf32>
    %284 = arith.mulf %281, %283 : vector<1x8x8xf32>
    %285 = vector.broadcast %82 : f32 to vector<1x8x8xf32>
    %286 = arith.mulf %2, %285 : vector<1x8x8xf32>
    %287 = arith.addf %284, %286 : vector<1x8x8xf32>
    %288 = vector.broadcast %146 : f32 to vector<1x8x8xf32>
    %289 = arith.addf %287, %288 : vector<1x8x8xf32>
    %cst_519 = arith.constant 0.000000e+00 : f32
    %290 = vector.broadcast %cst_519 : f32 to vector<1x8x8xf32>
    %291 = arith.maximumf %289, %290 : vector<1x8x8xf32>
    %292 = vector.broadcast %210 : f32 to vector<1x8x8xf32>
    %293 = arith.mulf %291, %292 : vector<1x8x8xf32>
    %294 = arith.addf %282, %293 : vector<1x8x8xf32>
    %295 = vector.broadcast %19 : f32 to vector<1x8x8xf32>
    %296 = arith.mulf %281, %295 : vector<1x8x8xf32>
    %297 = vector.broadcast %83 : f32 to vector<1x8x8xf32>
    %298 = arith.mulf %2, %297 : vector<1x8x8xf32>
    %299 = arith.addf %296, %298 : vector<1x8x8xf32>
    %300 = vector.broadcast %147 : f32 to vector<1x8x8xf32>
    %301 = arith.addf %299, %300 : vector<1x8x8xf32>
    %cst_520 = arith.constant 0.000000e+00 : f32
    %302 = vector.broadcast %cst_520 : f32 to vector<1x8x8xf32>
    %303 = arith.maximumf %301, %302 : vector<1x8x8xf32>
    %304 = vector.broadcast %211 : f32 to vector<1x8x8xf32>
    %305 = arith.mulf %303, %304 : vector<1x8x8xf32>
    %306 = arith.addf %294, %305 : vector<1x8x8xf32>
    %307 = vector.broadcast %20 : f32 to vector<1x8x8xf32>
    %308 = arith.mulf %281, %307 : vector<1x8x8xf32>
    %309 = vector.broadcast %84 : f32 to vector<1x8x8xf32>
    %310 = arith.mulf %2, %309 : vector<1x8x8xf32>
    %311 = arith.addf %308, %310 : vector<1x8x8xf32>
    %312 = vector.broadcast %148 : f32 to vector<1x8x8xf32>
    %313 = arith.addf %311, %312 : vector<1x8x8xf32>
    %cst_521 = arith.constant 0.000000e+00 : f32
    %314 = vector.broadcast %cst_521 : f32 to vector<1x8x8xf32>
    %315 = arith.maximumf %313, %314 : vector<1x8x8xf32>
    %316 = vector.broadcast %212 : f32 to vector<1x8x8xf32>
    %317 = arith.mulf %315, %316 : vector<1x8x8xf32>
    %318 = arith.addf %306, %317 : vector<1x8x8xf32>
    %319 = vector.broadcast %21 : f32 to vector<1x8x8xf32>
    %320 = arith.mulf %281, %319 : vector<1x8x8xf32>
    %321 = vector.broadcast %85 : f32 to vector<1x8x8xf32>
    %322 = arith.mulf %2, %321 : vector<1x8x8xf32>
    %323 = arith.addf %320, %322 : vector<1x8x8xf32>
    %324 = vector.broadcast %149 : f32 to vector<1x8x8xf32>
    %325 = arith.addf %323, %324 : vector<1x8x8xf32>
    %cst_522 = arith.constant 0.000000e+00 : f32
    %326 = vector.broadcast %cst_522 : f32 to vector<1x8x8xf32>
    %327 = arith.maximumf %325, %326 : vector<1x8x8xf32>
    %328 = vector.broadcast %213 : f32 to vector<1x8x8xf32>
    %329 = arith.mulf %327, %328 : vector<1x8x8xf32>
    %330 = arith.addf %318, %329 : vector<1x8x8xf32>
    %331 = vector.broadcast %22 : f32 to vector<1x8x8xf32>
    %332 = arith.mulf %281, %331 : vector<1x8x8xf32>
    %333 = vector.broadcast %86 : f32 to vector<1x8x8xf32>
    %334 = arith.mulf %2, %333 : vector<1x8x8xf32>
    %335 = arith.addf %332, %334 : vector<1x8x8xf32>
    %336 = vector.broadcast %150 : f32 to vector<1x8x8xf32>
    %337 = arith.addf %335, %336 : vector<1x8x8xf32>
    %cst_523 = arith.constant 0.000000e+00 : f32
    %338 = vector.broadcast %cst_523 : f32 to vector<1x8x8xf32>
    %339 = arith.maximumf %337, %338 : vector<1x8x8xf32>
    %340 = vector.broadcast %214 : f32 to vector<1x8x8xf32>
    %341 = arith.mulf %339, %340 : vector<1x8x8xf32>
    %342 = arith.addf %330, %341 : vector<1x8x8xf32>
    %343 = vector.broadcast %23 : f32 to vector<1x8x8xf32>
    %344 = arith.mulf %281, %343 : vector<1x8x8xf32>
    %345 = vector.broadcast %87 : f32 to vector<1x8x8xf32>
    %346 = arith.mulf %2, %345 : vector<1x8x8xf32>
    %347 = arith.addf %344, %346 : vector<1x8x8xf32>
    %348 = vector.broadcast %151 : f32 to vector<1x8x8xf32>
    %349 = arith.addf %347, %348 : vector<1x8x8xf32>
    %cst_524 = arith.constant 0.000000e+00 : f32
    %350 = vector.broadcast %cst_524 : f32 to vector<1x8x8xf32>
    %351 = arith.maximumf %349, %350 : vector<1x8x8xf32>
    %352 = vector.broadcast %215 : f32 to vector<1x8x8xf32>
    %353 = arith.mulf %351, %352 : vector<1x8x8xf32>
    %354 = arith.addf %342, %353 : vector<1x8x8xf32>
    %355 = vector.broadcast %24 : f32 to vector<1x8x8xf32>
    %356 = arith.mulf %281, %355 : vector<1x8x8xf32>
    %357 = vector.broadcast %88 : f32 to vector<1x8x8xf32>
    %358 = arith.mulf %2, %357 : vector<1x8x8xf32>
    %359 = arith.addf %356, %358 : vector<1x8x8xf32>
    %360 = vector.broadcast %152 : f32 to vector<1x8x8xf32>
    %361 = arith.addf %359, %360 : vector<1x8x8xf32>
    %cst_525 = arith.constant 0.000000e+00 : f32
    %362 = vector.broadcast %cst_525 : f32 to vector<1x8x8xf32>
    %363 = arith.maximumf %361, %362 : vector<1x8x8xf32>
    %364 = vector.broadcast %216 : f32 to vector<1x8x8xf32>
    %365 = arith.mulf %363, %364 : vector<1x8x8xf32>
    %366 = arith.addf %354, %365 : vector<1x8x8xf32>
    %367 = vector.broadcast %25 : f32 to vector<1x8x8xf32>
    %368 = arith.mulf %281, %367 : vector<1x8x8xf32>
    %369 = vector.broadcast %89 : f32 to vector<1x8x8xf32>
    %370 = arith.mulf %2, %369 : vector<1x8x8xf32>
    %371 = arith.addf %368, %370 : vector<1x8x8xf32>
    %372 = vector.broadcast %153 : f32 to vector<1x8x8xf32>
    %373 = arith.addf %371, %372 : vector<1x8x8xf32>
    %cst_526 = arith.constant 0.000000e+00 : f32
    %374 = vector.broadcast %cst_526 : f32 to vector<1x8x8xf32>
    %375 = arith.maximumf %373, %374 : vector<1x8x8xf32>
    %376 = vector.broadcast %217 : f32 to vector<1x8x8xf32>
    %377 = arith.mulf %375, %376 : vector<1x8x8xf32>
    %378 = arith.addf %366, %377 : vector<1x8x8xf32>
    %379 = vector.broadcast %26 : f32 to vector<1x8x8xf32>
    %380 = arith.mulf %281, %379 : vector<1x8x8xf32>
    %381 = vector.broadcast %90 : f32 to vector<1x8x8xf32>
    %382 = arith.mulf %2, %381 : vector<1x8x8xf32>
    %383 = arith.addf %380, %382 : vector<1x8x8xf32>
    %384 = vector.broadcast %154 : f32 to vector<1x8x8xf32>
    %385 = arith.addf %383, %384 : vector<1x8x8xf32>
    %cst_527 = arith.constant 0.000000e+00 : f32
    %386 = vector.broadcast %cst_527 : f32 to vector<1x8x8xf32>
    %387 = arith.maximumf %385, %386 : vector<1x8x8xf32>
    %388 = vector.broadcast %218 : f32 to vector<1x8x8xf32>
    %389 = arith.mulf %387, %388 : vector<1x8x8xf32>
    %390 = arith.addf %378, %389 : vector<1x8x8xf32>
    %391 = vector.broadcast %27 : f32 to vector<1x8x8xf32>
    %392 = arith.mulf %281, %391 : vector<1x8x8xf32>
    %393 = vector.broadcast %91 : f32 to vector<1x8x8xf32>
    %394 = arith.mulf %2, %393 : vector<1x8x8xf32>
    %395 = arith.addf %392, %394 : vector<1x8x8xf32>
    %396 = vector.broadcast %155 : f32 to vector<1x8x8xf32>
    %397 = arith.addf %395, %396 : vector<1x8x8xf32>
    %cst_528 = arith.constant 0.000000e+00 : f32
    %398 = vector.broadcast %cst_528 : f32 to vector<1x8x8xf32>
    %399 = arith.maximumf %397, %398 : vector<1x8x8xf32>
    %400 = vector.broadcast %219 : f32 to vector<1x8x8xf32>
    %401 = arith.mulf %399, %400 : vector<1x8x8xf32>
    %402 = arith.addf %390, %401 : vector<1x8x8xf32>
    %403 = vector.broadcast %28 : f32 to vector<1x8x8xf32>
    %404 = arith.mulf %281, %403 : vector<1x8x8xf32>
    %405 = vector.broadcast %92 : f32 to vector<1x8x8xf32>
    %406 = arith.mulf %2, %405 : vector<1x8x8xf32>
    %407 = arith.addf %404, %406 : vector<1x8x8xf32>
    %408 = vector.broadcast %156 : f32 to vector<1x8x8xf32>
    %409 = arith.addf %407, %408 : vector<1x8x8xf32>
    %cst_529 = arith.constant 0.000000e+00 : f32
    %410 = vector.broadcast %cst_529 : f32 to vector<1x8x8xf32>
    %411 = arith.maximumf %409, %410 : vector<1x8x8xf32>
    %412 = vector.broadcast %220 : f32 to vector<1x8x8xf32>
    %413 = arith.mulf %411, %412 : vector<1x8x8xf32>
    %414 = arith.addf %402, %413 : vector<1x8x8xf32>
    %415 = vector.broadcast %29 : f32 to vector<1x8x8xf32>
    %416 = arith.mulf %281, %415 : vector<1x8x8xf32>
    %417 = vector.broadcast %93 : f32 to vector<1x8x8xf32>
    %418 = arith.mulf %2, %417 : vector<1x8x8xf32>
    %419 = arith.addf %416, %418 : vector<1x8x8xf32>
    %420 = vector.broadcast %157 : f32 to vector<1x8x8xf32>
    %421 = arith.addf %419, %420 : vector<1x8x8xf32>
    %cst_530 = arith.constant 0.000000e+00 : f32
    %422 = vector.broadcast %cst_530 : f32 to vector<1x8x8xf32>
    %423 = arith.maximumf %421, %422 : vector<1x8x8xf32>
    %424 = vector.broadcast %221 : f32 to vector<1x8x8xf32>
    %425 = arith.mulf %423, %424 : vector<1x8x8xf32>
    %426 = arith.addf %414, %425 : vector<1x8x8xf32>
    %427 = vector.broadcast %30 : f32 to vector<1x8x8xf32>
    %428 = arith.mulf %281, %427 : vector<1x8x8xf32>
    %429 = vector.broadcast %94 : f32 to vector<1x8x8xf32>
    %430 = arith.mulf %2, %429 : vector<1x8x8xf32>
    %431 = arith.addf %428, %430 : vector<1x8x8xf32>
    %432 = vector.broadcast %158 : f32 to vector<1x8x8xf32>
    %433 = arith.addf %431, %432 : vector<1x8x8xf32>
    %cst_531 = arith.constant 0.000000e+00 : f32
    %434 = vector.broadcast %cst_531 : f32 to vector<1x8x8xf32>
    %435 = arith.maximumf %433, %434 : vector<1x8x8xf32>
    %436 = vector.broadcast %222 : f32 to vector<1x8x8xf32>
    %437 = arith.mulf %435, %436 : vector<1x8x8xf32>
    %438 = arith.addf %426, %437 : vector<1x8x8xf32>
    %439 = vector.broadcast %31 : f32 to vector<1x8x8xf32>
    %440 = arith.mulf %281, %439 : vector<1x8x8xf32>
    %441 = vector.broadcast %95 : f32 to vector<1x8x8xf32>
    %442 = arith.mulf %2, %441 : vector<1x8x8xf32>
    %443 = arith.addf %440, %442 : vector<1x8x8xf32>
    %444 = vector.broadcast %159 : f32 to vector<1x8x8xf32>
    %445 = arith.addf %443, %444 : vector<1x8x8xf32>
    %cst_532 = arith.constant 0.000000e+00 : f32
    %446 = vector.broadcast %cst_532 : f32 to vector<1x8x8xf32>
    %447 = arith.maximumf %445, %446 : vector<1x8x8xf32>
    %448 = vector.broadcast %223 : f32 to vector<1x8x8xf32>
    %449 = arith.mulf %447, %448 : vector<1x8x8xf32>
    %450 = arith.addf %438, %449 : vector<1x8x8xf32>
    %451 = vector.broadcast %32 : f32 to vector<1x8x8xf32>
    %452 = arith.mulf %281, %451 : vector<1x8x8xf32>
    %453 = vector.broadcast %96 : f32 to vector<1x8x8xf32>
    %454 = arith.mulf %2, %453 : vector<1x8x8xf32>
    %455 = arith.addf %452, %454 : vector<1x8x8xf32>
    %456 = vector.broadcast %160 : f32 to vector<1x8x8xf32>
    %457 = arith.addf %455, %456 : vector<1x8x8xf32>
    %cst_533 = arith.constant 0.000000e+00 : f32
    %458 = vector.broadcast %cst_533 : f32 to vector<1x8x8xf32>
    %459 = arith.maximumf %457, %458 : vector<1x8x8xf32>
    %460 = vector.broadcast %224 : f32 to vector<1x8x8xf32>
    %461 = arith.mulf %459, %460 : vector<1x8x8xf32>
    %462 = arith.addf %450, %461 : vector<1x8x8xf32>
    %463 = vector.broadcast %33 : f32 to vector<1x8x8xf32>
    %464 = arith.mulf %281, %463 : vector<1x8x8xf32>
    %465 = vector.broadcast %97 : f32 to vector<1x8x8xf32>
    %466 = arith.mulf %2, %465 : vector<1x8x8xf32>
    %467 = arith.addf %464, %466 : vector<1x8x8xf32>
    %468 = vector.broadcast %161 : f32 to vector<1x8x8xf32>
    %469 = arith.addf %467, %468 : vector<1x8x8xf32>
    %cst_534 = arith.constant 0.000000e+00 : f32
    %470 = vector.broadcast %cst_534 : f32 to vector<1x8x8xf32>
    %471 = arith.maximumf %469, %470 : vector<1x8x8xf32>
    %472 = vector.broadcast %225 : f32 to vector<1x8x8xf32>
    %473 = arith.mulf %471, %472 : vector<1x8x8xf32>
    %474 = arith.addf %462, %473 : vector<1x8x8xf32>
    %cst_535 = arith.constant dense<0xFF800000> : vector<1x8xf32>
    %475 = vector.multi_reduction <maximumf>, %474, %cst_535 [2] : vector<1x8x8xf32> to vector<1x8xf32>
    %476 = vector.shape_cast %475 : vector<1x8xf32> to vector<1x8x1xf32>
    %477 = vector.broadcast %476 : vector<1x8x1xf32> to vector<1x8x8xf32>
    %478 = arith.subf %474, %477 : vector<1x8x8xf32>
    %479 = math.exp %478 : vector<1x8x8xf32>
    %cst_536 = arith.constant dense<0.000000e+00> : vector<1x8xf32>
    %480 = vector.multi_reduction <add>, %479, %cst_536 [2] : vector<1x8x8xf32> to vector<1x8xf32>
    %481 = vector.shape_cast %480 : vector<1x8xf32> to vector<1x8x1xf32>
    %482 = tpu.reciprocal %481 {approx = true} : vector<1x8x1xf32> -> vector<1x8x1xf32>
    %483 = vector.broadcast %482 : vector<1x8x1xf32> to vector<1x8x8xf32>
    %484 = arith.mulf %479, %483 : vector<1x8x8xf32>
    %485 = arith.truncf %484 : vector<1x8x8xf32> to vector<1x8x8xbf16>
    "tpu.trace_start"() <{level = 10 : i32, message = "bnm,bmd->bnd"}> : () -> ()
    %cst_537 = arith.constant dense<0.000000e+00> : vector<1x8x8xf32>
    %486 = tpu.matmul %485, %280, %cst_537 {dimension_numbers = #tpu.dot_dimension_numbers<[2], [1], [1], [2], [0, 0, 0, 1, 1, 2], [0], [0]>} : vector<1x8x8xbf16>, vector<1x8x8xbf16>, vector<1x8x8xf32> -> vector<1x8x8xf32>
    "tpu.trace_stop"() : () -> ()
    %c0_538 = arith.constant 0 : index
    %c0_539 = arith.constant 0 : index
    %c0_540 = arith.constant 0 : index
    %487 = vector.load %arg22[%c0_538, %c0_539, %c0_540] : memref<1x8x32xf32, #tpu.memory_space<vmem>>, vector<1x8x8xf32>
    tpu.vector_store %arg22[%c0_538, %c0_539, %c0_540], %486 {strides = array<i32>} : memref<1x8x32xf32, #tpu.memory_space<vmem>>, vector<1x8x8xf32>,
    %488 = vector.extract_strided_slice %10 {offsets = [0, 0, 8], sizes = [1, 8, 8], strides = [1, 1, 1]} : vector<1x8x32xbf16> to vector<1x8x8xbf16>
    %489 = vector.extract_strided_slice %15 {offsets = [0, 0, 8], sizes = [1, 8, 8], strides = [1, 1, 1]} : vector<1x8x32xbf16> to vector<1x8x8xbf16>
    %490 = vector.extract_strided_slice %17 {offsets = [0, 0, 8], sizes = [1, 8, 8], strides = [1, 1, 1]} : vector<1x8x32xbf16> to vector<1x8x8xbf16>
    "tpu.trace_start"() <{level = 10 : i32, message = "bnd,bmd->bnm"}> : () -> ()
    %cst_541 = arith.constant dense<0.000000e+00> : vector<1x8x8xf32>
    %491 = tpu.matmul %488, %489, %cst_541 {dimension_numbers = #tpu.dot_dimension_numbers<[2], [2], [1], [1], [0, 0, 0, 1, 1, 1], [0], [0]>} : vector<1x8x8xbf16>, vector<1x8x8xbf16>, vector<1x8x8xf32> -> vector<1x8x8xf32>
    "tpu.trace_stop"() : () -> ()
    %492 = vector.broadcast %275 : f32 to vector<1x8x8xf32>
    %493 = vector.broadcast %34 : f32 to vector<1x8x8xf32>
    %494 = arith.mulf %491, %493 : vector<1x8x8xf32>
    %495 = vector.broadcast %98 : f32 to vector<1x8x8xf32>
    %496 = arith.mulf %2, %495 : vector<1x8x8xf32>
    %497 = arith.addf %494, %496 : vector<1x8x8xf32>
    %498 = vector.broadcast %162 : f32 to vector<1x8x8xf32>
    %499 = arith.addf %497, %498 : vector<1x8x8xf32>
    %cst_542 = arith.constant 0.000000e+00 : f32
    %500 = vector.broadcast %cst_542 : f32 to vector<1x8x8xf32>
    %501 = arith.maximumf %499, %500 : vector<1x8x8xf32>
    %502 = vector.broadcast %226 : f32 to vector<1x8x8xf32>
    %503 = arith.mulf %501, %502 : vector<1x8x8xf32>
    %504 = arith.addf %492, %503 : vector<1x8x8xf32>
    %505 = vector.broadcast %35 : f32 to vector<1x8x8xf32>
    %506 = arith.mulf %491, %505 : vector<1x8x8xf32>
    %507 = vector.broadcast %99 : f32 to vector<1x8x8xf32>
    %508 = arith.mulf %2, %507 : vector<1x8x8xf32>
    %509 = arith.addf %506, %508 : vector<1x8x8xf32>
    %510 = vector.broadcast %163 : f32 to vector<1x8x8xf32>
    %511 = arith.addf %509, %510 : vector<1x8x8xf32>
    %cst_543 = arith.constant 0.000000e+00 : f32
    %512 = vector.broadcast %cst_543 : f32 to vector<1x8x8xf32>
    %513 = arith.maximumf %511, %512 : vector<1x8x8xf32>
    %514 = vector.broadcast %227 : f32 to vector<1x8x8xf32>
    %515 = arith.mulf %513, %514 : vector<1x8x8xf32>
    %516 = arith.addf %504, %515 : vector<1x8x8xf32>
    %517 = vector.broadcast %36 : f32 to vector<1x8x8xf32>
    %518 = arith.mulf %491, %517 : vector<1x8x8xf32>
    %519 = vector.broadcast %100 : f32 to vector<1x8x8xf32>
    %520 = arith.mulf %2, %519 : vector<1x8x8xf32>
    %521 = arith.addf %518, %520 : vector<1x8x8xf32>
    %522 = vector.broadcast %164 : f32 to vector<1x8x8xf32>
    %523 = arith.addf %521, %522 : vector<1x8x8xf32>
    %cst_544 = arith.constant 0.000000e+00 : f32
    %524 = vector.broadcast %cst_544 : f32 to vector<1x8x8xf32>
    %525 = arith.maximumf %523, %524 : vector<1x8x8xf32>
    %526 = vector.broadcast %228 : f32 to vector<1x8x8xf32>
    %527 = arith.mulf %525, %526 : vector<1x8x8xf32>
    %528 = arith.addf %516, %527 : vector<1x8x8xf32>
    %529 = vector.broadcast %37 : f32 to vector<1x8x8xf32>
    %530 = arith.mulf %491, %529 : vector<1x8x8xf32>
    %531 = vector.broadcast %101 : f32 to vector<1x8x8xf32>
    %532 = arith.mulf %2, %531 : vector<1x8x8xf32>
    %533 = arith.addf %530, %532 : vector<1x8x8xf32>
    %534 = vector.broadcast %165 : f32 to vector<1x8x8xf32>
    %535 = arith.addf %533, %534 : vector<1x8x8xf32>
    %cst_545 = arith.constant 0.000000e+00 : f32
    %536 = vector.broadcast %cst_545 : f32 to vector<1x8x8xf32>
    %537 = arith.maximumf %535, %536 : vector<1x8x8xf32>
    %538 = vector.broadcast %229 : f32 to vector<1x8x8xf32>
    %539 = arith.mulf %537, %538 : vector<1x8x8xf32>
    %540 = arith.addf %528, %539 : vector<1x8x8xf32>
    %541 = vector.broadcast %38 : f32 to vector<1x8x8xf32>
    %542 = arith.mulf %491, %541 : vector<1x8x8xf32>
    %543 = vector.broadcast %102 : f32 to vector<1x8x8xf32>
    %544 = arith.mulf %2, %543 : vector<1x8x8xf32>
    %545 = arith.addf %542, %544 : vector<1x8x8xf32>
    %546 = vector.broadcast %166 : f32 to vector<1x8x8xf32>
    %547 = arith.addf %545, %546 : vector<1x8x8xf32>
    %cst_546 = arith.constant 0.000000e+00 : f32
    %548 = vector.broadcast %cst_546 : f32 to vector<1x8x8xf32>
    %549 = arith.maximumf %547, %548 : vector<1x8x8xf32>
    %550 = vector.broadcast %230 : f32 to vector<1x8x8xf32>
    %551 = arith.mulf %549, %550 : vector<1x8x8xf32>
    %552 = arith.addf %540, %551 : vector<1x8x8xf32>
    %553 = vector.broadcast %39 : f32 to vector<1x8x8xf32>
    %554 = arith.mulf %491, %553 : vector<1x8x8xf32>
    %555 = vector.broadcast %103 : f32 to vector<1x8x8xf32>
    %556 = arith.mulf %2, %555 : vector<1x8x8xf32>
    %557 = arith.addf %554, %556 : vector<1x8x8xf32>
    %558 = vector.broadcast %167 : f32 to vector<1x8x8xf32>
    %559 = arith.addf %557, %558 : vector<1x8x8xf32>
    %cst_547 = arith.constant 0.000000e+00 : f32
    %560 = vector.broadcast %cst_547 : f32 to vector<1x8x8xf32>
    %561 = arith.maximumf %559, %560 : vector<1x8x8xf32>
    %562 = vector.broadcast %231 : f32 to vector<1x8x8xf32>
    %563 = arith.mulf %561, %562 : vector<1x8x8xf32>
    %564 = arith.addf %552, %563 : vector<1x8x8xf32>
    %565 = vector.broadcast %40 : f32 to vector<1x8x8xf32>
    %566 = arith.mulf %491, %565 : vector<1x8x8xf32>
    %567 = vector.broadcast %104 : f32 to vector<1x8x8xf32>
    %568 = arith.mulf %2, %567 : vector<1x8x8xf32>
    %569 = arith.addf %566, %568 : vector<1x8x8xf32>
    %570 = vector.broadcast %168 : f32 to vector<1x8x8xf32>
    %571 = arith.addf %569, %570 : vector<1x8x8xf32>
    %cst_548 = arith.constant 0.000000e+00 : f32
    %572 = vector.broadcast %cst_548 : f32 to vector<1x8x8xf32>
    %573 = arith.maximumf %571, %572 : vector<1x8x8xf32>
    %574 = vector.broadcast %232 : f32 to vector<1x8x8xf32>
    %575 = arith.mulf %573, %574 : vector<1x8x8xf32>
    %576 = arith.addf %564, %575 : vector<1x8x8xf32>
    %577 = vector.broadcast %41 : f32 to vector<1x8x8xf32>
    %578 = arith.mulf %491, %577 : vector<1x8x8xf32>
    %579 = vector.broadcast %105 : f32 to vector<1x8x8xf32>
    %580 = arith.mulf %2, %579 : vector<1x8x8xf32>
    %581 = arith.addf %578, %580 : vector<1x8x8xf32>
    %582 = vector.broadcast %169 : f32 to vector<1x8x8xf32>
    %583 = arith.addf %581, %582 : vector<1x8x8xf32>
    %cst_549 = arith.constant 0.000000e+00 : f32
    %584 = vector.broadcast %cst_549 : f32 to vector<1x8x8xf32>
    %585 = arith.maximumf %583, %584 : vector<1x8x8xf32>
    %586 = vector.broadcast %233 : f32 to vector<1x8x8xf32>
    %587 = arith.mulf %585, %586 : vector<1x8x8xf32>
    %588 = arith.addf %576, %587 : vector<1x8x8xf32>
    %589 = vector.broadcast %42 : f32 to vector<1x8x8xf32>
    %590 = arith.mulf %491, %589 : vector<1x8x8xf32>
    %591 = vector.broadcast %106 : f32 to vector<1x8x8xf32>
    %592 = arith.mulf %2, %591 : vector<1x8x8xf32>
    %593 = arith.addf %590, %592 : vector<1x8x8xf32>
    %594 = vector.broadcast %170 : f32 to vector<1x8x8xf32>
    %595 = arith.addf %593, %594 : vector<1x8x8xf32>
    %cst_550 = arith.constant 0.000000e+00 : f32
    %596 = vector.broadcast %cst_550 : f32 to vector<1x8x8xf32>
    %597 = arith.maximumf %595, %596 : vector<1x8x8xf32>
    %598 = vector.broadcast %234 : f32 to vector<1x8x8xf32>
    %599 = arith.mulf %597, %598 : vector<1x8x8xf32>
    %600 = arith.addf %588, %599 : vector<1x8x8xf32>
    %601 = vector.broadcast %43 : f32 to vector<1x8x8xf32>
    %602 = arith.mulf %491, %601 : vector<1x8x8xf32>
    %603 = vector.broadcast %107 : f32 to vector<1x8x8xf32>
    %604 = arith.mulf %2, %603 : vector<1x8x8xf32>
    %605 = arith.addf %602, %604 : vector<1x8x8xf32>
    %606 = vector.broadcast %171 : f32 to vector<1x8x8xf32>
    %607 = arith.addf %605, %606 : vector<1x8x8xf32>
    %cst_551 = arith.constant 0.000000e+00 : f32
    %608 = vector.broadcast %cst_551 : f32 to vector<1x8x8xf32>
    %609 = arith.maximumf %607, %608 : vector<1x8x8xf32>
    %610 = vector.broadcast %235 : f32 to vector<1x8x8xf32>
    %611 = arith.mulf %609, %610 : vector<1x8x8xf32>
    %612 = arith.addf %600, %611 : vector<1x8x8xf32>
    %613 = vector.broadcast %44 : f32 to vector<1x8x8xf32>
    %614 = arith.mulf %491, %613 : vector<1x8x8xf32>
    %615 = vector.broadcast %108 : f32 to vector<1x8x8xf32>
    %616 = arith.mulf %2, %615 : vector<1x8x8xf32>
    %617 = arith.addf %614, %616 : vector<1x8x8xf32>
    %618 = vector.broadcast %172 : f32 to vector<1x8x8xf32>
    %619 = arith.addf %617, %618 : vector<1x8x8xf32>
    %cst_552 = arith.constant 0.000000e+00 : f32
    %620 = vector.broadcast %cst_552 : f32 to vector<1x8x8xf32>
    %621 = arith.maximumf %619, %620 : vector<1x8x8xf32>
    %622 = vector.broadcast %236 : f32 to vector<1x8x8xf32>
    %623 = arith.mulf %621, %622 : vector<1x8x8xf32>
    %624 = arith.addf %612, %623 : vector<1x8x8xf32>
    %625 = vector.broadcast %45 : f32 to vector<1x8x8xf32>
    %626 = arith.mulf %491, %625 : vector<1x8x8xf32>
    %627 = vector.broadcast %109 : f32 to vector<1x8x8xf32>
    %628 = arith.mulf %2, %627 : vector<1x8x8xf32>
    %629 = arith.addf %626, %628 : vector<1x8x8xf32>
    %630 = vector.broadcast %173 : f32 to vector<1x8x8xf32>
    %631 = arith.addf %629, %630 : vector<1x8x8xf32>
    %cst_553 = arith.constant 0.000000e+00 : f32
    %632 = vector.broadcast %cst_553 : f32 to vector<1x8x8xf32>
    %633 = arith.maximumf %631, %632 : vector<1x8x8xf32>
    %634 = vector.broadcast %237 : f32 to vector<1x8x8xf32>
    %635 = arith.mulf %633, %634 : vector<1x8x8xf32>
    %636 = arith.addf %624, %635 : vector<1x8x8xf32>
    %637 = vector.broadcast %46 : f32 to vector<1x8x8xf32>
    %638 = arith.mulf %491, %637 : vector<1x8x8xf32>
    %639 = vector.broadcast %110 : f32 to vector<1x8x8xf32>
    %640 = arith.mulf %2, %639 : vector<1x8x8xf32>
    %641 = arith.addf %638, %640 : vector<1x8x8xf32>
    %642 = vector.broadcast %174 : f32 to vector<1x8x8xf32>
    %643 = arith.addf %641, %642 : vector<1x8x8xf32>
    %cst_554 = arith.constant 0.000000e+00 : f32
    %644 = vector.broadcast %cst_554 : f32 to vector<1x8x8xf32>
    %645 = arith.maximumf %643, %644 : vector<1x8x8xf32>
    %646 = vector.broadcast %238 : f32 to vector<1x8x8xf32>
    %647 = arith.mulf %645, %646 : vector<1x8x8xf32>
    %648 = arith.addf %636, %647 : vector<1x8x8xf32>
    %649 = vector.broadcast %47 : f32 to vector<1x8x8xf32>
    %650 = arith.mulf %491, %649 : vector<1x8x8xf32>
    %651 = vector.broadcast %111 : f32 to vector<1x8x8xf32>
    %652 = arith.mulf %2, %651 : vector<1x8x8xf32>
    %653 = arith.addf %650, %652 : vector<1x8x8xf32>
    %654 = vector.broadcast %175 : f32 to vector<1x8x8xf32>
    %655 = arith.addf %653, %654 : vector<1x8x8xf32>
    %cst_555 = arith.constant 0.000000e+00 : f32
    %656 = vector.broadcast %cst_555 : f32 to vector<1x8x8xf32>
    %657 = arith.maximumf %655, %656 : vector<1x8x8xf32>
    %658 = vector.broadcast %239 : f32 to vector<1x8x8xf32>
    %659 = arith.mulf %657, %658 : vector<1x8x8xf32>
    %660 = arith.addf %648, %659 : vector<1x8x8xf32>
    %661 = vector.broadcast %48 : f32 to vector<1x8x8xf32>
    %662 = arith.mulf %491, %661 : vector<1x8x8xf32>
    %663 = vector.broadcast %112 : f32 to vector<1x8x8xf32>
    %664 = arith.mulf %2, %663 : vector<1x8x8xf32>
    %665 = arith.addf %662, %664 : vector<1x8x8xf32>
    %666 = vector.broadcast %176 : f32 to vector<1x8x8xf32>
    %667 = arith.addf %665, %666 : vector<1x8x8xf32>
    %cst_556 = arith.constant 0.000000e+00 : f32
    %668 = vector.broadcast %cst_556 : f32 to vector<1x8x8xf32>
    %669 = arith.maximumf %667, %668 : vector<1x8x8xf32>
    %670 = vector.broadcast %240 : f32 to vector<1x8x8xf32>
    %671 = arith.mulf %669, %670 : vector<1x8x8xf32>
    %672 = arith.addf %660, %671 : vector<1x8x8xf32>
    %673 = vector.broadcast %49 : f32 to vector<1x8x8xf32>
    %674 = arith.mulf %491, %673 : vector<1x8x8xf32>
    %675 = vector.broadcast %113 : f32 to vector<1x8x8xf32>
    %676 = arith.mulf %2, %675 : vector<1x8x8xf32>
    %677 = arith.addf %674, %676 : vector<1x8x8xf32>
    %678 = vector.broadcast %177 : f32 to vector<1x8x8xf32>
    %679 = arith.addf %677, %678 : vector<1x8x8xf32>
    %cst_557 = arith.constant 0.000000e+00 : f32
    %680 = vector.broadcast %cst_557 : f32 to vector<1x8x8xf32>
    %681 = arith.maximumf %679, %680 : vector<1x8x8xf32>
    %682 = vector.broadcast %241 : f32 to vector<1x8x8xf32>
    %683 = arith.mulf %681, %682 : vector<1x8x8xf32>
    %684 = arith.addf %672, %683 : vector<1x8x8xf32>
    %cst_558 = arith.constant dense<0xFF800000> : vector<1x8xf32>
    %685 = vector.multi_reduction <maximumf>, %684, %cst_558 [2] : vector<1x8x8xf32> to vector<1x8xf32>
    %686 = vector.shape_cast %685 : vector<1x8xf32> to vector<1x8x1xf32>
    %687 = vector.broadcast %686 : vector<1x8x1xf32> to vector<1x8x8xf32>
    %688 = arith.subf %684, %687 : vector<1x8x8xf32>
    %689 = math.exp %688 : vector<1x8x8xf32>
    %cst_559 = arith.constant dense<0.000000e+00> : vector<1x8xf32>
    %690 = vector.multi_reduction <add>, %689, %cst_559 [2] : vector<1x8x8xf32> to vector<1x8xf32>
    %691 = vector.shape_cast %690 : vector<1x8xf32> to vector<1x8x1xf32>
    %692 = tpu.reciprocal %691 {approx = true} : vector<1x8x1xf32> -> vector<1x8x1xf32>
    %693 = vector.broadcast %692 : vector<1x8x1xf32> to vector<1x8x8xf32>
    %694 = arith.mulf %689, %693 : vector<1x8x8xf32>
    %695 = arith.truncf %694 : vector<1x8x8xf32> to vector<1x8x8xbf16>
    "tpu.trace_start"() <{level = 10 : i32, message = "bnm,bmd->bnd"}> : () -> ()
    %cst_560 = arith.constant dense<0.000000e+00> : vector<1x8x8xf32>
    %696 = tpu.matmul %695, %490, %cst_560 {dimension_numbers = #tpu.dot_dimension_numbers<[2], [1], [1], [2], [0, 0, 0, 1, 1, 2], [0], [0]>} : vector<1x8x8xbf16>, vector<1x8x8xbf16>, vector<1x8x8xf32> -> vector<1x8x8xf32>
    "tpu.trace_stop"() : () -> ()
    %c0_561 = arith.constant 0 : index
    %c0_562 = arith.constant 0 : index
    %c8_563 = arith.constant 8 : index
    %697 = vector.load %arg22[%c0_561, %c0_562, %c8_563] : memref<1x8x32xf32, #tpu.memory_space<vmem>>, vector<1x8x8xf32>
    tpu.vector_store %arg22[%c0_561, %c0_562, %c8_563], %696 {strides = array<i32>} : memref<1x8x32xf32, #tpu.memory_space<vmem>>, vector<1x8x8xf32>,
    %698 = vector.extract_strided_slice %10 {offsets = [0, 0, 16], sizes = [1, 8, 8], strides = [1, 1, 1]} : vector<1x8x32xbf16> to vector<1x8x8xbf16>
    %699 = vector.extract_strided_slice %15 {offsets = [0, 0, 16], sizes = [1, 8, 8], strides = [1, 1, 1]} : vector<1x8x32xbf16> to vector<1x8x8xbf16>
    %700 = vector.extract_strided_slice %17 {offsets = [0, 0, 16], sizes = [1, 8, 8], strides = [1, 1, 1]} : vector<1x8x32xbf16> to vector<1x8x8xbf16>
    "tpu.trace_start"() <{level = 10 : i32, message = "bnd,bmd->bnm"}> : () -> ()
    %cst_564 = arith.constant dense<0.000000e+00> : vector<1x8x8xf32>
    %701 = tpu.matmul %698, %699, %cst_564 {dimension_numbers = #tpu.dot_dimension_numbers<[2], [2], [1], [1], [0, 0, 0, 1, 1, 1], [0], [0]>} : vector<1x8x8xbf16>, vector<1x8x8xbf16>, vector<1x8x8xf32> -> vector<1x8x8xf32>
    "tpu.trace_stop"() : () -> ()
    %702 = vector.broadcast %276 : f32 to vector<1x8x8xf32>
    %703 = vector.broadcast %50 : f32 to vector<1x8x8xf32>
    %704 = arith.mulf %701, %703 : vector<1x8x8xf32>
    %705 = vector.broadcast %114 : f32 to vector<1x8x8xf32>
    %706 = arith.mulf %2, %705 : vector<1x8x8xf32>
    %707 = arith.addf %704, %706 : vector<1x8x8xf32>
    %708 = vector.broadcast %178 : f32 to vector<1x8x8xf32>
    %709 = arith.addf %707, %708 : vector<1x8x8xf32>
    %cst_565 = arith.constant 0.000000e+00 : f32
    %710 = vector.broadcast %cst_565 : f32 to vector<1x8x8xf32>
    %711 = arith.maximumf %709, %710 : vector<1x8x8xf32>
    %712 = vector.broadcast %242 : f32 to vector<1x8x8xf32>
    %713 = arith.mulf %711, %712 : vector<1x8x8xf32>
    %714 = arith.addf %702, %713 : vector<1x8x8xf32>
    %715 = vector.broadcast %51 : f32 to vector<1x8x8xf32>
    %716 = arith.mulf %701, %715 : vector<1x8x8xf32>
    %717 = vector.broadcast %115 : f32 to vector<1x8x8xf32>
    %718 = arith.mulf %2, %717 : vector<1x8x8xf32>
    %719 = arith.addf %716, %718 : vector<1x8x8xf32>
    %720 = vector.broadcast %179 : f32 to vector<1x8x8xf32>
    %721 = arith.addf %719, %720 : vector<1x8x8xf32>
    %cst_566 = arith.constant 0.000000e+00 : f32
    %722 = vector.broadcast %cst_566 : f32 to vector<1x8x8xf32>
    %723 = arith.maximumf %721, %722 : vector<1x8x8xf32>
    %724 = vector.broadcast %243 : f32 to vector<1x8x8xf32>
    %725 = arith.mulf %723, %724 : vector<1x8x8xf32>
    %726 = arith.addf %714, %725 : vector<1x8x8xf32>
    %727 = vector.broadcast %52 : f32 to vector<1x8x8xf32>
    %728 = arith.mulf %701, %727 : vector<1x8x8xf32>
    %729 = vector.broadcast %116 : f32 to vector<1x8x8xf32>
    %730 = arith.mulf %2, %729 : vector<1x8x8xf32>
    %731 = arith.addf %728, %730 : vector<1x8x8xf32>
    %732 = vector.broadcast %180 : f32 to vector<1x8x8xf32>
    %733 = arith.addf %731, %732 : vector<1x8x8xf32>
    %cst_567 = arith.constant 0.000000e+00 : f32
    %734 = vector.broadcast %cst_567 : f32 to vector<1x8x8xf32>
    %735 = arith.maximumf %733, %734 : vector<1x8x8xf32>
    %736 = vector.broadcast %244 : f32 to vector<1x8x8xf32>
    %737 = arith.mulf %735, %736 : vector<1x8x8xf32>
    %738 = arith.addf %726, %737 : vector<1x8x8xf32>
    %739 = vector.broadcast %53 : f32 to vector<1x8x8xf32>
    %740 = arith.mulf %701, %739 : vector<1x8x8xf32>
    %741 = vector.broadcast %117 : f32 to vector<1x8x8xf32>
    %742 = arith.mulf %2, %741 : vector<1x8x8xf32>
    %743 = arith.addf %740, %742 : vector<1x8x8xf32>
    %744 = vector.broadcast %181 : f32 to vector<1x8x8xf32>
    %745 = arith.addf %743, %744 : vector<1x8x8xf32>
    %cst_568 = arith.constant 0.000000e+00 : f32
    %746 = vector.broadcast %cst_568 : f32 to vector<1x8x8xf32>
    %747 = arith.maximumf %745, %746 : vector<1x8x8xf32>
    %748 = vector.broadcast %245 : f32 to vector<1x8x8xf32>
    %749 = arith.mulf %747, %748 : vector<1x8x8xf32>
    %750 = arith.addf %738, %749 : vector<1x8x8xf32>
    %751 = vector.broadcast %54 : f32 to vector<1x8x8xf32>
    %752 = arith.mulf %701, %751 : vector<1x8x8xf32>
    %753 = vector.broadcast %118 : f32 to vector<1x8x8xf32>
    %754 = arith.mulf %2, %753 : vector<1x8x8xf32>
    %755 = arith.addf %752, %754 : vector<1x8x8xf32>
    %756 = vector.broadcast %182 : f32 to vector<1x8x8xf32>
    %757 = arith.addf %755, %756 : vector<1x8x8xf32>
    %cst_569 = arith.constant 0.000000e+00 : f32
    %758 = vector.broadcast %cst_569 : f32 to vector<1x8x8xf32>
    %759 = arith.maximumf %757, %758 : vector<1x8x8xf32>
    %760 = vector.broadcast %246 : f32 to vector<1x8x8xf32>
    %761 = arith.mulf %759, %760 : vector<1x8x8xf32>
    %762 = arith.addf %750, %761 : vector<1x8x8xf32>
    %763 = vector.broadcast %55 : f32 to vector<1x8x8xf32>
    %764 = arith.mulf %701, %763 : vector<1x8x8xf32>
    %765 = vector.broadcast %119 : f32 to vector<1x8x8xf32>
    %766 = arith.mulf %2, %765 : vector<1x8x8xf32>
    %767 = arith.addf %764, %766 : vector<1x8x8xf32>
    %768 = vector.broadcast %183 : f32 to vector<1x8x8xf32>
    %769 = arith.addf %767, %768 : vector<1x8x8xf32>
    %cst_570 = arith.constant 0.000000e+00 : f32
    %770 = vector.broadcast %cst_570 : f32 to vector<1x8x8xf32>
    %771 = arith.maximumf %769, %770 : vector<1x8x8xf32>
    %772 = vector.broadcast %247 : f32 to vector<1x8x8xf32>
    %773 = arith.mulf %771, %772 : vector<1x8x8xf32>
    %774 = arith.addf %762, %773 : vector<1x8x8xf32>
    %775 = vector.broadcast %56 : f32 to vector<1x8x8xf32>
    %776 = arith.mulf %701, %775 : vector<1x8x8xf32>
    %777 = vector.broadcast %120 : f32 to vector<1x8x8xf32>
    %778 = arith.mulf %2, %777 : vector<1x8x8xf32>
    %779 = arith.addf %776, %778 : vector<1x8x8xf32>
    %780 = vector.broadcast %184 : f32 to vector<1x8x8xf32>
    %781 = arith.addf %779, %780 : vector<1x8x8xf32>
    %cst_571 = arith.constant 0.000000e+00 : f32
    %782 = vector.broadcast %cst_571 : f32 to vector<1x8x8xf32>
    %783 = arith.maximumf %781, %782 : vector<1x8x8xf32>
    %784 = vector.broadcast %248 : f32 to vector<1x8x8xf32>
    %785 = arith.mulf %783, %784 : vector<1x8x8xf32>
    %786 = arith.addf %774, %785 : vector<1x8x8xf32>
    %787 = vector.broadcast %57 : f32 to vector<1x8x8xf32>
    %788 = arith.mulf %701, %787 : vector<1x8x8xf32>
    %789 = vector.broadcast %121 : f32 to vector<1x8x8xf32>
    %790 = arith.mulf %2, %789 : vector<1x8x8xf32>
    %791 = arith.addf %788, %790 : vector<1x8x8xf32>
    %792 = vector.broadcast %185 : f32 to vector<1x8x8xf32>
    %793 = arith.addf %791, %792 : vector<1x8x8xf32>
    %cst_572 = arith.constant 0.000000e+00 : f32
    %794 = vector.broadcast %cst_572 : f32 to vector<1x8x8xf32>
    %795 = arith.maximumf %793, %794 : vector<1x8x8xf32>
    %796 = vector.broadcast %249 : f32 to vector<1x8x8xf32>
    %797 = arith.mulf %795, %796 : vector<1x8x8xf32>
    %798 = arith.addf %786, %797 : vector<1x8x8xf32>
    %799 = vector.broadcast %58 : f32 to vector<1x8x8xf32>
    %800 = arith.mulf %701, %799 : vector<1x8x8xf32>
    %801 = vector.broadcast %122 : f32 to vector<1x8x8xf32>
    %802 = arith.mulf %2, %801 : vector<1x8x8xf32>
    %803 = arith.addf %800, %802 : vector<1x8x8xf32>
    %804 = vector.broadcast %186 : f32 to vector<1x8x8xf32>
    %805 = arith.addf %803, %804 : vector<1x8x8xf32>
    %cst_573 = arith.constant 0.000000e+00 : f32
    %806 = vector.broadcast %cst_573 : f32 to vector<1x8x8xf32>
    %807 = arith.maximumf %805, %806 : vector<1x8x8xf32>
    %808 = vector.broadcast %250 : f32 to vector<1x8x8xf32>
    %809 = arith.mulf %807, %808 : vector<1x8x8xf32>
    %810 = arith.addf %798, %809 : vector<1x8x8xf32>
    %811 = vector.broadcast %59 : f32 to vector<1x8x8xf32>
    %812 = arith.mulf %701, %811 : vector<1x8x8xf32>
    %813 = vector.broadcast %123 : f32 to vector<1x8x8xf32>
    %814 = arith.mulf %2, %813 : vector<1x8x8xf32>
    %815 = arith.addf %812, %814 : vector<1x8x8xf32>
    %816 = vector.broadcast %187 : f32 to vector<1x8x8xf32>
    %817 = arith.addf %815, %816 : vector<1x8x8xf32>
    %cst_574 = arith.constant 0.000000e+00 : f32
    %818 = vector.broadcast %cst_574 : f32 to vector<1x8x8xf32>
    %819 = arith.maximumf %817, %818 : vector<1x8x8xf32>
    %820 = vector.broadcast %251 : f32 to vector<1x8x8xf32>
    %821 = arith.mulf %819, %820 : vector<1x8x8xf32>
    %822 = arith.addf %810, %821 : vector<1x8x8xf32>
    %823 = vector.broadcast %60 : f32 to vector<1x8x8xf32>
    %824 = arith.mulf %701, %823 : vector<1x8x8xf32>
    %825 = vector.broadcast %124 : f32 to vector<1x8x8xf32>
    %826 = arith.mulf %2, %825 : vector<1x8x8xf32>
    %827 = arith.addf %824, %826 : vector<1x8x8xf32>
    %828 = vector.broadcast %188 : f32 to vector<1x8x8xf32>
    %829 = arith.addf %827, %828 : vector<1x8x8xf32>
    %cst_575 = arith.constant 0.000000e+00 : f32
    %830 = vector.broadcast %cst_575 : f32 to vector<1x8x8xf32>
    %831 = arith.maximumf %829, %830 : vector<1x8x8xf32>
    %832 = vector.broadcast %252 : f32 to vector<1x8x8xf32>
    %833 = arith.mulf %831, %832 : vector<1x8x8xf32>
    %834 = arith.addf %822, %833 : vector<1x8x8xf32>
    %835 = vector.broadcast %61 : f32 to vector<1x8x8xf32>
    %836 = arith.mulf %701, %835 : vector<1x8x8xf32>
    %837 = vector.broadcast %125 : f32 to vector<1x8x8xf32>
    %838 = arith.mulf %2, %837 : vector<1x8x8xf32>
    %839 = arith.addf %836, %838 : vector<1x8x8xf32>
    %840 = vector.broadcast %189 : f32 to vector<1x8x8xf32>
    %841 = arith.addf %839, %840 : vector<1x8x8xf32>
    %cst_576 = arith.constant 0.000000e+00 : f32
    %842 = vector.broadcast %cst_576 : f32 to vector<1x8x8xf32>
    %843 = arith.maximumf %841, %842 : vector<1x8x8xf32>
    %844 = vector.broadcast %253 : f32 to vector<1x8x8xf32>
    %845 = arith.mulf %843, %844 : vector<1x8x8xf32>
    %846 = arith.addf %834, %845 : vector<1x8x8xf32>
    %847 = vector.broadcast %62 : f32 to vector<1x8x8xf32>
    %848 = arith.mulf %701, %847 : vector<1x8x8xf32>
    %849 = vector.broadcast %126 : f32 to vector<1x8x8xf32>
    %850 = arith.mulf %2, %849 : vector<1x8x8xf32>
    %851 = arith.addf %848, %850 : vector<1x8x8xf32>
    %852 = vector.broadcast %190 : f32 to vector<1x8x8xf32>
    %853 = arith.addf %851, %852 : vector<1x8x8xf32>
    %cst_577 = arith.constant 0.000000e+00 : f32
    %854 = vector.broadcast %cst_577 : f32 to vector<1x8x8xf32>
    %855 = arith.maximumf %853, %854 : vector<1x8x8xf32>
    %856 = vector.broadcast %254 : f32 to vector<1x8x8xf32>
    %857 = arith.mulf %855, %856 : vector<1x8x8xf32>
    %858 = arith.addf %846, %857 : vector<1x8x8xf32>
    %859 = vector.broadcast %63 : f32 to vector<1x8x8xf32>
    %860 = arith.mulf %701, %859 : vector<1x8x8xf32>
    %861 = vector.broadcast %127 : f32 to vector<1x8x8xf32>
    %862 = arith.mulf %2, %861 : vector<1x8x8xf32>
    %863 = arith.addf %860, %862 : vector<1x8x8xf32>
    %864 = vector.broadcast %191 : f32 to vector<1x8x8xf32>
    %865 = arith.addf %863, %864 : vector<1x8x8xf32>
    %cst_578 = arith.constant 0.000000e+00 : f32
    %866 = vector.broadcast %cst_578 : f32 to vector<1x8x8xf32>
    %867 = arith.maximumf %865, %866 : vector<1x8x8xf32>
    %868 = vector.broadcast %255 : f32 to vector<1x8x8xf32>
    %869 = arith.mulf %867, %868 : vector<1x8x8xf32>
    %870 = arith.addf %858, %869 : vector<1x8x8xf32>
    %871 = vector.broadcast %64 : f32 to vector<1x8x8xf32>
    %872 = arith.mulf %701, %871 : vector<1x8x8xf32>
    %873 = vector.broadcast %128 : f32 to vector<1x8x8xf32>
    %874 = arith.mulf %2, %873 : vector<1x8x8xf32>
    %875 = arith.addf %872, %874 : vector<1x8x8xf32>
    %876 = vector.broadcast %192 : f32 to vector<1x8x8xf32>
    %877 = arith.addf %875, %876 : vector<1x8x8xf32>
    %cst_579 = arith.constant 0.000000e+00 : f32
    %878 = vector.broadcast %cst_579 : f32 to vector<1x8x8xf32>
    %879 = arith.maximumf %877, %878 : vector<1x8x8xf32>
    %880 = vector.broadcast %256 : f32 to vector<1x8x8xf32>
    %881 = arith.mulf %879, %880 : vector<1x8x8xf32>
    %882 = arith.addf %870, %881 : vector<1x8x8xf32>
    %883 = vector.broadcast %65 : f32 to vector<1x8x8xf32>
    %884 = arith.mulf %701, %883 : vector<1x8x8xf32>
    %885 = vector.broadcast %129 : f32 to vector<1x8x8xf32>
    %886 = arith.mulf %2, %885 : vector<1x8x8xf32>
    %887 = arith.addf %884, %886 : vector<1x8x8xf32>
    %888 = vector.broadcast %193 : f32 to vector<1x8x8xf32>
    %889 = arith.addf %887, %888 : vector<1x8x8xf32>
    %cst_580 = arith.constant 0.000000e+00 : f32
    %890 = vector.broadcast %cst_580 : f32 to vector<1x8x8xf32>
    %891 = arith.maximumf %889, %890 : vector<1x8x8xf32>
    %892 = vector.broadcast %257 : f32 to vector<1x8x8xf32>
    %893 = arith.mulf %891, %892 : vector<1x8x8xf32>
    %894 = arith.addf %882, %893 : vector<1x8x8xf32>
    %cst_581 = arith.constant dense<0xFF800000> : vector<1x8xf32>
    %895 = vector.multi_reduction <maximumf>, %894, %cst_581 [2] : vector<1x8x8xf32> to vector<1x8xf32>
    %896 = vector.shape_cast %895 : vector<1x8xf32> to vector<1x8x1xf32>
    %897 = vector.broadcast %896 : vector<1x8x1xf32> to vector<1x8x8xf32>
    %898 = arith.subf %894, %897 : vector<1x8x8xf32>
    %899 = math.exp %898 : vector<1x8x8xf32>
    %cst_582 = arith.constant dense<0.000000e+00> : vector<1x8xf32>
    %900 = vector.multi_reduction <add>, %899, %cst_582 [2] : vector<1x8x8xf32> to vector<1x8xf32>
    %901 = vector.shape_cast %900 : vector<1x8xf32> to vector<1x8x1xf32>
    %902 = tpu.reciprocal %901 {approx = true} : vector<1x8x1xf32> -> vector<1x8x1xf32>
    %903 = vector.broadcast %902 : vector<1x8x1xf32> to vector<1x8x8xf32>
    %904 = arith.mulf %899, %903 : vector<1x8x8xf32>
    %905 = arith.truncf %904 : vector<1x8x8xf32> to vector<1x8x8xbf16>
    "tpu.trace_start"() <{level = 10 : i32, message = "bnm,bmd->bnd"}> : () -> ()
    %cst_583 = arith.constant dense<0.000000e+00> : vector<1x8x8xf32>
    %906 = tpu.matmul %905, %700, %cst_583 {dimension_numbers = #tpu.dot_dimension_numbers<[2], [1], [1], [2], [0, 0, 0, 1, 1, 2], [0], [0]>} : vector<1x8x8xbf16>, vector<1x8x8xbf16>, vector<1x8x8xf32> -> vector<1x8x8xf32>
    "tpu.trace_stop"() : () -> ()
    %c0_584 = arith.constant 0 : index
    %c0_585 = arith.constant 0 : index
    %c16 = arith.constant 16 : index
    %907 = vector.load %arg22[%c0_584, %c0_585, %c16] : memref<1x8x32xf32, #tpu.memory_space<vmem>>, vector<1x8x8xf32>
    tpu.vector_store %arg22[%c0_584, %c0_585, %c16], %906 {strides = array<i32>} : memref<1x8x32xf32, #tpu.memory_space<vmem>>, vector<1x8x8xf32>,
    %908 = vector.extract_strided_slice %10 {offsets = [0, 0, 24], sizes = [1, 8, 8], strides = [1, 1, 1]} : vector<1x8x32xbf16> to vector<1x8x8xbf16>
    %909 = vector.extract_strided_slice %15 {offsets = [0, 0, 24], sizes = [1, 8, 8], strides = [1, 1, 1]} : vector<1x8x32xbf16> to vector<1x8x8xbf16>
    %910 = vector.extract_strided_slice %17 {offsets = [0, 0, 24], sizes = [1, 8, 8], strides = [1, 1, 1]} : vector<1x8x32xbf16> to vector<1x8x8xbf16>
    "tpu.trace_start"() <{level = 10 : i32, message = "bnd,bmd->bnm"}> : () -> ()
    %cst_586 = arith.constant dense<0.000000e+00> : vector<1x8x8xf32>
    %911 = tpu.matmul %908, %909, %cst_586 {dimension_numbers = #tpu.dot_dimension_numbers<[2], [2], [1], [1], [0, 0, 0, 1, 1, 1], [0], [0]>} : vector<1x8x8xbf16>, vector<1x8x8xbf16>, vector<1x8x8xf32> -> vector<1x8x8xf32>
    "tpu.trace_stop"() : () -> ()
    %912 = vector.broadcast %277 : f32 to vector<1x8x8xf32>
    %913 = vector.broadcast %66 : f32 to vector<1x8x8xf32>
    %914 = arith.mulf %911, %913 : vector<1x8x8xf32>
    %915 = vector.broadcast %130 : f32 to vector<1x8x8xf32>
    %916 = arith.mulf %2, %915 : vector<1x8x8xf32>
    %917 = arith.addf %914, %916 : vector<1x8x8xf32>
    %918 = vector.broadcast %194 : f32 to vector<1x8x8xf32>
    %919 = arith.addf %917, %918 : vector<1x8x8xf32>
    %cst_587 = arith.constant 0.000000e+00 : f32
    %920 = vector.broadcast %cst_587 : f32 to vector<1x8x8xf32>
    %921 = arith.maximumf %919, %920 : vector<1x8x8xf32>
    %922 = vector.broadcast %258 : f32 to vector<1x8x8xf32>
    %923 = arith.mulf %921, %922 : vector<1x8x8xf32>
    %924 = arith.addf %912, %923 : vector<1x8x8xf32>
    %925 = vector.broadcast %67 : f32 to vector<1x8x8xf32>
    %926 = arith.mulf %911, %925 : vector<1x8x8xf32>
    %927 = vector.broadcast %131 : f32 to vector<1x8x8xf32>
    %928 = arith.mulf %2, %927 : vector<1x8x8xf32>
    %929 = arith.addf %926, %928 : vector<1x8x8xf32>
    %930 = vector.broadcast %195 : f32 to vector<1x8x8xf32>
    %931 = arith.addf %929, %930 : vector<1x8x8xf32>
    %cst_588 = arith.constant 0.000000e+00 : f32
    %932 = vector.broadcast %cst_588 : f32 to vector<1x8x8xf32>
    %933 = arith.maximumf %931, %932 : vector<1x8x8xf32>
    %934 = vector.broadcast %259 : f32 to vector<1x8x8xf32>
    %935 = arith.mulf %933, %934 : vector<1x8x8xf32>
    %936 = arith.addf %924, %935 : vector<1x8x8xf32>
    %937 = vector.broadcast %68 : f32 to vector<1x8x8xf32>
    %938 = arith.mulf %911, %937 : vector<1x8x8xf32>
    %939 = vector.broadcast %132 : f32 to vector<1x8x8xf32>
    %940 = arith.mulf %2, %939 : vector<1x8x8xf32>
    %941 = arith.addf %938, %940 : vector<1x8x8xf32>
    %942 = vector.broadcast %196 : f32 to vector<1x8x8xf32>
    %943 = arith.addf %941, %942 : vector<1x8x8xf32>
    %cst_589 = arith.constant 0.000000e+00 : f32
    %944 = vector.broadcast %cst_589 : f32 to vector<1x8x8xf32>
    %945 = arith.maximumf %943, %944 : vector<1x8x8xf32>
    %946 = vector.broadcast %260 : f32 to vector<1x8x8xf32>
    %947 = arith.mulf %945, %946 : vector<1x8x8xf32>
    %948 = arith.addf %936, %947 : vector<1x8x8xf32>
    %949 = vector.broadcast %69 : f32 to vector<1x8x8xf32>
    %950 = arith.mulf %911, %949 : vector<1x8x8xf32>
    %951 = vector.broadcast %133 : f32 to vector<1x8x8xf32>
    %952 = arith.mulf %2, %951 : vector<1x8x8xf32>
    %953 = arith.addf %950, %952 : vector<1x8x8xf32>
    %954 = vector.broadcast %197 : f32 to vector<1x8x8xf32>
    %955 = arith.addf %953, %954 : vector<1x8x8xf32>
    %cst_590 = arith.constant 0.000000e+00 : f32
    %956 = vector.broadcast %cst_590 : f32 to vector<1x8x8xf32>
    %957 = arith.maximumf %955, %956 : vector<1x8x8xf32>
    %958 = vector.broadcast %261 : f32 to vector<1x8x8xf32>
    %959 = arith.mulf %957, %958 : vector<1x8x8xf32>
    %960 = arith.addf %948, %959 : vector<1x8x8xf32>
    %961 = vector.broadcast %70 : f32 to vector<1x8x8xf32>
    %962 = arith.mulf %911, %961 : vector<1x8x8xf32>
    %963 = vector.broadcast %134 : f32 to vector<1x8x8xf32>
    %964 = arith.mulf %2, %963 : vector<1x8x8xf32>
    %965 = arith.addf %962, %964 : vector<1x8x8xf32>
    %966 = vector.broadcast %198 : f32 to vector<1x8x8xf32>
    %967 = arith.addf %965, %966 : vector<1x8x8xf32>
    %cst_591 = arith.constant 0.000000e+00 : f32
    %968 = vector.broadcast %cst_591 : f32 to vector<1x8x8xf32>
    %969 = arith.maximumf %967, %968 : vector<1x8x8xf32>
    %970 = vector.broadcast %262 : f32 to vector<1x8x8xf32>
    %971 = arith.mulf %969, %970 : vector<1x8x8xf32>
    %972 = arith.addf %960, %971 : vector<1x8x8xf32>
    %973 = vector.broadcast %71 : f32 to vector<1x8x8xf32>
    %974 = arith.mulf %911, %973 : vector<1x8x8xf32>
    %975 = vector.broadcast %135 : f32 to vector<1x8x8xf32>
    %976 = arith.mulf %2, %975 : vector<1x8x8xf32>
    %977 = arith.addf %974, %976 : vector<1x8x8xf32>
    %978 = vector.broadcast %199 : f32 to vector<1x8x8xf32>
    %979 = arith.addf %977, %978 : vector<1x8x8xf32>
    %cst_592 = arith.constant 0.000000e+00 : f32
    %980 = vector.broadcast %cst_592 : f32 to vector<1x8x8xf32>
    %981 = arith.maximumf %979, %980 : vector<1x8x8xf32>
    %982 = vector.broadcast %263 : f32 to vector<1x8x8xf32>
    %983 = arith.mulf %981, %982 : vector<1x8x8xf32>
    %984 = arith.addf %972, %983 : vector<1x8x8xf32>
    %985 = vector.broadcast %72 : f32 to vector<1x8x8xf32>
    %986 = arith.mulf %911, %985 : vector<1x8x8xf32>
    %987 = vector.broadcast %136 : f32 to vector<1x8x8xf32>
    %988 = arith.mulf %2, %987 : vector<1x8x8xf32>
    %989 = arith.addf %986, %988 : vector<1x8x8xf32>
    %990 = vector.broadcast %200 : f32 to vector<1x8x8xf32>
    %991 = arith.addf %989, %990 : vector<1x8x8xf32>
    %cst_593 = arith.constant 0.000000e+00 : f32
    %992 = vector.broadcast %cst_593 : f32 to vector<1x8x8xf32>
    %993 = arith.maximumf %991, %992 : vector<1x8x8xf32>
    %994 = vector.broadcast %264 : f32 to vector<1x8x8xf32>
    %995 = arith.mulf %993, %994 : vector<1x8x8xf32>
    %996 = arith.addf %984, %995 : vector<1x8x8xf32>
    %997 = vector.broadcast %73 : f32 to vector<1x8x8xf32>
    %998 = arith.mulf %911, %997 : vector<1x8x8xf32>
    %999 = vector.broadcast %137 : f32 to vector<1x8x8xf32>
    %1000 = arith.mulf %2, %999 : vector<1x8x8xf32>
    %1001 = arith.addf %998, %1000 : vector<1x8x8xf32>
    %1002 = vector.broadcast %201 : f32 to vector<1x8x8xf32>
    %1003 = arith.addf %1001, %1002 : vector<1x8x8xf32>
    %cst_594 = arith.constant 0.000000e+00 : f32
    %1004 = vector.broadcast %cst_594 : f32 to vector<1x8x8xf32>
    %1005 = arith.maximumf %1003, %1004 : vector<1x8x8xf32>
    %1006 = vector.broadcast %265 : f32 to vector<1x8x8xf32>
    %1007 = arith.mulf %1005, %1006 : vector<1x8x8xf32>
    %1008 = arith.addf %996, %1007 : vector<1x8x8xf32>
    %1009 = vector.broadcast %74 : f32 to vector<1x8x8xf32>
    %1010 = arith.mulf %911, %1009 : vector<1x8x8xf32>
    %1011 = vector.broadcast %138 : f32 to vector<1x8x8xf32>
    %1012 = arith.mulf %2, %1011 : vector<1x8x8xf32>
    %1013 = arith.addf %1010, %1012 : vector<1x8x8xf32>
    %1014 = vector.broadcast %202 : f32 to vector<1x8x8xf32>
    %1015 = arith.addf %1013, %1014 : vector<1x8x8xf32>
    %cst_595 = arith.constant 0.000000e+00 : f32
    %1016 = vector.broadcast %cst_595 : f32 to vector<1x8x8xf32>
    %1017 = arith.maximumf %1015, %1016 : vector<1x8x8xf32>
    %1018 = vector.broadcast %266 : f32 to vector<1x8x8xf32>
    %1019 = arith.mulf %1017, %1018 : vector<1x8x8xf32>
    %1020 = arith.addf %1008, %1019 : vector<1x8x8xf32>
    %1021 = vector.broadcast %75 : f32 to vector<1x8x8xf32>
    %1022 = arith.mulf %911, %1021 : vector<1x8x8xf32>
    %1023 = vector.broadcast %139 : f32 to vector<1x8x8xf32>
    %1024 = arith.mulf %2, %1023 : vector<1x8x8xf32>
    %1025 = arith.addf %1022, %1024 : vector<1x8x8xf32>
    %1026 = vector.broadcast %203 : f32 to vector<1x8x8xf32>
    %1027 = arith.addf %1025, %1026 : vector<1x8x8xf32>
    %cst_596 = arith.constant 0.000000e+00 : f32
    %1028 = vector.broadcast %cst_596 : f32 to vector<1x8x8xf32>
    %1029 = arith.maximumf %1027, %1028 : vector<1x8x8xf32>
    %1030 = vector.broadcast %267 : f32 to vector<1x8x8xf32>
    %1031 = arith.mulf %1029, %1030 : vector<1x8x8xf32>
    %1032 = arith.addf %1020, %1031 : vector<1x8x8xf32>
    %1033 = vector.broadcast %76 : f32 to vector<1x8x8xf32>
    %1034 = arith.mulf %911, %1033 : vector<1x8x8xf32>
    %1035 = vector.broadcast %140 : f32 to vector<1x8x8xf32>
    %1036 = arith.mulf %2, %1035 : vector<1x8x8xf32>
    %1037 = arith.addf %1034, %1036 : vector<1x8x8xf32>
    %1038 = vector.broadcast %204 : f32 to vector<1x8x8xf32>
    %1039 = arith.addf %1037, %1038 : vector<1x8x8xf32>
    %cst_597 = arith.constant 0.000000e+00 : f32
    %1040 = vector.broadcast %cst_597 : f32 to vector<1x8x8xf32>
    %1041 = arith.maximumf %1039, %1040 : vector<1x8x8xf32>
    %1042 = vector.broadcast %268 : f32 to vector<1x8x8xf32>
    %1043 = arith.mulf %1041, %1042 : vector<1x8x8xf32>
    %1044 = arith.addf %1032, %1043 : vector<1x8x8xf32>
    %1045 = vector.broadcast %77 : f32 to vector<1x8x8xf32>
    %1046 = arith.mulf %911, %1045 : vector<1x8x8xf32>
    %1047 = vector.broadcast %141 : f32 to vector<1x8x8xf32>
    %1048 = arith.mulf %2, %1047 : vector<1x8x8xf32>
    %1049 = arith.addf %1046, %1048 : vector<1x8x8xf32>
    %1050 = vector.broadcast %205 : f32 to vector<1x8x8xf32>
    %1051 = arith.addf %1049, %1050 : vector<1x8x8xf32>
    %cst_598 = arith.constant 0.000000e+00 : f32
    %1052 = vector.broadcast %cst_598 : f32 to vector<1x8x8xf32>
    %1053 = arith.maximumf %1051, %1052 : vector<1x8x8xf32>
    %1054 = vector.broadcast %269 : f32 to vector<1x8x8xf32>
    %1055 = arith.mulf %1053, %1054 : vector<1x8x8xf32>
    %1056 = arith.addf %1044, %1055 : vector<1x8x8xf32>
    %1057 = vector.broadcast %78 : f32 to vector<1x8x8xf32>
    %1058 = arith.mulf %911, %1057 : vector<1x8x8xf32>
    %1059 = vector.broadcast %142 : f32 to vector<1x8x8xf32>
    %1060 = arith.mulf %2, %1059 : vector<1x8x8xf32>
    %1061 = arith.addf %1058, %1060 : vector<1x8x8xf32>
    %1062 = vector.broadcast %206 : f32 to vector<1x8x8xf32>
    %1063 = arith.addf %1061, %1062 : vector<1x8x8xf32>
    %cst_599 = arith.constant 0.000000e+00 : f32
    %1064 = vector.broadcast %cst_599 : f32 to vector<1x8x8xf32>
    %1065 = arith.maximumf %1063, %1064 : vector<1x8x8xf32>
    %1066 = vector.broadcast %270 : f32 to vector<1x8x8xf32>
    %1067 = arith.mulf %1065, %1066 : vector<1x8x8xf32>
    %1068 = arith.addf %1056, %1067 : vector<1x8x8xf32>
    %1069 = vector.broadcast %79 : f32 to vector<1x8x8xf32>
    %1070 = arith.mulf %911, %1069 : vector<1x8x8xf32>
    %1071 = vector.broadcast %143 : f32 to vector<1x8x8xf32>
    %1072 = arith.mulf %2, %1071 : vector<1x8x8xf32>
    %1073 = arith.addf %1070, %1072 : vector<1x8x8xf32>
    %1074 = vector.broadcast %207 : f32 to vector<1x8x8xf32>
    %1075 = arith.addf %1073, %1074 : vector<1x8x8xf32>
    %cst_600 = arith.constant 0.000000e+00 : f32
    %1076 = vector.broadcast %cst_600 : f32 to vector<1x8x8xf32>
    %1077 = arith.maximumf %1075, %1076 : vector<1x8x8xf32>
    %1078 = vector.broadcast %271 : f32 to vector<1x8x8xf32>
    %1079 = arith.mulf %1077, %1078 : vector<1x8x8xf32>
    %1080 = arith.addf %1068, %1079 : vector<1x8x8xf32>
    %1081 = vector.broadcast %80 : f32 to vector<1x8x8xf32>
    %1082 = arith.mulf %911, %1081 : vector<1x8x8xf32>
    %1083 = vector.broadcast %144 : f32 to vector<1x8x8xf32>
    %1084 = arith.mulf %2, %1083 : vector<1x8x8xf32>
    %1085 = arith.addf %1082, %1084 : vector<1x8x8xf32>
    %1086 = vector.broadcast %208 : f32 to vector<1x8x8xf32>
    %1087 = arith.addf %1085, %1086 : vector<1x8x8xf32>
    %cst_601 = arith.constant 0.000000e+00 : f32
    %1088 = vector.broadcast %cst_601 : f32 to vector<1x8x8xf32>
    %1089 = arith.maximumf %1087, %1088 : vector<1x8x8xf32>
    %1090 = vector.broadcast %272 : f32 to vector<1x8x8xf32>
    %1091 = arith.mulf %1089, %1090 : vector<1x8x8xf32>
    %1092 = arith.addf %1080, %1091 : vector<1x8x8xf32>
    %1093 = vector.broadcast %81 : f32 to vector<1x8x8xf32>
    %1094 = arith.mulf %911, %1093 : vector<1x8x8xf32>
    %1095 = vector.broadcast %145 : f32 to vector<1x8x8xf32>
    %1096 = arith.mulf %2, %1095 : vector<1x8x8xf32>
    %1097 = arith.addf %1094, %1096 : vector<1x8x8xf32>
    %1098 = vector.broadcast %209 : f32 to vector<1x8x8xf32>
    %1099 = arith.addf %1097, %1098 : vector<1x8x8xf32>
    %cst_602 = arith.constant 0.000000e+00 : f32
    %1100 = vector.broadcast %cst_602 : f32 to vector<1x8x8xf32>
    %1101 = arith.maximumf %1099, %1100 : vector<1x8x8xf32>
    %1102 = vector.broadcast %273 : f32 to vector<1x8x8xf32>
    %1103 = arith.mulf %1101, %1102 : vector<1x8x8xf32>
    %1104 = arith.addf %1092, %1103 : vector<1x8x8xf32>
    %cst_603 = arith.constant dense<0xFF800000> : vector<1x8xf32>
    %1105 = vector.multi_reduction <maximumf>, %1104, %cst_603 [2] : vector<1x8x8xf32> to vector<1x8xf32>
    %1106 = vector.shape_cast %1105 : vector<1x8xf32> to vector<1x8x1xf32>
    %1107 = vector.broadcast %1106 : vector<1x8x1xf32> to vector<1x8x8xf32>
    %1108 = arith.subf %1104, %1107 : vector<1x8x8xf32>
    %1109 = math.exp %1108 : vector<1x8x8xf32>
    %cst_604 = arith.constant dense<0.000000e+00> : vector<1x8xf32>
    %1110 = vector.multi_reduction <add>, %1109, %cst_604 [2] : vector<1x8x8xf32> to vector<1x8xf32>
    %1111 = vector.shape_cast %1110 : vector<1x8xf32> to vector<1x8x1xf32>
    %1112 = tpu.reciprocal %1111 {approx = true} : vector<1x8x1xf32> -> vector<1x8x1xf32>
    %1113 = vector.broadcast %1112 : vector<1x8x1xf32> to vector<1x8x8xf32>
    %1114 = arith.mulf %1109, %1113 : vector<1x8x8xf32>
    %1115 = arith.truncf %1114 : vector<1x8x8xf32> to vector<1x8x8xbf16>
    "tpu.trace_start"() <{level = 10 : i32, message = "bnm,bmd->bnd"}> : () -> ()
    %cst_605 = arith.constant dense<0.000000e+00> : vector<1x8x8xf32>
    %1116 = tpu.matmul %1115, %910, %cst_605 {dimension_numbers = #tpu.dot_dimension_numbers<[2], [1], [1], [2], [0, 0, 0, 1, 1, 2], [0], [0]>} : vector<1x8x8xbf16>, vector<1x8x8xbf16>, vector<1x8x8xf32> -> vector<1x8x8xf32>
    "tpu.trace_stop"() : () -> ()
    %c0_606 = arith.constant 0 : index
    %c0_607 = arith.constant 0 : index
    %c24 = arith.constant 24 : index
    %1117 = vector.load %arg22[%c0_606, %c0_607, %c24] : memref<1x8x32xf32, #tpu.memory_space<vmem>>, vector<1x8x8xf32>
    tpu.vector_store %arg22[%c0_606, %c0_607, %c24], %1116 {strides = array<i32>} : memref<1x8x32xf32, #tpu.memory_space<vmem>>, vector<1x8x8xf32>,
    %c0_608 = arith.constant 0 : index
    %c0_609 = arith.constant 0 : index
    %c0_610 = arith.constant 0 : index
    %1118 = vector.load %arg22[%c0_608, %c0_609, %c0_610] : memref<1x8x32xf32, #tpu.memory_space<vmem>>, vector<1x8x32xf32>
    %1119 = vector.shape_cast %1118 : vector<1x8x32xf32> to vector<8x32xf32>
    %1120 = arith.truncf %1119 : vector<8x32xf32> to vector<8x32xbf16>
    %c0_611 = arith.constant 0 : index
    %c0_612 = arith.constant 0 : index
    %1121 = vector.load %arg11[%c0_611, %c0_612] : memref<32x32xbf16, #tpu.memory_space<vmem>>, vector<32x32xbf16>
    %cst_613 = arith.constant dense<0.000000e+00> : vector<8x32xf32>
    %1122 = tpu.matmul %1120, %1121, %cst_613 {dimension_numbers = #tpu.dot_dimension_numbers<[1], [0], [0], [1], [0, 0, 1, 1], [], []>} : vector<8x32xbf16>, vector<32x32xbf16>, vector<8x32xf32> -> vector<8x32xf32>
    %c0_614 = arith.constant 0 : index
    %c0_615 = arith.constant 0 : index
    %1123 = vector.load %arg12[%c0_614, %c0_615] : memref<1x32xf32, #tpu.memory_space<vmem>>, vector<1x32xf32>
    %1124 = vector.broadcast %1123 : vector<1x32xf32> to vector<8x32xf32>
    %1125 = arith.addf %1122, %1124 : vector<8x32xf32>
    %1126 = vector.shape_cast %1125 : vector<8x32xf32> to vector<1x8x32xf32>
    %1127 = arith.addf %0, %1126 : vector<1x8x32xf32>
    %c0_616 = arith.constant 0 : index
    %c0_617 = arith.constant 0 : index
    %c0_618 = arith.constant 0 : index
    %1128 = vector.load %arg13[%c0_616, %c0_617, %c0_618] : memref<1x1x32xf32, #tpu.memory_space<vmem>>, vector<1x1x32xf32>
    %c0_619 = arith.constant 0 : index
    %c0_620 = arith.constant 0 : index
    %c0_621 = arith.constant 0 : index
    %1129 = vector.load %arg14[%c0_619, %c0_620, %c0_621] : memref<1x1x32xf32, #tpu.memory_space<vmem>>, vector<1x1x32xf32>
    %cst_622 = arith.constant dense<0.000000e+00> : vector<1x32xf32>
    %1130 = vector.multi_reduction <add>, %1127, %cst_622 [1] : vector<1x8x32xf32> to vector<1x32xf32>
    %1131 = vector.shape_cast %1130 : vector<1x32xf32> to vector<1x1x32xf32>
    %cst_623 = arith.constant 8.000000e+00 : f32
    %1132 = vector.broadcast %cst_623 : f32 to vector<1x1x32xf32>
    %1133 = arith.divf %1131, %1132 : vector<1x1x32xf32>
    %1134 = vector.broadcast %1133 : vector<1x1x32xf32> to vector<1x8x32xf32>
    %1135 = arith.subf %1127, %1134 : vector<1x8x32xf32>
    %1136 = arith.mulf %1135, %1135 : vector<1x8x32xf32>
    %cst_624 = arith.constant dense<0.000000e+00> : vector<1x32xf32>
    %1137 = vector.multi_reduction <add>, %1136, %cst_624 [1] : vector<1x8x32xf32> to vector<1x32xf32>
    %1138 = vector.shape_cast %1137 : vector<1x32xf32> to vector<1x1x32xf32>
    %cst_625 = arith.constant 8.000000e+00 : f32
    %1139 = vector.broadcast %cst_625 : f32 to vector<1x1x32xf32>
    %1140 = arith.divf %1138, %1139 : vector<1x1x32xf32>
    %cst_626 = arith.constant 9.99999974E-6 : f32
    %1141 = vector.broadcast %cst_626 : f32 to vector<1x1x32xf32>
    %1142 = arith.addf %1140, %1141 : vector<1x1x32xf32>
    %1143 = math.rsqrt %1142 : vector<1x1x32xf32>
    %1144 = arith.mulf %1143, %1128 : vector<1x1x32xf32>
    %1145 = vector.broadcast %1144 : vector<1x1x32xf32> to vector<1x8x32xf32>
    %1146 = arith.mulf %1135, %1145 : vector<1x8x32xf32>
    %1147 = vector.broadcast %1129 : vector<1x1x32xf32> to vector<1x8x32xf32>
    %1148 = arith.addf %1146, %1147 : vector<1x8x32xf32>
    %1149 = vector.shape_cast %1148 : vector<1x8x32xf32> to vector<8x32xf32>
    %1150 = arith.truncf %1149 : vector<8x32xf32> to vector<8x32xbf16>
    %c0_627 = arith.constant 0 : index
    %c0_628 = arith.constant 0 : index
    %1151 = vector.load %arg15[%c0_627, %c0_628] : memref<32x64xbf16, #tpu.memory_space<vmem>>, vector<32x64xbf16>
    %cst_629 = arith.constant dense<0.000000e+00> : vector<8x64xf32>
    %1152 = tpu.matmul %1150, %1151, %cst_629 {dimension_numbers = #tpu.dot_dimension_numbers<[1], [0], [0], [1], [0, 0, 1, 1], [], []>} : vector<8x32xbf16>, vector<32x64xbf16>, vector<8x64xf32> -> vector<8x64xf32>
    %c0_630 = arith.constant 0 : index
    %c0_631 = arith.constant 0 : index
    %1153 = vector.load %arg16[%c0_630, %c0_631] : memref<1x64xf32, #tpu.memory_space<vmem>>, vector<1x64xf32>
    %1154 = vector.broadcast %1153 : vector<1x64xf32> to vector<8x64xf32>
    %1155 = arith.addf %1152, %1154 : vector<8x64xf32>
    %cst_632 = arith.constant 0.000000e+00 : f32
    %1156 = vector.broadcast %cst_632 : f32 to vector<8x64xf32>
    %1157 = arith.maximumf %1155, %1156 : vector<8x64xf32>
    %1158 = arith.truncf %1157 : vector<8x64xf32> to vector<8x64xbf16>
    %c0_633 = arith.constant 0 : index
    %c0_634 = arith.constant 0 : index
    %1159 = vector.load %arg17[%c0_633, %c0_634] : memref<64x32xbf16, #tpu.memory_space<vmem>>, vector<64x32xbf16>
    %cst_635 = arith.constant dense<0.000000e+00> : vector<8x32xf32>
    %1160 = tpu.matmul %1158, %1159, %cst_635 {dimension_numbers = #tpu.dot_dimension_numbers<[1], [0], [0], [1], [0, 0, 1, 1], [], []>} : vector<8x64xbf16>, vector<64x32xbf16>, vector<8x32xf32> -> vector<8x32xf32>
    %c0_636 = arith.constant 0 : index
    %c0_637 = arith.constant 0 : index
    %1161 = vector.load %arg18[%c0_636, %c0_637] : memref<1x32xf32, #tpu.memory_space<vmem>>, vector<1x32xf32>
    %1162 = vector.broadcast %1161 : vector<1x32xf32> to vector<8x32xf32>
    %1163 = arith.addf %1160, %1162 : vector<8x32xf32>
    %1164 = vector.shape_cast %1163 : vector<8x32xf32> to vector<1x8x32xf32>
    %1165 = arith.addf %1148, %1164 : vector<1x8x32xf32>
    %c0_638 = arith.constant 0 : index
    %c0_639 = arith.constant 0 : index
    %c0_640 = arith.constant 0 : index
    %1166 = vector.load %arg19[%c0_638, %c0_639, %c0_640] : memref<1x1x32xf32, #tpu.memory_space<vmem>>, vector<1x1x32xf32>
    %c0_641 = arith.constant 0 : index
    %c0_642 = arith.constant 0 : index
    %c0_643 = arith.constant 0 : index
    %1167 = vector.load %arg20[%c0_641, %c0_642, %c0_643] : memref<1x1x32xf32, #tpu.memory_space<vmem>>, vector<1x1x32xf32>
    %cst_644 = arith.constant dense<0.000000e+00> : vector<1x32xf32>
    %1168 = vector.multi_reduction <add>, %1165, %cst_644 [1] : vector<1x8x32xf32> to vector<1x32xf32>
    %1169 = vector.shape_cast %1168 : vector<1x32xf32> to vector<1x1x32xf32>
    %cst_645 = arith.constant 8.000000e+00 : f32
    %1170 = vector.broadcast %cst_645 : f32 to vector<1x1x32xf32>
    %1171 = arith.divf %1169, %1170 : vector<1x1x32xf32>
    %1172 = vector.broadcast %1171 : vector<1x1x32xf32> to vector<1x8x32xf32>
    %1173 = arith.subf %1165, %1172 : vector<1x8x32xf32>
    %1174 = arith.mulf %1173, %1173 : vector<1x8x32xf32>
    %cst_646 = arith.constant dense<0.000000e+00> : vector<1x32xf32>
    %1175 = vector.multi_reduction <add>, %1174, %cst_646 [1] : vector<1x8x32xf32> to vector<1x32xf32>
    %1176 = vector.shape_cast %1175 : vector<1x32xf32> to vector<1x1x32xf32>
    %cst_647 = arith.constant 8.000000e+00 : f32
    %1177 = vector.broadcast %cst_647 : f32 to vector<1x1x32xf32>
    %1178 = arith.divf %1176, %1177 : vector<1x1x32xf32>
    %cst_648 = arith.constant 9.99999974E-6 : f32
    %1179 = vector.broadcast %cst_648 : f32 to vector<1x1x32xf32>
    %1180 = arith.addf %1178, %1179 : vector<1x1x32xf32>
    %1181 = math.rsqrt %1180 : vector<1x1x32xf32>
    %1182 = arith.mulf %1181, %1166 : vector<1x1x32xf32>
    %1183 = vector.broadcast %1182 : vector<1x1x32xf32> to vector<1x8x32xf32>
    %1184 = arith.mulf %1173, %1183 : vector<1x8x32xf32>
    %1185 = vector.broadcast %1167 : vector<1x1x32xf32> to vector<1x8x32xf32>
    %1186 = arith.addf %1184, %1185 : vector<1x8x32xf32>
    %c0_649 = arith.constant 0 : index
    %c0_650 = arith.constant 0 : index
    %c0_651 = arith.constant 0 : index
    %1187 = vector.load %arg21[%c0_649, %c0_650, %c0_651] : memref<1x8x32xf32, #tpu.memory_space<vmem>>, vector<1x8x32xf32>
    tpu.vector_store %arg21[%c0_649, %c0_650, %c0_651], %1186 {strides = array<i32>} : memref<1x8x32xf32, #tpu.memory_space<vmem>>, vector<1x8x32xf32>,
    return
  }
  func.func @transform_0(%arg0: i32) -> (i32, i32, i32) {
    %c0_i32 = arith.constant 0 : i32
    %c0_i32_0 = arith.constant 0 : i32
    %c0_i32_1 = arith.constant 0 : i32
    return %arg0, %c0_i32, %c0_i32_0 : i32, i32, i32
  }
  func.func @transform_1(%arg0: i32) -> (i32, i32, i32) {
    %c0_i32 = arith.constant 0 : i32
    %c0_i32_0 = arith.constant 0 : i32
    %c0_i32_1 = arith.constant 0 : i32
    return %arg0, %c0_i32, %c0_i32_0 : i32, i32, i32
  }
  func.func @transform_2(%arg0: i32) -> (i32, i32, i32) {
    %c0_i32 = arith.constant 0 : i32
    %c0_i32_0 = arith.constant 0 : i32
    %c0_i32_1 = arith.constant 0 : i32
    return %arg0, %c0_i32, %c0_i32_0 : i32, i32, i32
  }
  func.func @transform_3(%arg0: i32) -> (i32, i32) {
    %c0_i32 = arith.constant 0 : i32
    %c0_i32_0 = arith.constant 0 : i32
    %c0_i32_1 = arith.constant 0 : i32
    return %c0_i32, %c0_i32_0 : i32, i32
  }
  func.func @transform_4(%arg0: i32) -> (i32, i32) {
    %c0_i32 = arith.constant 0 : i32
    %c0_i32_0 = arith.constant 0 : i32
    %c0_i32_1 = arith.constant 0 : i32
    return %c0_i32, %c0_i32_0 : i32, i32
  }
  func.func @transform_5(%arg0: i32) -> (i32, i32) {
    %c0_i32 = arith.constant 0 : i32
    %c0_i32_0 = arith.constant 0 : i32
    %c0_i32_1 = arith.constant 0 : i32
    return %c0_i32, %c0_i32_0 : i32, i32
  }
  func.func @transform_6(%arg0: i32) -> (i32, i32) {
    %c0_i32 = arith.constant 0 : i32
    %c0_i32_0 = arith.constant 0 : i32
    %c0_i32_1 = arith.constant 0 : i32
    return %c0_i32, %c0_i32_0 : i32, i32
  }
  func.func @transform_7(%arg0: i32) -> (i32, i32) {
    %c0_i32 = arith.constant 0 : i32
    %c0_i32_0 = arith.constant 0 : i32
    %c0_i32_1 = arith.constant 0 : i32
    return %c0_i32, %c0_i32_0 : i32, i32
  }
  func.func @transform_8(%arg0: i32) -> (i32, i32) {
    %c0_i32 = arith.constant 0 : i32
    %c0_i32_0 = arith.constant 0 : i32
    %c0_i32_1 = arith.constant 0 : i32
    return %c0_i32, %c0_i32_0 : i32, i32
  }
  func.func @transform_9(%arg0: i32) -> (i32, i32) {
    %c0_i32 = arith.constant 0 : i32
    %c0_i32_0 = arith.constant 0 : i32
    %c0_i32_1 = arith.constant 0 : i32
    return %c0_i32, %c0_i32_0 : i32, i32
  }
  func.func @transform_10(%arg0: i32) -> (i32, i32) {
    %c0_i32 = arith.constant 0 : i32
    %c0_i32_0 = arith.constant 0 : i32
    %c0_i32_1 = arith.constant 0 : i32
    return %c0_i32, %c0_i32_0 : i32, i32
  }
  func.func @transform_11(%arg0: i32) -> (i32, i32) {
    %c0_i32 = arith.constant 0 : i32
    %c0_i32_0 = arith.constant 0 : i32
    %c0_i32_1 = arith.constant 0 : i32
    return %c0_i32, %c0_i32_0 : i32, i32
  }
  func.func @transform_12(%arg0: i32) -> (i32, i32, i32) {
    %c0_i32 = arith.constant 0 : i32
    %c0_i32_0 = arith.constant 0 : i32
    %c0_i32_1 = arith.constant 0 : i32
    %c0_i32_2 = arith.constant 0 : i32
    return %c0_i32, %c0_i32_0, %c0_i32_1 : i32, i32, i32
  }
  func.func @transform_13(%arg0: i32) -> (i32, i32, i32) {
    %c0_i32 = arith.constant 0 : i32
    %c0_i32_0 = arith.constant 0 : i32
    %c0_i32_1 = arith.constant 0 : i32
    %c0_i32_2 = arith.constant 0 : i32
    return %c0_i32, %c0_i32_0, %c0_i32_1 : i32, i32, i32
  }
  func.func @transform_14(%arg0: i32) -> (i32, i32) {
    %c0_i32 = arith.constant 0 : i32
    %c0_i32_0 = arith.constant 0 : i32
    %c0_i32_1 = arith.constant 0 : i32
    return %c0_i32, %c0_i32_0 : i32, i32
  }
  func.func @transform_15(%arg0: i32) -> (i32, i32) {
    %c0_i32 = arith.constant 0 : i32
    %c0_i32_0 = arith.constant 0 : i32
    %c0_i32_1 = arith.constant 0 : i32
    return %c0_i32, %c0_i32_0 : i32, i32
  }
  func.func @transform_16(%arg0: i32) -> (i32, i32) {
    %c0_i32 = arith.constant 0 : i32
    %c0_i32_0 = arith.constant 0 : i32
    %c0_i32_1 = arith.constant 0 : i32
    return %c0_i32, %c0_i32_0 : i32, i32
  }
  func.func @transform_17(%arg0: i32) -> (i32, i32) {
    %c0_i32 = arith.constant 0 : i32
    %c0_i32_0 = arith.constant 0 : i32
    %c0_i32_1 = arith.constant 0 : i32
    return %c0_i32, %c0_i32_0 : i32, i32
  }
  func.func @transform_18(%arg0: i32) -> (i32, i32, i32) {
    %c0_i32 = arith.constant 0 : i32
    %c0_i32_0 = arith.constant 0 : i32
    %c0_i32_1 = arith.constant 0 : i32
    %c0_i32_2 = arith.constant 0 : i32
    return %c0_i32, %c0_i32_0, %c0_i32_1 : i32, i32, i32
  }
  func.func @transform_19(%arg0: i32) -> (i32, i32, i32) {
    %c0_i32 = arith.constant 0 : i32
    %c0_i32_0 = arith.constant 0 : i32
    %c0_i32_1 = arith.constant 0 : i32
    %c0_i32_2 = arith.constant 0 : i32
    return %c0_i32, %c0_i32_0, %c0_i32_1 : i32, i32, i32
  }
  func.func @transform_20(%arg0: i32) -> (i32, i32, i32) {
    %c0_i32 = arith.constant 0 : i32
    %c0_i32_0 = arith.constant 0 : i32
    %c0_i32_1 = arith.constant 0 : i32
    return %arg0, %c0_i32, %c0_i32_0 : i32, i32, i32
  }
}

</mosaic_0001>

<llo_original>
// kernel: tpu_custom_call.1
$region0: #{tpu_custom_call.1}
  #allocation0 [shape = 'u32[]', space=smem, size = 0x4, offset = 0x4, fixed_abs, tag = 'smem constant byte address 0x4 - core index']
  #allocation1 [shape = 'u32[144,128]{1,0:T(1,128)}', space=vmem, size = 0x12000, scoped, tag = 'internal scratch']
  #allocation2 [shape = 'f32[1,8,32]{2,1,0:T(8,128)}', space=vmem, size = 0x1000, scoped, tag = 'scratch operand']
  %s0 = inlined_call_operand.vmem [shape: f32[2,8,32], index: 0, kind: input, shape index: {}]
  %s1 = inlined_call_operand.vmem [shape: f32[2,8,32], index: 1, kind: input, shape index: {}]
  %s2 = inlined_call_operand.vmem [shape: f32[2,8,8], index: 2, kind: input, shape index: {}]
  %s3 = inlined_call_operand.hbm [shape: bf16[32,32], index: 3, kind: input, shape index: {}]
  %s4 = inlined_call_operand.hbm [shape: bf16[32,64], index: 4, kind: input, shape index: {}]
  %s5 = inlined_call_operand.hbm [shape: f32[4,16], index: 5, kind: input, shape index: {}]
  %s6 = inlined_call_operand.hbm [shape: f32[4,16], index: 6, kind: input, shape index: {}]
  %s7 = inlined_call_operand.hbm [shape: f32[4,16], index: 7, kind: input, shape index: {}]
  %s8 = inlined_call_operand.hbm [shape: f32[4,16], index: 8, kind: input, shape index: {}]
  %s9 = inlined_call_operand.vmem [shape: f32[4,1], index: 9, kind: input, shape index: {}]
  %s10 = inlined_call_operand.vmem [shape: bf16[32,32], index: 10, kind: input, shape index: {}]
  %s11 = inlined_call_operand.hbm [shape: f32[1,32], index: 11, kind: input, shape index: {}]
  %s12 = inlined_call_operand.hbm [shape: f32[1,1,32], index: 12, kind: input, shape index: {}]
  %s13 = inlined_call_operand.hbm [shape: f32[1,1,32], index: 13, kind: input, shape index: {}]
  %s14 = inlined_call_operand.hbm [shape: bf16[32,64], index: 14, kind: input, shape index: {}]
  %s15 = inlined_call_operand.hbm [shape: f32[1,64], index: 15, kind: input, shape index: {}]
  %s16 = inlined_call_operand.vmem [shape: bf16[64,32], index: 16, kind: input, shape index: {}]
  %s17 = inlined_call_operand.vmem [shape: f32[1,32], index: 17, kind: input, shape index: {}]
  %s18 = inlined_call_operand.vmem [shape: f32[1,1,32], index: 18, kind: input, shape index: {}]
  %s19 = inlined_call_operand.vmem [shape: f32[1,1,32], index: 19, kind: input, shape index: {}]
  %s20 = inlined_call_operand.hbm [shape: f32[2,8,32], index: 20, kind: output, shape index: {}]
  %s21 = sld [smem:[#allocation0]]
  $region161: #{tpu_custom_call.1} parent=0
    _
  %s23 = ssub.s32 1, %s21
  %s24 = scalar_select 0, %s23, %s21
  $region1: #{tpu_custom_call.1} parent=0
    #allocation3 [shape = 'u8[8192]{0}', space=vmem, size = 0x2000, scoped, tag = 'input window, operand 3, single buffered']
    #allocation4 [shape = 's32[2]{0}', space=sflag, size = 0x8, scoped, tag = 'scoped memory for tpu_custom_call.1']
    #allocation5 [shape = 's32[2]{0}', space=sflag, size = 0x8, scoped, tag = 'scoped memory for tpu_custom_call.1']
    #allocation6 [shape = 's32[2]{0}', space=sflag, size = 0x8, scoped, tag = 'scoped memory for tpu_custom_call.1']
    #allocation7 [shape = 's32[2]{0}', space=sflag, size = 0x8, scoped, tag = 'scoped memory for tpu_custom_call.1']
    #allocation8 [shape = 'u8[8192]{0}', space=vmem, size = 0x2000, scoped, tag = 'input window, operand 4, single buffered']
    #allocation9 [shape = 's32[1]{0}', space=sflag, size = 0x4, scoped, tag = 'scoped memory for tpu_custom_call.1']
    #allocation10 [shape = 'u8[2048]{0}', space=smem, size = 0x800, scoped, tag = 'input window, operand 5, single buffered']
    #allocation11 [shape = 'u8[2048]{0}', space=smem, size = 0x800, scoped, tag = 'input window, operand 6, single buffered']
    #allocation12 [shape = 's32[1]{0}', space=sflag, size = 0x4, scoped, tag = 'scoped memory for tpu_custom_call.1']
    #allocation13 [shape = 'u8[2048]{0}', space=smem, size = 0x800, scoped, tag = 'input window, operand 7, single buffered']
    #allocation14 [shape = 'u8[2048]{0}', space=smem, size = 0x800, scoped, tag = 'input window, operand 8, single buffered']
    #allocation15 [shape = 's32[1]{0}', space=sflag, size = 0x4, scoped, tag = 'scoped memory for tpu_custom_call.1']
    #allocation16 [shape = 'u8[2048]{0}', space=smem, size = 0x800, scoped, tag = 'input window, operand 9, single buffered']
    #allocation17 [shape = 'u8[512]{0}', space=vmem, size = 0x400, scoped, tag = 'input window, operand 11, single buffered']
    #allocation18 [shape = 'u8[512]{0}', space=vmem, size = 0x400, scoped, tag = 'input window, operand 12, single buffered']
    #allocation19 [shape = 's32[1]{0}', space=sflag, size = 0x4, scoped, tag = 'scoped memory for tpu_custom_call.1']
    #allocation20 [shape = 'u8[512]{0}', space=vmem, size = 0x400, scoped, tag = 'input window, operand 13, single buffered']
    #allocation21 [shape = 'u8[8192]{0}', space=vmem, size = 0x2000, scoped, tag = 'input window, operand 14, single buffered']
    #allocation22 [shape = 's32[1]{0}', space=sflag, size = 0x4, scoped, tag = 'scoped memory for tpu_custom_call.1']
    #allocation23 [shape = 'u8[512]{0}', space=vmem, size = 0x400, scoped, tag = 'input window, operand 15, single buffered']
    #allocation24 [shape = 'u8[8192]{0}', space=vmem, size = 0x2000, scoped, tag = 'output window, operand 0']
    %25 = vsyncpa [#allocation4], 0
    %26 = vsyncpa [#allocation9], 0
    %27 = vsyncpa [#allocation6], 0
    %28 = vsyncpa [#allocation12], 0
    %29 = vsyncpa [#allocation15], 0
    %30 = vsyncpa [#allocation7], 0
    %31 = vsyncpa [#allocation19], 0
    %32 = vsyncpa [#allocation22], 0
    %33 = vsyncpa [#allocation5], 0
    %s34 = scalar_lea.sflag [#allocation5], 1
    %35 = vsyncpa %s34, 0
    loop: start=0, step=1, limit=4
    $region2: #{tpu_custom_call.1} parent=1 // loop_pre_header
      _
    $region3: #{tpu_custom_call.1} parent=1 // loop_header
      %s37 = sphi 0, %s41
      %p38 = scmp.ge.s32.totalorder %s37, 4
      %s47 = sphi 0, %s49
      %s50 = sphi 0, %s47
      %s51 = sphi 0, %s50
      %s67 = sphi 0, %s51
      %s73 = sphi 0, %s75
      %s76 = sphi 0, %s73
      %s77 = sphi 0, %s76
      %s93 = sphi 0, %s77
      %s99 = sphi 0, %s101
      %s102 = sphi 0, %s99
      %s103 = sphi 0, %s102
      %s119 = sphi 0, %s103
      %s123 = sphi 0, %s123
      %s125 = sphi 0, %s123
      %s126 = sphi 0, %s125
      %s140 = sphi 0, %s126
      %s144 = sphi 0, %s144
      %s146 = sphi 0, %s144
      %s147 = sphi 0, %s146
      %s161 = sphi 0, %s147
      %s165 = sphi 0, %s165
      %s167 = sphi 0, %s165
      %s168 = sphi 0, %s167
      %s182 = sphi 0, %s168
      %s186 = sphi 0, %s186
      %s188 = sphi 0, %s186
      %s189 = sphi 0, %s188
      %s203 = sphi 0, %s189
      %s207 = sphi 0, %s207
      %s209 = sphi 0, %s207
      %s210 = sphi 0, %s209
      %s224 = sphi 0, %s210
      %s228 = sphi 0, %s228
      %s230 = sphi 0, %s228
      %s231 = sphi 0, %s230
      %s245 = sphi 0, %s231
      %s249 = sphi 0, %s249
      %s251 = sphi 0, %s249
      %s252 = sphi 0, %s251
      %s266 = sphi 0, %s252
      %s270 = sphi 0, %s270
      %s272 = sphi 0, %s270
      %s273 = sphi 0, %s272
      %s287 = sphi 0, %s273
      %s291 = sphi 0, %s291
      %s293 = sphi 0, %s291
      %s294 = sphi 0, %s293
      %s308 = sphi 0, %s294
      %s312 = sphi 0, %s312
      %s314 = sphi 0, %s312
      %s315 = sphi 0, %s314
      %s329 = sphi 0, %s315
      %s333 = sphi 0, %s333
      %s335 = sphi 0, %s333
      %s336 = sphi 0, %s335
      %s350 = sphi 0, %s336
      %s354 = sphi 0, %s354
      %s356 = sphi 0, %s354
      %s357 = sphi 0, %s356
      %s371 = sphi 0, %s357
      %s375 = sphi 0, %s375
      %s377 = sphi 0, %s375
      %s378 = sphi 0, %s377
      %s392 = sphi 0, %s378
      %s396 = sphi 0, %s396
      %s398 = sphi 0, %s396
      %s399 = sphi 0, %s398
      %s413 = sphi 0, %s399
      %s417 = sphi 0, %s417
      %s419 = sphi 0, %s417
      %s420 = sphi 0, %s419
      %s434 = sphi 0, %s420
      %s438 = sphi 0, %s438
      %s440 = sphi 0, %s438
      %s441 = sphi 0, %s440
      %s455 = sphi 0, %s441
      %s459 = sphi 0, %s459
      %s461 = sphi 0, %s459
      %s462 = sphi 0, %s461
      %s476 = sphi 0, %s462
      %s482 = sphi 0, %s484
      %s485 = sphi 0, %s482
      %s486 = sphi 0, %s485
      %s502 = sphi 0, %s486
    $region4: #{tpu_custom_call.1} parent=1 // loop_header_branch
      %40 = sbr.rel (%p38) target = $region8
    $region5: #{tpu_custom_call.1} parent=1 // loop_body
      %s42 = ssub.s32 %s37, 1
      %s43 = ssub.s32 %s37, 2
      %s44 = sadd.s32 %s37, 1
      %s45 = ssub.s32 %s37, %s44
      %p46 = scmp.eq.s32.totalorder %s45, 0
      %s48 = sadd.s32 %s47, 1
      %s49 = scalar_select %p46, %s47, %s48
      %p52 = pneg %p46
      %p53 = scmp.eq.s32.totalorder %s37, 1
      %p54 = por %p52, %p53
      %p55 = scmp.ne.s32.totalorder %s47, %s50
      %p56 = scmp.eq.s32.totalorder %s37, 0
      %p57 = por %p55, %p56
      %p58 = scmp.ne.s32.totalorder %s47, %s50
      %p59 = scmp.eq.s32.totalorder %s42, 1
      %p60 = por %p58, %p59
      %p61 = scmp.ne.s32.totalorder %s50, %s51
      %p62 = scmp.eq.s32.totalorder %s42, 0
      %p63 = por %p61, %p62
      %p64 = scmp.ne.s32.totalorder %s50, %s51
      %p65 = scmp.eq.s32.totalorder %s43, 1
      %p66 = por %p64, %p65
      %p68 = scmp.ne.s32.totalorder %s51, %s67
      %p69 = scmp.eq.s32.totalorder %s43, 0
      %p70 = por %p68, %p69
      %s71 = ssub.s32 %s37, %s44
      %p72 = scmp.eq.s32.totalorder %s71, 0
      %s74 = sadd.s32 %s73, 1
      %s75 = scalar_select %p72, %s73, %s74
      %p78 = pneg %p72
      %p79 = scmp.eq.s32.totalorder %s37, 1
      %p80 = por %p78, %p79
      %p81 = scmp.ne.s32.totalorder %s73, %s76
      %p82 = scmp.eq.s32.totalorder %s37, 0
      %p83 = por %p81, %p82
      %p84 = scmp.ne.s32.totalorder %s73, %s76
      %p85 = scmp.eq.s32.totalorder %s42, 1
      %p86 = por %p84, %p85
      %p87 = scmp.ne.s32.totalorder %s76, %s77
      %p88 = scmp.eq.s32.totalorder %s42, 0
      %p89 = por %p87, %p88
      %p90 = scmp.ne.s32.totalorder %s76, %s77
      %p91 = scmp.eq.s32.totalorder %s43, 1
      %p92 = por %p90, %p91
      %p94 = scmp.ne.s32.totalorder %s77, %s93
      %p95 = scmp.eq.s32.totalorder %s43, 0
      %p96 = por %p94, %p95
      %s97 = ssub.s32 %s37, %s44
      %p98 = scmp.eq.s32.totalorder %s97, 0
      %s100 = sadd.s32 %s99, 1
      %s101 = scalar_select %p98, %s99, %s100
      %p104 = pneg %p98
      %p105 = scmp.eq.s32.totalorder %s37, 1
      %p106 = por %p104, %p105
      %p107 = scmp.ne.s32.totalorder %s99, %s102
      %p108 = scmp.eq.s32.totalorder %s37, 0
      %p109 = por %p107, %p108
      %p110 = scmp.ne.s32.totalorder %s99, %s102
      %p111 = scmp.eq.s32.totalorder %s42, 1
      %p112 = por %p110, %p111
      %p113 = scmp.ne.s32.totalorder %s102, %s103
      %p114 = scmp.eq.s32.totalorder %s42, 0
      %p115 = por %p113, %p114
      %p116 = scmp.ne.s32.totalorder %s102, %s103
      %p117 = scmp.eq.s32.totalorder %s43, 1
      %p118 = por %p116, %p117
      %p120 = scmp.ne.s32.totalorder %s103, %s119
      %p121 = scmp.eq.s32.totalorder %s43, 0
      %p122 = por %p120, %p121
      %s124 = sadd.s32 %s123, 1
      %p127 = scmp.eq.s32.totalorder %s37, 1
      %p128 = scmp.ne.s32.totalorder %s123, %s125
      %p129 = scmp.eq.s32.totalorder %s37, 0
      %p130 = por %p128, %p129
      %p131 = scmp.ne.s32.totalorder %s123, %s125
      %p132 = scmp.eq.s32.totalorder %s42, 1
      %p133 = por %p131, %p132
      %p134 = scmp.ne.s32.totalorder %s125, %s126
      %p135 = scmp.eq.s32.totalorder %s42, 0
      %p136 = por %p134, %p135
      %p137 = scmp.ne.s32.totalorder %s125, %s126
      %p138 = scmp.eq.s32.totalorder %s43, 1
      %p139 = por %p137, %p138
      %p141 = scmp.ne.s32.totalorder %s126, %s140
      %p142 = scmp.eq.s32.totalorder %s43, 0
      %p143 = por %p141, %p142
      %s145 = sadd.s32 %s144, 1
      %p148 = scmp.eq.s32.totalorder %s37, 1
      %p149 = scmp.ne.s32.totalorder %s144, %s146
      %p150 = scmp.eq.s32.totalorder %s37, 0
      %p151 = por %p149, %p150
      %p152 = scmp.ne.s32.totalorder %s144, %s146
      %p153 = scmp.eq.s32.totalorder %s42, 1
      %p154 = por %p152, %p153
      %p155 = scmp.ne.s32.totalorder %s146, %s147
      %p156 = scmp.eq.s32.totalorder %s42, 0
      %p157 = por %p155, %p156
      %p158 = scmp.ne.s32.totalorder %s146, %s147
      %p159 = scmp.eq.s32.totalorder %s43, 1
      %p160 = por %p158, %p159
      %p162 = scmp.ne.s32.totalorder %s147, %s161
      %p163 = scmp.eq.s32.totalorder %s43, 0
      %p164 = por %p162, %p163
      %s166 = sadd.s32 %s165, 1
      %p169 = scmp.eq.s32.totalorder %s37, 1
      %p170 = scmp.ne.s32.totalorder %s165, %s167
      %p171 = scmp.eq.s32.totalorder %s37, 0
      %p172 = por %p170, %p171
      %p173 = scmp.ne.s32.totalorder %s165, %s167
      %p174 = scmp.eq.s32.totalorder %s42, 1
      %p175 = por %p173, %p174
      %p176 = scmp.ne.s32.totalorder %s167, %s168
      %p177 = scmp.eq.s32.totalorder %s42, 0
      %p178 = por %p176, %p177
      %p179 = scmp.ne.s32.totalorder %s167, %s168
      %p180 = scmp.eq.s32.totalorder %s43, 1
      %p181 = por %p179, %p180
      %p183 = scmp.ne.s32.totalorder %s168, %s182
      %p184 = scmp.eq.s32.totalorder %s43, 0
      %p185 = por %p183, %p184
      %s187 = sadd.s32 %s186, 1
      %p190 = scmp.eq.s32.totalorder %s37, 1
      %p191 = scmp.ne.s32.totalorder %s186, %s188
      %p192 = scmp.eq.s32.totalorder %s37, 0
      %p193 = por %p191, %p192
      %p194 = scmp.ne.s32.totalorder %s186, %s188
      %p195 = scmp.eq.s32.totalorder %s42, 1
      %p196 = por %p194, %p195
      %p197 = scmp.ne.s32.totalorder %s188, %s189
      %p198 = scmp.eq.s32.totalorder %s42, 0
      %p199 = por %p197, %p198
      %p200 = scmp.ne.s32.totalorder %s188, %s189
      %p201 = scmp.eq.s32.totalorder %s43, 1
      %p202 = por %p200, %p201
      %p204 = scmp.ne.s32.totalorder %s189, %s203
      %p205 = scmp.eq.s32.totalorder %s43, 0
      %p206 = por %p204, %p205
      %s208 = sadd.s32 %s207, 1
      %p211 = scmp.eq.s32.totalorder %s37, 1
      %p212 = scmp.ne.s32.totalorder %s207, %s209
      %p213 = scmp.eq.s32.totalorder %s37, 0
      %p214 = por %p212, %p213
      %p215 = scmp.ne.s32.totalorder %s207, %s209
      %p216 = scmp.eq.s32.totalorder %s42, 1
      %p217 = por %p215, %p216
      %p218 = scmp.ne.s32.totalorder %s209, %s210
      %p219 = scmp.eq.s32.totalorder %s42, 0
      %p220 = por %p218, %p219
      %p221 = scmp.ne.s32.totalorder %s209, %s210
      %p222 = scmp.eq.s32.totalorder %s43, 1
      %p223 = por %p221, %p222
      %p225 = scmp.ne.s32.totalorder %s210, %s224
      %p226 = scmp.eq.s32.totalorder %s43, 0
      %p227 = por %p225, %p226
      %s229 = sadd.s32 %s228, 1
      %p232 = scmp.eq.s32.totalorder %s37, 1
      %p233 = scmp.ne.s32.totalorder %s228, %s230
      %p234 = scmp.eq.s32.totalorder %s37, 0
      %p235 = por %p233, %p234
      %p236 = scmp.ne.s32.totalorder %s228, %s230
      %p237 = scmp.eq.s32.totalorder %s42, 1
      %p238 = por %p236, %p237
      %p239 = scmp.ne.s32.totalorder %s230, %s231
      %p240 = scmp.eq.s32.totalorder %s42, 0
      %p241 = por %p239, %p240
      %p242 = scmp.ne.s32.totalorder %s230, %s231
      %p243 = scmp.eq.s32.totalorder %s43, 1
      %p244 = por %p242, %p243
      %p246 = scmp.ne.s32.totalorder %s231, %s245
      %p247 = scmp.eq.s32.totalorder %s43, 0
      %p248 = por %p246, %p247
      %s250 = sadd.s32 %s249, 1
      %p253 = scmp.eq.s32.totalorder %s37, 1
      %p254 = scmp.ne.s32.totalorder %s249, %s251
      %p255 = scmp.eq.s32.totalorder %s37, 0
      %p256 = por %p254, %p255
      %p257 = scmp.ne.s32.totalorder %s249, %s251
      %p258 = scmp.eq.s32.totalorder %s42, 1
      %p259 = por %p257, %p258
      %p260 = scmp.ne.s32.totalorder %s251, %s252
      %p261 = scmp.eq.s32.totalorder %s42, 0
      %p262 = por %p260, %p261
      %p263 = scmp.ne.s32.totalorder %s251, %s252
      %p264 = scmp.eq.s32.totalorder %s43, 1
      %p265 = por %p263, %p264
      %p267 = scmp.ne.s32.totalorder %s252, %s266
      %p268 = scmp.eq.s32.totalorder %s43, 0
      %p269 = por %p267, %p268
      %s271 = sadd.s32 %s270, 1
      %p274 = scmp.eq.s32.totalorder %s37, 1
      %p275 = scmp.ne.s32.totalorder %s270, %s272
      %p276 = scmp.eq.s32.totalorder %s37, 0
      %p277 = por %p275, %p276
      %p278 = scmp.ne.s32.totalorder %s270, %s272
      %p279 = scmp.eq.s32.totalorder %s42, 1
      %p280 = por %p278, %p279
      %p281 = scmp.ne.s32.totalorder %s272, %s273
      %p282 = scmp.eq.s32.totalorder %s42, 0
      %p283 = por %p281, %p282
      %p284 = scmp.ne.s32.totalorder %s272, %s273
      %p285 = scmp.eq.s32.totalorder %s43, 1
      %p286 = por %p284, %p285
      %p288 = scmp.ne.s32.totalorder %s273, %s287
      %p289 = scmp.eq.s32.totalorder %s43, 0
      %p290 = por %p288, %p289
      %s292 = sadd.s32 %s291, 1
      %p295 = scmp.eq.s32.totalorder %s37, 1
      %p296 = scmp.ne.s32.totalorder %s291, %s293
      %p297 = scmp.eq.s32.totalorder %s37, 0
      %p298 = por %p296, %p297
      %p299 = scmp.ne.s32.totalorder %s291, %s293
      %p300 = scmp.eq.s32.totalorder %s42, 1
      %p301 = por %p299, %p300
      %p302 = scmp.ne.s32.totalorder %s293, %s294
      %p303 = scmp.eq.s32.totalorder %s42, 0
      %p304 = por %p302, %p303
      %p305 = scmp.ne.s32.totalorder %s293, %s294
      %p306 = scmp.eq.s32.totalorder %s43, 1
      %p307 = por %p305, %p306
      %p309 = scmp.ne.s32.totalorder %s294, %s308
      %p310 = scmp.eq.s32.totalorder %s43, 0
      %p311 = por %p309, %p310
      %s313 = sadd.s32 %s312, 1
      %p316 = scmp.eq.s32.totalorder %s37, 1
      %p317 = scmp.ne.s32.totalorder %s312, %s314
      %p318 = scmp.eq.s32.totalorder %s37, 0
      %p319 = por %p317, %p318
      %p320 = scmp.ne.s32.totalorder %s312, %s314
      %p321 = scmp.eq.s32.totalorder %s42, 1
      %p322 = por %p320, %p321
      %p323 = scmp.ne.s32.totalorder %s314, %s315
      %p324 = scmp.eq.s32.totalorder %s42, 0
      %p325 = por %p323, %p324
      %p326 = scmp.ne.s32.totalorder %s314, %s315
      %p327 = scmp.eq.s32.totalorder %s43, 1
      %p328 = por %p326, %p327
      %p330 = scmp.ne.s32.totalorder %s315, %s329
      %p331 = scmp.eq.s32.totalorder %s43, 0
      %p332 = por %p330, %p331
      %s334 = sadd.s32 %s333, 1
      %p337 = scmp.eq.s32.totalorder %s37, 1
      %p338 = scmp.ne.s32.totalorder %s333, %s335
      %p339 = scmp.eq.s32.totalorder %s37, 0
      %p340 = por %p338, %p339
      %p341 = scmp.ne.s32.totalorder %s333, %s335
      %p342 = scmp.eq.s32.totalorder %s42, 1
      %p343 = por %p341, %p342
      %p344 = scmp.ne.s32.totalorder %s335, %s336
      %p345 = scmp.eq.s32.totalorder %s42, 0
      %p346 = por %p344, %p345
      %p347 = scmp.ne.s32.totalorder %s335, %s336
      %p348 = scmp.eq.s32.totalorder %s43, 1
      %p349 = por %p347, %p348
      %p351 = scmp.ne.s32.totalorder %s336, %s350
      %p352 = scmp.eq.s32.totalorder %s43, 0
      %p353 = por %p351, %p352
      %s355 = sadd.s32 %s354, 1
      %p358 = scmp.eq.s32.totalorder %s37, 1
      %p359 = scmp.ne.s32.totalorder %s354, %s356
      %p360 = scmp.eq.s32.totalorder %s37, 0
      %p361 = por %p359, %p360
      %p362 = scmp.ne.s32.totalorder %s354, %s356
      %p363 = scmp.eq.s32.totalorder %s42, 1
      %p364 = por %p362, %p363
      %p365 = scmp.ne.s32.totalorder %s356, %s357
      %p366 = scmp.eq.s32.totalorder %s42, 0
      %p367 = por %p365, %p366
      %p368 = scmp.ne.s32.totalorder %s356, %s357
      %p369 = scmp.eq.s32.totalorder %s43, 1
      %p370 = por %p368, %p369
      %p372 = scmp.ne.s32.totalorder %s357, %s371
      %p373 = scmp.eq.s32.totalorder %s43, 0
      %p374 = por %p372, %p373
      %s376 = sadd.s32 %s375, 1
      %p379 = scmp.eq.s32.totalorder %s37, 1
      %p380 = scmp.ne.s32.totalorder %s375, %s377
      %p381 = scmp.eq.s32.totalorder %s37, 0
      %p382 = por %p380, %p381
      %p383 = scmp.ne.s32.totalorder %s375, %s377
      %p384 = scmp.eq.s32.totalorder %s42, 1
      %p385 = por %p383, %p384
      %p386 = scmp.ne.s32.totalorder %s377, %s378
      %p387 = scmp.eq.s32.totalorder %s42, 0
      %p388 = por %p386, %p387
      %p389 = scmp.ne.s32.totalorder %s377, %s378
      %p390 = scmp.eq.s32.totalorder %s43, 1
      %p391 = por %p389, %p390
      %p393 = scmp.ne.s32.totalorder %s378, %s392
      %p394 = scmp.eq.s32.totalorder %s43, 0
      %p395 = por %p393, %p394
      %s397 = sadd.s32 %s396, 1
      %p400 = scmp.eq.s32.totalorder %s37, 1
      %p401 = scmp.ne.s32.totalorder %s396, %s398
      %p402 = scmp.eq.s32.totalorder %s37, 0
      %p403 = por %p401, %p402
      %p404 = scmp.ne.s32.totalorder %s396, %s398
      %p405 = scmp.eq.s32.totalorder %s42, 1
      %p406 = por %p404, %p405
      %p407 = scmp.ne.s32.totalorder %s398, %s399
      %p408 = scmp.eq.s32.totalorder %s42, 0
      %p409 = por %p407, %p408
      %p410 = scmp.ne.s32.totalorder %s398, %s399
      %p411 = scmp.eq.s32.totalorder %s43, 1
      %p412 = por %p410, %p411
      %p414 = scmp.ne.s32.totalorder %s399, %s413
      %p415 = scmp.eq.s32.totalorder %s43, 0
      %p416 = por %p414, %p415
      %s418 = sadd.s32 %s417, 1
      %p421 = scmp.eq.s32.totalorder %s37, 1
      %p422 = scmp.ne.s32.totalorder %s417, %s419
      %p423 = scmp.eq.s32.totalorder %s37, 0
      %p424 = por %p422, %p423
      %p425 = scmp.ne.s32.totalorder %s417, %s419
      %p426 = scmp.eq.s32.totalorder %s42, 1
      %p427 = por %p425, %p426
      %p428 = scmp.ne.s32.totalorder %s419, %s420
      %p429 = scmp.eq.s32.totalorder %s42, 0
      %p430 = por %p428, %p429
      %p431 = scmp.ne.s32.totalorder %s419, %s420
      %p432 = scmp.eq.s32.totalorder %s43, 1
      %p433 = por %p431, %p432
      %p435 = scmp.ne.s32.totalorder %s420, %s434
      %p436 = scmp.eq.s32.totalorder %s43, 0
      %p437 = por %p435, %p436
      %s439 = sadd.s32 %s438, 1
      %p442 = scmp.eq.s32.totalorder %s37, 1
      %p443 = scmp.ne.s32.totalorder %s438, %s440
      %p444 = scmp.eq.s32.totalorder %s37, 0
      %p445 = por %p443, %p444
      %p446 = scmp.ne.s32.totalorder %s438, %s440
      %p447 = scmp.eq.s32.totalorder %s42, 1
      %p448 = por %p446, %p447
      %p449 = scmp.ne.s32.totalorder %s440, %s441
      %p450 = scmp.eq.s32.totalorder %s42, 0
      %p451 = por %p449, %p450
      %p452 = scmp.ne.s32.totalorder %s440, %s441
      %p453 = scmp.eq.s32.totalorder %s43, 1
      %p454 = por %p452, %p453
      %p456 = scmp.ne.s32.totalorder %s441, %s455
      %p457 = scmp.eq.s32.totalorder %s43, 0
      %p458 = por %p456, %p457
      %s460 = sadd.s32 %s459, 1
      %p463 = scmp.eq.s32.totalorder %s37, 1
      %p464 = scmp.ne.s32.totalorder %s459, %s461
      %p465 = scmp.eq.s32.totalorder %s37, 0
      %p466 = por %p464, %p465
      %p467 = scmp.ne.s32.totalorder %s459, %s461
      %p468 = scmp.eq.s32.totalorder %s42, 1
      %p469 = por %p467, %p468
      %p470 = scmp.ne.s32.totalorder %s461, %s462
      %p471 = scmp.eq.s32.totalorder %s42, 0
      %p472 = por %p470, %p471
      %p473 = scmp.ne.s32.totalorder %s461, %s462
      %p474 = scmp.eq.s32.totalorder %s43, 1
      %p475 = por %p473, %p474
      %p477 = scmp.ne.s32.totalorder %s462, %s476
      %p478 = scmp.eq.s32.totalorder %s43, 0
      %p479 = por %p477, %p478
      %s480 = ssub.s32 %s37, %s44
      %p481 = scmp.eq.s32.totalorder %s480, 0
      %s483 = sadd.s32 %s482, 1
      %s484 = scalar_select %p481, %s482, %s483
      %p487 = pneg %p481
      %p488 = scmp.eq.s32.totalorder %s37, 1
      %p489 = por %p487, %p488
      %p490 = scmp.ne.s32.totalorder %s482, %s485
      %p491 = scmp.eq.s32.totalorder %s37, 0
      %p492 = por %p490, %p491
      %p493 = scmp.ne.s32.totalorder %s482, %s485
      %p494 = scmp.eq.s32.totalorder %s42, 1
      %p495 = por %p493, %p494
      %p496 = scmp.ne.s32.totalorder %s485, %s486
      %p497 = scmp.eq.s32.totalorder %s42, 0
      %p498 = por %p496, %p497
      %p499 = scmp.ne.s32.totalorder %s485, %s486
      %p500 = scmp.eq.s32.totalorder %s43, 1
      %p501 = por %p499, %p500
      %p503 = scmp.ne.s32.totalorder %s486, %s502
      %p504 = scmp.eq.s32.totalorder %s43, 0
      %p505 = por %p503, %p504
      %p506 = scmp.le.s32.totalorder 1, %s37
      %p507 = scmp.lt.s32.totalorder %s37, 3
      %p508 = pnand %p506, %p507
      %p509 = pneg %p508
      // Predicated region
      $region9: #{tpu_custom_call.1} parent=5 // pred_check
        _
      $region10: #{tpu_custom_call.1} parent=5 // pred_check_branch
        %511 = sbr.rel (%p508) target = $region12
      $region11: #{tpu_custom_call.1} parent=5 // pred_region
        %s512 = ssub.s32 %s37, 1
        // Predicated region
        $region13: #{tpu_custom_call.1} parent=11 // pred_check
          %p513 = pneg %p136
        $region14: #{tpu_custom_call.1} parent=11 // pred_check_branch
          %515 = sbr.rel (%p513) target = $region16
        $region15: #{tpu_custom_call.1} parent=11 // pred_region
          %s517 = ssub.s32 256, 256
          %518 = vsyncadd [#allocation4], %s517
          %s519 = sshll.u32 [#allocation3], 4
          %s520 = int_to_ptr.vmem [resolvable:$true] %s519
          %525 = dma.hbm_to_vmem [thread:$0]  %s3, 256, %s520, [#allocation4], 64, 64, 4
        $region16: #{tpu_custom_call.1} parent=11 // pred_fallthru
          _
        // Predicated region
        $region17: #{tpu_custom_call.1} parent=11 // pred_check
          %p526 = pneg %p157
        $region18: #{tpu_custom_call.1} parent=11 // pred_check_branch
          %528 = sbr.rel (%p526) target = $region20
        $region19: #{tpu_custom_call.1} parent=11 // pred_region
          %s530 = ssub.s32 256, 256
          %531 = vsyncadd [#allocation9], %s530
          %s532 = sshll.u32 [#allocation8], 4
          %s533 = int_to_ptr.vmem [resolvable:$true] %s532
          %538 = dma.hbm_to_vmem [thread:$0]  %s4, 256, %s533, [#allocation9], 64, 64, 4
        $region20: #{tpu_custom_call.1} parent=11 // pred_fallthru
          _
        // Predicated region
        $region21: #{tpu_custom_call.1} parent=11 // pred_check
          %p539 = pneg %p178
        $region22: #{tpu_custom_call.1} parent=11 // pred_check_branch
          %541 = sbr.rel (%p539) target = $region24
        $region23: #{tpu_custom_call.1} parent=11 // pred_region
          %s543 = ssub.s32 64, 64
          %544 = vsyncadd [#allocation6], %s543
          %547 = dma.hbm_to_smem %s5, 64, [#allocation10], [#allocation6]
        $region24: #{tpu_custom_call.1} parent=11 // pred_fallthru
          _
        // Predicated region
        $region25: #{tpu_custom_call.1} parent=11 // pred_check
          %p548 = pneg %p199
        $region26: #{tpu_custom_call.1} parent=11 // pred_check_branch
          %550 = sbr.rel (%p548) target = $region28
        $region27: #{tpu_custom_call.1} parent=11 // pred_region
          %s552 = ssub.s32 64, 64
          %553 = vsyncadd [#allocation12], %s552
          %556 = dma.hbm_to_smem %s6, 64, [#allocation11], [#allocation12]
        $region28: #{tpu_custom_call.1} parent=11 // pred_fallthru
          _
        // Predicated region
        $region29: #{tpu_custom_call.1} parent=11 // pred_check
          %p557 = pneg %p220
        $region30: #{tpu_custom_call.1} parent=11 // pred_check_branch
          %559 = sbr.rel (%p557) target = $region32
        $region31: #{tpu_custom_call.1} parent=11 // pred_region
          %s561 = ssub.s32 64, 64
          %562 = vsyncadd [#allocation12], %s561
          %565 = dma.hbm_to_smem %s7, 64, [#allocation13], [#allocation12]
        $region32: #{tpu_custom_call.1} parent=11 // pred_fallthru
          _
        // Predicated region
        $region33: #{tpu_custom_call.1} parent=11 // pred_check
          %p566 = pneg %p241
        $region34: #{tpu_custom_call.1} parent=11 // pred_check_branch
          %568 = sbr.rel (%p566) target = $region36
        $region35: #{tpu_custom_call.1} parent=11 // pred_region
          %s570 = ssub.s32 64, 64
          %571 = vsyncadd [#allocation15], %s570
          %574 = dma.hbm_to_smem %s8, 64, [#allocation14], [#allocation15]
        $region36: #{tpu_custom_call.1} parent=11 // pred_fallthru
          _
        // Predicated region
        $region37: #{tpu_custom_call.1} parent=11 // pred_check
          %p575 = pneg %p262
        $region38: #{tpu_custom_call.1} parent=11 // pred_check_branch
          %577 = sbr.rel (%p575) target = $region40
        $region39: #{tpu_custom_call.1} parent=11 // pred_region
          %s579 = ssub.s32 64, 64
          %580 = vsyncadd [#allocation7], %s579
          %s582 = sshll.u32 %s9, 4
          %s583 = int_to_ptr.vmem [resolvable:$true] %s582
          %585 = dma.vmem_to_smem %s583, 64, [#allocation16], [#allocation7]
        $region40: #{tpu_custom_call.1} parent=11 // pred_fallthru
          _
        // Predicated region
        $region41: #{tpu_custom_call.1} parent=11 // pred_check
          %p586 = pneg %p283
        $region42: #{tpu_custom_call.1} parent=11 // pred_check_branch
          %588 = sbr.rel (%p586) target = $region44
        $region43: #{tpu_custom_call.1} parent=11 // pred_region
          _
        $region44: #{tpu_custom_call.1} parent=11 // pred_fallthru
          _
        // Predicated region
        $region45: #{tpu_custom_call.1} parent=11 // pred_check
          %p589 = pneg %p304
        $region46: #{tpu_custom_call.1} parent=11 // pred_check_branch
          %591 = sbr.rel (%p589) target = $region48
        $region47: #{tpu_custom_call.1} parent=11 // pred_region
          %s593 = ssub.s32 16, 16
          %594 = vsyncadd [#allocation9], %s593
          %s596 = sshll.u32 [#allocation17], 4
          %s597 = int_to_ptr.vmem [resolvable:$true] %s596
          %599 = dma.hbm_to_vmem [thread:$0]  %s11, 16, %s597, [#allocation9]
        $region48: #{tpu_custom_call.1} parent=11 // pred_fallthru
          _
        // Predicated region
        $region49: #{tpu_custom_call.1} parent=11 // pred_check
          %p600 = pneg %p325
        $region50: #{tpu_custom_call.1} parent=11 // pred_check_branch
          %602 = sbr.rel (%p600) target = $region52
        $region51: #{tpu_custom_call.1} parent=11 // pred_region
          %s604 = ssub.s32 16, 16
          %605 = vsyncadd [#allocation19], %s604
          %s607 = sshll.u32 [#allocation18], 4
          %s608 = int_to_ptr.vmem [resolvable:$true] %s607
          %610 = dma.hbm_to_vmem [thread:$0]  %s12, 16, %s608, [#allocation19]
        $region52: #{tpu_custom_call.1} parent=11 // pred_fallthru
          _
        // Predicated region
        $region53: #{tpu_custom_call.1} parent=11 // pred_check
          %p611 = pneg %p346
        $region54: #{tpu_custom_call.1} parent=11 // pred_check_branch
          %613 = sbr.rel (%p611) target = $region56
        $region55: #{tpu_custom_call.1} parent=11 // pred_region
          %s615 = ssub.s32 16, 16
          %616 = vsyncadd [#allocation19], %s615
          %s618 = sshll.u32 [#allocation20], 4
          %s619 = int_to_ptr.vmem [resolvable:$true] %s618
          %621 = dma.hbm_to_vmem [thread:$0]  %s13, 16, %s619, [#allocation19]
        $region56: #{tpu_custom_call.1} parent=11 // pred_fallthru
          _
        // Predicated region
        $region57: #{tpu_custom_call.1} parent=11 // pred_check
          %p622 = pneg %p367
        $region58: #{tpu_custom_call.1} parent=11 // pred_check_branch
          %624 = sbr.rel (%p622) target = $region60
        $region59: #{tpu_custom_call.1} parent=11 // pred_region
          %s626 = ssub.s32 256, 256
          %627 = vsyncadd [#allocation22], %s626
          %s628 = sshll.u32 [#allocation21], 4
          %s629 = int_to_ptr.vmem [resolvable:$true] %s628
          %634 = dma.hbm_to_vmem [thread:$0]  %s14, 256, %s629, [#allocation22], 64, 64, 4
        $region60: #{tpu_custom_call.1} parent=11 // pred_fallthru
          _
        // Predicated region
        $region61: #{tpu_custom_call.1} parent=11 // pred_check
          %p635 = pneg %p388
        $region62: #{tpu_custom_call.1} parent=11 // pred_check_branch
          %637 = sbr.rel (%p635) target = $region64
        $region63: #{tpu_custom_call.1} parent=11 // pred_region
          %s639 = ssub.s32 16, 16
          %640 = vsyncadd [#allocation22], %s639
          %s642 = sshll.u32 [#allocation23], 4
          %s643 = int_to_ptr.vmem [resolvable:$true] %s642
          %645 = dma.hbm_to_vmem [thread:$0]  %s15, 16, %s643, [#allocation22]
        $region64: #{tpu_custom_call.1} parent=11 // pred_fallthru
          _
        // Predicated region
        $region65: #{tpu_custom_call.1} parent=11 // pred_check
          %p646 = pneg %p409
        $region66: #{tpu_custom_call.1} parent=11 // pred_check_branch
          %648 = sbr.rel (%p646) target = $region68
        $region67: #{tpu_custom_call.1} parent=11 // pred_region
          _
        $region68: #{tpu_custom_call.1} parent=11 // pred_fallthru
          _
        // Predicated region
        $region69: #{tpu_custom_call.1} parent=11 // pred_check
          %p649 = pneg %p430
        $region70: #{tpu_custom_call.1} parent=11 // pred_check_branch
          %651 = sbr.rel (%p649) target = $region72
        $region71: #{tpu_custom_call.1} parent=11 // pred_region
          _
        $region72: #{tpu_custom_call.1} parent=11 // pred_fallthru
          _
        // Predicated region
        $region73: #{tpu_custom_call.1} parent=11 // pred_check
          %p652 = pneg %p451
        $region74: #{tpu_custom_call.1} parent=11 // pred_check_branch
          %654 = sbr.rel (%p652) target = $region76
        $region75: #{tpu_custom_call.1} parent=11 // pred_region
          _
        $region76: #{tpu_custom_call.1} parent=11 // pred_fallthru
          _
        // Predicated region
        $region77: #{tpu_custom_call.1} parent=11 // pred_check
          %p655 = pneg %p472
        $region78: #{tpu_custom_call.1} parent=11 // pred_check_branch
          %657 = sbr.rel (%p655) target = $region80
        $region79: #{tpu_custom_call.1} parent=11 // pred_region
          _
        $region80: #{tpu_custom_call.1} parent=11 // pred_fallthru
          _
      $region12: #{tpu_custom_call.1} parent=5 // pred_fallthru
        _
      %p658 = scmp.lt.s32.totalorder %s37, 2
      // Predicated region
      $region81: #{tpu_custom_call.1} parent=5 // pred_check
        %p659 = pneg %p658
      $region82: #{tpu_custom_call.1} parent=5 // pred_check_branch
        %661 = sbr.rel (%p659) target = $region84
      $region83: #{tpu_custom_call.1} parent=5 // pred_region
        // Predicated region
        $region85: #{tpu_custom_call.1} parent=83 // pred_check
          %p662 = pneg %p57
        $region86: #{tpu_custom_call.1} parent=83 // pred_check_branch
          %664 = sbr.rel (%p662) target = $region88
        $region87: #{tpu_custom_call.1} parent=83 // pred_region
          %p665 = scmp.lt.s32.totalorder %s37, 1
          %s666 = scalar_select %p665, %s37, 1
          %s667 = smul.addr %s666, 8
          %s668 = scalar_lea.vmem %s0, %s667
        $region88: #{tpu_custom_call.1} parent=83 // pred_fallthru
          _
        // Predicated region
        $region89: #{tpu_custom_call.1} parent=83 // pred_check
          %p669 = pneg %p83
        $region90: #{tpu_custom_call.1} parent=83 // pred_check_branch
          %671 = sbr.rel (%p669) target = $region92
        $region91: #{tpu_custom_call.1} parent=83 // pred_region
          %p672 = scmp.lt.s32.totalorder %s37, 1
          %s673 = scalar_select %p672, %s37, 1
          %s674 = smul.addr %s673, 8
          %s675 = scalar_lea.vmem %s1, %s674
        $region92: #{tpu_custom_call.1} parent=83 // pred_fallthru
          _
        // Predicated region
        $region93: #{tpu_custom_call.1} parent=83 // pred_check
          %p676 = pneg %p109
        $region94: #{tpu_custom_call.1} parent=83 // pred_check_branch
          %678 = sbr.rel (%p676) target = $region96
        $region95: #{tpu_custom_call.1} parent=83 // pred_region
          %p679 = scmp.lt.s32.totalorder %s37, 1
          %s680 = scalar_select %p679, %s37, 1
          %s681 = smul.addr %s680, 8
          %s682 = scalar_lea.vmem %s2, %s681
        $region96: #{tpu_custom_call.1} parent=83 // pred_fallthru
          _
      $region84: #{tpu_custom_call.1} parent=5 // pred_fallthru
        _
      %p683 = scmp.le.s32.totalorder 1, %s37
      %p684 = scmp.lt.s32.totalorder %s37, 3
      %p685 = pnand %p683, %p684
      %p686 = pneg %p685
      // Predicated region
      $region97: #{tpu_custom_call.1} parent=5 // pred_check
        _
      $region98: #{tpu_custom_call.1} parent=5 // pred_check_branch
        %688 = sbr.rel (%p685) target = $region100
      $region99: #{tpu_custom_call.1} parent=5 // pred_region
        %s689 = ssub.s32 %s37, 1
        // Predicated region
        $region101: #{tpu_custom_call.1} parent=99 // pred_check
          %p690 = pneg %p136
        $region102: #{tpu_custom_call.1} parent=99 // pred_check_branch
          %692 = sbr.rel (%p690) target = $region104
        $region103: #{tpu_custom_call.1} parent=99 // pred_region
          %693 = dma.done [#allocation4], 256
        $region104: #{tpu_custom_call.1} parent=99 // pred_fallthru
          _
        // Predicated region
        $region105: #{tpu_custom_call.1} parent=99 // pred_check
          %p694 = pneg %p157
        $region106: #{tpu_custom_call.1} parent=99 // pred_check_branch
          %696 = sbr.rel (%p694) target = $region108
        $region107: #{tpu_custom_call.1} parent=99 // pred_region
          %697 = dma.done [#allocation9], 256
        $region108: #{tpu_custom_call.1} parent=99 // pred_fallthru
          _
        // Predicated region
        $region109: #{tpu_custom_call.1} parent=99 // pred_check
          %p698 = pneg %p178
        $region110: #{tpu_custom_call.1} parent=99 // pred_check_branch
          %700 = sbr.rel (%p698) target = $region112
        $region111: #{tpu_custom_call.1} parent=99 // pred_region
          %701 = dma.done [#allocation6], 64
        $region112: #{tpu_custom_call.1} parent=99 // pred_fallthru
          _
        // Predicated region
        $region113: #{tpu_custom_call.1} parent=99 // pred_check
          %p702 = pneg %p199
        $region114: #{tpu_custom_call.1} parent=99 // pred_check_branch
          %704 = sbr.rel (%p702) target = $region116
        $region115: #{tpu_custom_call.1} parent=99 // pred_region
          %705 = dma.done [#allocation12], 64
        $region116: #{tpu_custom_call.1} parent=99 // pred_fallthru
          _
        // Predicated region
        $region117: #{tpu_custom_call.1} parent=99 // pred_check
          %p706 = pneg %p220
        $region118: #{tpu_custom_call.1} parent=99 // pred_check_branch
          %708 = sbr.rel (%p706) target = $region120
        $region119: #{tpu_custom_call.1} parent=99 // pred_region
          %709 = dma.done [#allocation12], 64
        $region120: #{tpu_custom_call.1} parent=99 // pred_fallthru
          _
        // Predicated region
        $region121: #{tpu_custom_call.1} parent=99 // pred_check
          %p710 = pneg %p241
        $region122: #{tpu_custom_call.1} parent=99 // pred_check_branch
          %712 = sbr.rel (%p710) target = $region124
        $region123: #{tpu_custom_call.1} parent=99 // pred_region
          %713 = dma.done [#allocation15], 64
        $region124: #{tpu_custom_call.1} parent=99 // pred_fallthru
          _
        // Predicated region
        $region125: #{tpu_custom_call.1} parent=99 // pred_check
          %p714 = pneg %p262
        $region126: #{tpu_custom_call.1} parent=99 // pred_check_branch
          %716 = sbr.rel (%p714) target = $region128
        $region127: #{tpu_custom_call.1} parent=99 // pred_region
          %717 = dma.done [#allocation7], 64
        $region128: #{tpu_custom_call.1} parent=99 // pred_fallthru
          _
        // Predicated region
        $region129: #{tpu_custom_call.1} parent=99 // pred_check
          %p718 = pneg %p304
        $region130: #{tpu_custom_call.1} parent=99 // pred_check_branch
          %720 = sbr.rel (%p718) target = $region132
        $region131: #{tpu_custom_call.1} parent=99 // pred_region
          %721 = dma.done [#allocation9], 16
        $region132: #{tpu_custom_call.1} parent=99 // pred_fallthru
          _
        // Predicated region
        $region133: #{tpu_custom_call.1} parent=99 // pred_check
          %p722 = pneg %p325
        $region134: #{tpu_custom_call.1} parent=99 // pred_check_branch
          %724 = sbr.rel (%p722) target = $region136
        $region135: #{tpu_custom_call.1} parent=99 // pred_region
          %725 = dma.done [#allocation19], 16
        $region136: #{tpu_custom_call.1} parent=99 // pred_fallthru
          _
        // Predicated region
        $region137: #{tpu_custom_call.1} parent=99 // pred_check
          %p726 = pneg %p346
        $region138: #{tpu_custom_call.1} parent=99 // pred_check_branch
          %728 = sbr.rel (%p726) target = $region140
        $region139: #{tpu_custom_call.1} parent=99 // pred_region
          %729 = dma.done [#allocation19], 16
        $region140: #{tpu_custom_call.1} parent=99 // pred_fallthru
          _
        // Predicated region
        $region141: #{tpu_custom_call.1} parent=99 // pred_check
          %p730 = pneg %p367
        $region142: #{tpu_custom_call.1} parent=99 // pred_check_branch
          %732 = sbr.rel (%p730) target = $region144
        $region143: #{tpu_custom_call.1} parent=99 // pred_region
          %733 = dma.done [#allocation22], 256
        $region144: #{tpu_custom_call.1} parent=99 // pred_fallthru
          _
        // Predicated region
        $region145: #{tpu_custom_call.1} parent=99 // pred_check
          %p734 = pneg %p388
        $region146: #{tpu_custom_call.1} parent=99 // pred_check_branch
          %736 = sbr.rel (%p734) target = $region148
        $region147: #{tpu_custom_call.1} parent=99 // pred_region
          %737 = dma.done [#allocation22], 16
        $region148: #{tpu_custom_call.1} parent=99 // pred_fallthru
          _
        %738 = sfence
        %p739 = scmp.lt.s32.totalorder %s42, 1
        %s740 = scalar_select %p739, %s42, 1
        %s741 = smul.addr %s740, 8
        %s742 = scalar_lea.vmem %s0, %s741
        %p743 = pneg %p63
        %p744 = pneg %p60
        %p745 = scmp.lt.s32.totalorder %s42, 1
        %s746 = scalar_select %p745, %s42, 1
        %s747 = smul.addr %s746, 8
        %s748 = scalar_lea.vmem %s1, %s747
        %p749 = pneg %p89
        %p750 = pneg %p86
        %p751 = scmp.lt.s32.totalorder %s42, 1
        %s752 = scalar_select %p751, %s42, 1
        %s753 = smul.addr %s752, 8
        %s754 = scalar_lea.vmem %s2, %s753
        %p755 = pneg %p115
        %p756 = pneg %p112
        %p757 = pneg %p136
        %p758 = pneg %p133
        %p759 = pneg %p157
        %p760 = pneg %p154
        %p761 = pneg %p178
        %p762 = pneg %p175
        %p763 = pneg %p199
        %p764 = pneg %p196
        %p765 = pneg %p220
        %p766 = pneg %p217
        %p767 = pneg %p241
        %p768 = pneg %p238
        %p769 = pneg %p262
        %p770 = pneg %p259
        %p771 = pneg %p283
        %p772 = pneg %p280
        %p773 = pneg %p304
        %p774 = pneg %p301
        %p775 = pneg %p325
        %p776 = pneg %p322
        %p777 = pneg %p346
        %p778 = pneg %p343
        %p779 = pneg %p367
        %p780 = pneg %p364
        %p781 = pneg %p388
        %p782 = pneg %p385
        %p783 = pneg %p409
        %p784 = pneg %p406
        %p785 = pneg %p430
        %p786 = pneg %p427
        %p787 = pneg %p451
        %p788 = pneg %p448
        %p789 = pneg %p472
        %p790 = pneg %p469
        %p791 = pneg %p498
        %p792 = pneg %p495
        %s793 = sand.u32 %s485, 1
        %s794 = scalar_lea.sflag [#allocation5], %s793
        %s795 = sand.u32 %s485, 1
        %s796 = smul.addr %s795, 8
        %s797 = scalar_lea.vmem [#allocation24], %s796
        %p798 = scmp.lt.s32.totalorder %s42, 1
        %s799 = scalar_select %p798, %s42, 1
        %s800 = smul.addr %s799, 8
        %s801 = scalar_lea.vmem %s0, %s800
        %p802 = scmp.lt.s32.totalorder %s42, 1
        %s803 = scalar_select %p802, %s42, 1
        %s804 = smul.addr %s803, 8
        %s805 = scalar_lea.vmem %s1, %s804
        %p806 = scmp.lt.s32.totalorder %s42, 1
        %s807 = scalar_select %p806, %s42, 1
        %s808 = smul.addr %s807, 8
        %s809 = scalar_lea.vmem %s2, %s808
        %v811 = vld [vmem:[%s801] sm:$0xff]
        %v812 = vld [vmem:[%s805] sm:$0xff]
        %v813 = vld [vmem:[%s809] sm:$0xff]
        %v814 = vpack.c.bf16 %v811, %v811
        %v815 = vpack.c.bf16 %v812, %v812
        %v816 = vld [vmem:[#allocation3] sm:$0xf]
        %v817 = vld [vmem:[#allocation3 + $0x4] sm:$0xf]
        %v818 = vld [vmem:[#allocation3 + $0x8] sm:$0xf]
        %v819 = vld [vmem:[#allocation3 + $0xc] sm:$0xf]
        %v824 = vunpack.c.l.b16 %v816
        %v825 = vunpack.c.l.b16 %v817
        %v826 = vunpack.c.l.b16 %v818
        %v827 = vunpack.c.l.b16 %v819
        %v828 = vpack.c.b16 %v825, %v824
        %v829 = vpack.c.b16 %v827, %v826
        %vm832 = vcmask 261120
        %v834 = vsel %vm832, %v814, 0
        %836 = vmatprep.subr.bf16.mxu0 0
        %837 = vmatpush1.bf16.msra.mxu0 0
        %838 = vmatprep.subr.bf16.mxu0 0
        %839 = vmatpush1.bf16.msra.mxu0 0
        %840 = vmatprep.subr.bf16.mxu0 0
        %841 = vmatpush1.bf16.msra.mxu0 0
        %842 = vmatprep.subr.bf16.mxu0 0
        %843 = vmatpush1.bf16.msra.mxu0 0
        %844 = vmatprep.subr.bf16.mxu0 0
        %845 = vmatpush1.bf16.msra.mxu0 0
        %846 = vmatprep.subr.bf16.mxu0 0
        %847 = vmatpush1.bf16.msra.mxu0 0
        %848 = vmatprep.subr.bf16.mxu0 0
        %849 = vmatpush1.bf16.msra.mxu0 %v829
        %850 = vmatprep.subr.bf16.mxu0 0
        %851 = vmatpush1.bf16.msra.mxu0 %v828
        %852 = vmatprep.subr.bf16.mxu0 0
        %853 = vmatpush2.bf16.msra.mxu0 0
        %854 = vmatprep.subr.bf16.mxu0 0
        %855 = vmatpush2.bf16.msra.mxu0 0
        %856 = vmatprep.subr.bf16.mxu0 0
        %857 = vmatpush2.bf16.msra.mxu0 0
        %858 = vmatprep.subr.bf16.mxu0 0
        %859 = vmatpush2.bf16.msra.mxu0 0
        %860 = vmatprep.subr.bf16.mxu0 0
        %861 = vmatpush2.bf16.msra.mxu0 0
        %862 = vmatprep.subr.bf16.mxu0 0
        %863 = vmatpush2.bf16.msra.mxu0 0
        %864 = vmatprep.subr.bf16.mxu0 0
        %865 = vmatpush2.bf16.msra.mxu0 0
        %866 = vmatprep.subr.bf16.mxu0 0
        %867 = vmatpush2.bf16.msra.mxu0 0
        %868 = vmatprep.mubr.bf16.mxu0 0
        %869 = vmatmul.mubr.bf16.gmra.mxu0 %v834
        %v870 = vpop.f32.mrf.mxu0
        %v871 = vadd.f32 0.0, %v870
        %v872 = vpop.f32.mrf.mxu0
        %v873 = vpop.f32.mrf.mxu0
        %v874 = vpop.f32.mrf.mxu0
        %875 = vdwg.mxu0
        %v876 = vpack.c.bf16 %v871, %v871
        %v877 = vld [vmem:[#allocation8] sm:$0xf]
        %v878 = vld [vmem:[#allocation8 + $0x4] sm:$0xf]
        %v879 = vld [vmem:[#allocation8 + $0x8] sm:$0xf]
        %v880 = vld [vmem:[#allocation8 + $0xc] sm:$0xf]
        %v885 = vunpack.c.l.b16 %v877
        %v886 = vunpack.c.l.b16 %v878
        %v887 = vunpack.c.l.b16 %v879
        %v888 = vunpack.c.l.b16 %v880
        %v889 = vpack.c.b16 %v886, %v885
        %v890 = vpack.c.b16 %v888, %v887
        %v894 = vsel %vm832, %v815, 0
        %896 = vmatprep.subr.bf16.mxu0 0
        %897 = vmatpush1.bf16.msra.mxu0 0
        %898 = vmatprep.subr.bf16.mxu0 0
        %899 = vmatpush1.bf16.msra.mxu0 0
        %900 = vmatprep.subr.bf16.mxu0 0
        %901 = vmatpush1.bf16.msra.mxu0 0
        %902 = vmatprep.subr.bf16.mxu0 0
        %903 = vmatpush1.bf16.msra.mxu0 0
        %904 = vmatprep.subr.bf16.mxu0 0
        %905 = vmatpush1.bf16.msra.mxu0 0
        %906 = vmatprep.subr.bf16.mxu0 0
        %907 = vmatpush1.bf16.msra.mxu0 0
        %908 = vmatprep.subr.bf16.mxu0 0
        %909 = vmatpush1.bf16.msra.mxu0 %v890
        %910 = vmatprep.subr.bf16.mxu0 0
        %911 = vmatpush1.bf16.msra.mxu0 %v889
        %912 = vmatprep.subr.bf16.mxu0 0
        %913 = vmatpush2.bf16.msra.mxu0 0
        %914 = vmatprep.subr.bf16.mxu0 0
        %915 = vmatpush2.bf16.msra.mxu0 0
        %916 = vmatprep.subr.bf16.mxu0 0
        %917 = vmatpush2.bf16.msra.mxu0 0
        %918 = vmatprep.subr.bf16.mxu0 0
        %919 = vmatpush2.bf16.msra.mxu0 0
        %920 = vmatprep.subr.bf16.mxu0 0
        %921 = vmatpush2.bf16.msra.mxu0 0
        %922 = vmatprep.subr.bf16.mxu0 0
        %923 = vmatpush2.bf16.msra.mxu0 0
        %924 = vmatprep.subr.bf16.mxu0 0
        %925 = vmatpush2.bf16.msra.mxu0 0
        %926 = vmatprep.subr.bf16.mxu0 0
        %927 = vmatpush2.bf16.msra.mxu0 0
        %928 = vmatprep.mubr.bf16.mxu0 0
        %929 = vmatmul.mubr.bf16.gmra.mxu0 %v894
        %v930 = vpop.f32.mrf.mxu0
        %v931 = vadd.f32 0.0, %v930
        %v932 = vpop.f32.mrf.mxu0
        %v933 = vpop.f32.mrf.mxu0
        %v934 = vpop.f32.mrf.mxu0
        %935 = vdwg.mxu0
        %v936 = vpack.c.bf16 %v931, %v931
        %s937 = sld [smem:[#allocation10]]
        %s938 = sld [smem:[#allocation10 + $0x1]]
        %s939 = sld [smem:[#allocation10 + $0x2]]
        %s940 = sld [smem:[#allocation10 + $0x3]]
        %s941 = sld [smem:[#allocation10 + $0x4]]
        %s942 = sld [smem:[#allocation10 + $0x5]]
        %s943 = sld [smem:[#allocation10 + $0x6]]
        %s944 = sld [smem:[#allocation10 + $0x7]]
        %s945 = sld [smem:[#allocation10 + $0x8]]
        %s946 = sld [smem:[#allocation10 + $0x9]]
        %s947 = sld [smem:[#allocation10 + $0xa]]
        %s948 = sld [smem:[#allocation10 + $0xb]]
        %s949 = sld [smem:[#allocation10 + $0xc]]
        %s950 = sld [smem:[#allocation10 + $0xd]]
        %s951 = sld [smem:[#allocation10 + $0xe]]
        %s952 = sld [smem:[#allocation10 + $0xf]]
        %s953 = sld [smem:[#allocation10 + $0x80]]
        %s954 = sld [smem:[#allocation10 + $0x81]]
        %s955 = sld [smem:[#allocation10 + $0x82]]
        %s956 = sld [smem:[#allocation10 + $0x83]]
        %s957 = sld [smem:[#allocation10 + $0x84]]
        %s958 = sld [smem:[#allocation10 + $0x85]]
        %s959 = sld [smem:[#allocation10 + $0x86]]
        %s960 = sld [smem:[#allocation10 + $0x87]]
        %s961 = sld [smem:[#allocation10 + $0x88]]
        %s962 = sld [smem:[#allocation10 + $0x89]]
        %s963 = sld [smem:[#allocation10 + $0x8a]]
        %s964 = sld [smem:[#allocation10 + $0x8b]]
        %s965 = sld [smem:[#allocation10 + $0x8c]]
        %s966 = sld [smem:[#allocation10 + $0x8d]]
        %s967 = sld [smem:[#allocation10 + $0x8e]]
        %s968 = sld [smem:[#allocation10 + $0x8f]]
        %s969 = sld [smem:[#allocation10 + $0x100]]
        %s970 = sld [smem:[#allocation10 + $0x101]]
        %s971 = sld [smem:[#allocation10 + $0x102]]
        %s972 = sld [smem:[#allocation10 + $0x103]]
        %s973 = sld [smem:[#allocation10 + $0x104]]
        %s974 = sld [smem:[#allocation10 + $0x105]]
        %s975 = sld [smem:[#allocation10 + $0x106]]
        %s976 = sld [smem:[#allocation10 + $0x107]]
        %s977 = sld [smem:[#allocation10 + $0x108]]
        %s978 = sld [smem:[#allocation10 + $0x109]]
        %s979 = sld [smem:[#allocation10 + $0x10a]]
        %s980 = sld [smem:[#allocation10 + $0x10b]]
        %s981 = sld [smem:[#allocation10 + $0x10c]]
        %s982 = sld [smem:[#allocation10 + $0x10d]]
        %s983 = sld [smem:[#allocation10 + $0x10e]]
        %s984 = sld [smem:[#allocation10 + $0x10f]]
        %s985 = sld [smem:[#allocation10 + $0x180]]
        %s986 = sld [smem:[#allocation10 + $0x181]]
        %s987 = sld [smem:[#allocation10 + $0x182]]
        %s988 = sld [smem:[#allocation10 + $0x183]]
        %s989 = sld [smem:[#allocation10 + $0x184]]
        %s990 = sld [smem:[#allocation10 + $0x185]]
        %s991 = sld [smem:[#allocation10 + $0x186]]
        %s992 = sld [smem:[#allocation10 + $0x187]]
        %s993 = sld [smem:[#allocation10 + $0x188]]
        %s994 = sld [smem:[#allocation10 + $0x189]]
        %s995 = sld [smem:[#allocation10 + $0x18a]]
        %s996 = sld [smem:[#allocation10 + $0x18b]]
        %s997 = sld [smem:[#allocation10 + $0x18c]]
        %s998 = sld [smem:[#allocation10 + $0x18d]]
        %s999 = sld [smem:[#allocation10 + $0x18e]]
        %s1000 = sld [smem:[#allocation10 + $0x18f]]
        %s1001 = sld [smem:[#allocation11]]
        %s1002 = sld [smem:[#allocation11 + $0x1]]
        %s1003 = sld [smem:[#allocation11 + $0x2]]
        %s1004 = sld [smem:[#allocation11 + $0x3]]
        %s1005 = sld [smem:[#allocation11 + $0x4]]
        %s1006 = sld [smem:[#allocation11 + $0x5]]
        %s1007 = sld [smem:[#allocation11 + $0x6]]
        %s1008 = sld [smem:[#allocation11 + $0x7]]
        %s1009 = sld [smem:[#allocation11 + $0x8]]
        %s1010 = sld [smem:[#allocation11 + $0x9]]
        %s1011 = sld [smem:[#allocation11 + $0xa]]
        %s1012 = sld [smem:[#allocation11 + $0xb]]
        %s1013 = sld [smem:[#allocation11 + $0xc]]
        %s1014 = sld [smem:[#allocation11 + $0xd]]
        %s1015 = sld [smem:[#allocation11 + $0xe]]
        %s1016 = sld [smem:[#allocation11 + $0xf]]
        %s1017 = sld [smem:[#allocation11 + $0x80]]
        %s1018 = sld [smem:[#allocation11 + $0x81]]
        %s1019 = sld [smem:[#allocation11 + $0x82]]
        %s1020 = sld [smem:[#allocation11 + $0x83]]
        %s1021 = sld [smem:[#allocation11 + $0x84]]
        %s1022 = sld [smem:[#allocation11 + $0x85]]
        %s1023 = sld [smem:[#allocation11 + $0x86]]
        %s1024 = sld [smem:[#allocation11 + $0x87]]
        %s1025 = sld [smem:[#allocation11 + $0x88]]
        %s1026 = sld [smem:[#allocation11 + $0x89]]
        %s1027 = sld [smem:[#allocation11 + $0x8a]]
        %s1028 = sld [smem:[#allocation11 + $0x8b]]
        %s1029 = sld [smem:[#allocation11 + $0x8c]]
        %s1030 = sld [smem:[#allocation11 + $0x8d]]
        %s1031 = sld [smem:[#allocation11 + $0x8e]]
        %s1032 = sld [smem:[#allocation11 + $0x8f]]
        %s1033 = sld [smem:[#allocation11 + $0x100]]
        %s1034 = sld [smem:[#allocation11 + $0x101]]
        %s1035 = sld [smem:[#allocation11 + $0x102]]
        %s1036 = sld [smem:[#allocation11 + $0x103]]
        %s1037 = sld [smem:[#allocation11 + $0x104]]
        %s1038 = sld [smem:[#allocation11 + $0x105]]
        %s1039 = sld [smem:[#allocation11 + $0x106]]
        %s1040 = sld [smem:[#allocation11 + $0x107]]
        %s1041 = sld [smem:[#allocation11 + $0x108]]
        %s1042 = sld [smem:[#allocation11 + $0x109]]
        %s1043 = sld [smem:[#allocation11 + $0x10a]]
        %s1044 = sld [smem:[#allocation11 + $0x10b]]
        %s1045 = sld [smem:[#allocation11 + $0x10c]]
        %s1046 = sld [smem:[#allocation11 + $0x10d]]
        %s1047 = sld [smem:[#allocation11 + $0x10e]]
        %s1048 = sld [smem:[#allocation11 + $0x10f]]
        %s1049 = sld [smem:[#allocation11 + $0x180]]
        %s1050 = sld [smem:[#allocation11 + $0x181]]
        %s1051 = sld [smem:[#allocation11 + $0x182]]
        %s1052 = sld [smem:[#allocation11 + $0x183]]
        %s1053 = sld [smem:[#allocation11 + $0x184]]
        %s1054 = sld [smem:[#allocation11 + $0x185]]
        %s1055 = sld [smem:[#allocation11 + $0x186]]
        %s1056 = sld [smem:[#allocation11 + $0x187]]
        %s1057 = sld [smem:[#allocation11 + $0x188]]
        %s1058 = sld [smem:[#allocation11 + $0x189]]
        %s1059 = sld [smem:[#allocation11 + $0x18a]]
        %s1060 = sld [smem:[#allocation11 + $0x18b]]
        %s1061 = sld [smem:[#allocation11 + $0x18c]]
        %s1062 = sld [smem:[#allocation11 + $0x18d]]
        %s1063 = sld [smem:[#allocation11 + $0x18e]]
        %s1064 = sld [smem:[#allocation11 + $0x18f]]
        %s1065 = sld [smem:[#allocation13]]
        %s1066 = sld [smem:[#allocation13 + $0x1]]
        %s1067 = sld [smem:[#allocation13 + $0x2]]
        %s1068 = sld [smem:[#allocation13 + $0x3]]
        %s1069 = sld [smem:[#allocation13 + $0x4]]
        %s1070 = sld [smem:[#allocation13 + $0x5]]
        %s1071 = sld [smem:[#allocation13 + $0x6]]
        %s1072 = sld [smem:[#allocation13 + $0x7]]
        %s1073 = sld [smem:[#allocation13 + $0x8]]
        %s1074 = sld [smem:[#allocation13 + $0x9]]
        %s1075 = sld [smem:[#allocation13 + $0xa]]
        %s1076 = sld [smem:[#allocation13 + $0xb]]
        %s1077 = sld [smem:[#allocation13 + $0xc]]
        %s1078 = sld [smem:[#allocation13 + $0xd]]
        %s1079 = sld [smem:[#allocation13 + $0xe]]
        %s1080 = sld [smem:[#allocation13 + $0xf]]
        %s1081 = sld [smem:[#allocation13 + $0x80]]
        %s1082 = sld [smem:[#allocation13 + $0x81]]
        %s1083 = sld [smem:[#allocation13 + $0x82]]
        %s1084 = sld [smem:[#allocation13 + $0x83]]
        %s1085 = sld [smem:[#allocation13 + $0x84]]
        %s1086 = sld [smem:[#allocation13 + $0x85]]
        %s1087 = sld [smem:[#allocation13 + $0x86]]
        %s1088 = sld [smem:[#allocation13 + $0x87]]
        %s1089 = sld [smem:[#allocation13 + $0x88]]
        %s1090 = sld [smem:[#allocation13 + $0x89]]
        %s1091 = sld [smem:[#allocation13 + $0x8a]]
        %s1092 = sld [smem:[#allocation13 + $0x8b]]
        %s1093 = sld [smem:[#allocation13 + $0x8c]]
        %s1094 = sld [smem:[#allocation13 + $0x8d]]
        %s1095 = sld [smem:[#allocation13 + $0x8e]]
        %s1096 = sld [smem:[#allocation13 + $0x8f]]
        %s1097 = sld [smem:[#allocation13 + $0x100]]
        %s1098 = sld [smem:[#allocation13 + $0x101]]
        %s1099 = sld [smem:[#allocation13 + $0x102]]
        %s1100 = sld [smem:[#allocation13 + $0x103]]
        %s1101 = sld [smem:[#allocation13 + $0x104]]
        %s1102 = sld [smem:[#allocation13 + $0x105]]
        %s1103 = sld [smem:[#allocation13 + $0x106]]
        %s1104 = sld [smem:[#allocation13 + $0x107]]
        %s1105 = sld [smem:[#allocation13 + $0x108]]
        %s1106 = sld [smem:[#allocation13 + $0x109]]
        %s1107 = sld [smem:[#allocation13 + $0x10a]]
        %s1108 = sld [smem:[#allocation13 + $0x10b]]
        %s1109 = sld [smem:[#allocation13 + $0x10c]]
        %s1110 = sld [smem:[#allocation13 + $0x10d]]
        %s1111 = sld [smem:[#allocation13 + $0x10e]]
        %s1112 = sld [smem:[#allocation13 + $0x10f]]
        %s1113 = sld [smem:[#allocation13 + $0x180]]
        %s1114 = sld [smem:[#allocation13 + $0x181]]
        %s1115 = sld [smem:[#allocation13 + $0x182]]
        %s1116 = sld [smem:[#allocation13 + $0x183]]
        %s1117 = sld [smem:[#allocation13 + $0x184]]
        %s1118 = sld [smem:[#allocation13 + $0x185]]
        %s1119 = sld [smem:[#allocation13 + $0x186]]
        %s1120 = sld [smem:[#allocation13 + $0x187]]
        %s1121 = sld [smem:[#allocation13 + $0x188]]
        %s1122 = sld [smem:[#allocation13 + $0x189]]
        %s1123 = sld [smem:[#allocation13 + $0x18a]]
        %s1124 = sld [smem:[#allocation13 + $0x18b]]
        %s1125 = sld [smem:[#allocation13 + $0x18c]]
        %s1126 = sld [smem:[#allocation13 + $0x18d]]
        %s1127 = sld [smem:[#allocation13 + $0x18e]]
        %s1128 = sld [smem:[#allocation13 + $0x18f]]
        %s1129 = sld [smem:[#allocation14]]
        %s1130 = sld [smem:[#allocation14 + $0x1]]
        %s1131 = sld [smem:[#allocation14 + $0x2]]
        %s1132 = sld [smem:[#allocation14 + $0x3]]
        %s1133 = sld [smem:[#allocation14 + $0x4]]
        %s1134 = sld [smem:[#allocation14 + $0x5]]
        %s1135 = sld [smem:[#allocation14 + $0x6]]
        %s1136 = sld [smem:[#allocation14 + $0x7]]
        %s1137 = sld [smem:[#allocation14 + $0x8]]
        %s1138 = sld [smem:[#allocation14 + $0x9]]
        %s1139 = sld [smem:[#allocation14 + $0xa]]
        %s1140 = sld [smem:[#allocation14 + $0xb]]
        %s1141 = sld [smem:[#allocation14 + $0xc]]
        %s1142 = sld [smem:[#allocation14 + $0xd]]
        %s1143 = sld [smem:[#allocation14 + $0xe]]
        %s1144 = sld [smem:[#allocation14 + $0xf]]
        %s1145 = sld [smem:[#allocation14 + $0x80]]
        %s1146 = sld [smem:[#allocation14 + $0x81]]
        %s1147 = sld [smem:[#allocation14 + $0x82]]
        %s1148 = sld [smem:[#allocation14 + $0x83]]
        %s1149 = sld [smem:[#allocation14 + $0x84]]
        %s1150 = sld [smem:[#allocation14 + $0x85]]
        %s1151 = sld [smem:[#allocation14 + $0x86]]
        %s1152 = sld [smem:[#allocation14 + $0x87]]
        %s1153 = sld [smem:[#allocation14 + $0x88]]
        %s1154 = sld [smem:[#allocation14 + $0x89]]
        %s1155 = sld [smem:[#allocation14 + $0x8a]]
        %s1156 = sld [smem:[#allocation14 + $0x8b]]
        %s1157 = sld [smem:[#allocation14 + $0x8c]]
        %s1158 = sld [smem:[#allocation14 + $0x8d]]
        %s1159 = sld [smem:[#allocation14 + $0x8e]]
        %s1160 = sld [smem:[#allocation14 + $0x8f]]
        %s1161 = sld [smem:[#allocation14 + $0x100]]
        %s1162 = sld [smem:[#allocation14 + $0x101]]
        %s1163 = sld [smem:[#allocation14 + $0x102]]
        %s1164 = sld [smem:[#allocation14 + $0x103]]
        %s1165 = sld [smem:[#allocation14 + $0x104]]
        %s1166 = sld [smem:[#allocation14 + $0x105]]
        %s1167 = sld [smem:[#allocation14 + $0x106]]
        %s1168 = sld [smem:[#allocation14 + $0x107]]
        %s1169 = sld [smem:[#allocation14 + $0x108]]
        %s1170 = sld [smem:[#allocation14 + $0x109]]
        %s1171 = sld [smem:[#allocation14 + $0x10a]]
        %s1172 = sld [smem:[#allocation14 + $0x10b]]
        %s1173 = sld [smem:[#allocation14 + $0x10c]]
        %s1174 = sld [smem:[#allocation14 + $0x10d]]
        %s1175 = sld [smem:[#allocation14 + $0x10e]]
        %s1176 = sld [smem:[#allocation14 + $0x10f]]
        %s1177 = sld [smem:[#allocation14 + $0x180]]
        %s1178 = sld [smem:[#allocation14 + $0x181]]
        %s1179 = sld [smem:[#allocation14 + $0x182]]
        %s1180 = sld [smem:[#allocation14 + $0x183]]
        %s1181 = sld [smem:[#allocation14 + $0x184]]
        %s1182 = sld [smem:[#allocation14 + $0x185]]
        %s1183 = sld [smem:[#allocation14 + $0x186]]
        %s1184 = sld [smem:[#allocation14 + $0x187]]
        %s1185 = sld [smem:[#allocation14 + $0x188]]
        %s1186 = sld [smem:[#allocation14 + $0x189]]
        %s1187 = sld [smem:[#allocation14 + $0x18a]]
        %s1188 = sld [smem:[#allocation14 + $0x18b]]
        %s1189 = sld [smem:[#allocation14 + $0x18c]]
        %s1190 = sld [smem:[#allocation14 + $0x18d]]
        %s1191 = sld [smem:[#allocation14 + $0x18e]]
        %s1192 = sld [smem:[#allocation14 + $0x18f]]
        %s1193 = sld [smem:[#allocation16]]
        %s1194 = sld [smem:[#allocation16 + $0x80]]
        %s1195 = sld [smem:[#allocation16 + $0x100]]
        %s1196 = sld [smem:[#allocation16 + $0x180]]
        %vm1197 = vcmask 64512
        %v1199 = vsel %vm1197, %v876, 0
        %v1202 = vsel %vm1197, %v936, 0
        %1204 = vmatprep.subr.bf16.mxu0 0
        %1205 = vmatpush1.bf16.xpose.msra.mxu0 0
        %1206 = vmatprep.subr.bf16.mxu0 0
        %1207 = vmatpush1.bf16.xpose.msra.mxu0 0
        %1208 = vmatprep.subr.bf16.mxu0 0
        %1209 = vmatpush1.bf16.xpose.msra.mxu0 0
        %1210 = vmatprep.subr.bf16.mxu0 0
        %1211 = vmatpush1.bf16.xpose.msra.mxu0 0
        %1212 = vmatprep.subr.bf16.mxu0 0
        %1213 = vmatpush1.bf16.xpose.msra.mxu0 0
        %1214 = vmatprep.subr.bf16.mxu0 0
        %1215 = vmatpush1.bf16.xpose.msra.mxu0 0
        %1216 = vmatprep.subr.bf16.mxu0 0
        %1217 = vmatpush1.bf16.xpose.msra.mxu0 0
        %1218 = vmatprep.subr.bf16.mxu0 0
        %1219 = vmatpush1.bf16.xpose.msra.mxu0 %v1202
        %1220 = vmatprep.subr.bf16.mxu0 0
        %1221 = vmatpush2.bf16.xpose.msra.mxu0 0
        %1222 = vmatprep.subr.bf16.mxu0 0
        %1223 = vmatpush2.bf16.xpose.msra.mxu0 0
        %1224 = vmatprep.subr.bf16.mxu0 0
        %1225 = vmatpush2.bf16.xpose.msra.mxu0 0
        %1226 = vmatprep.subr.bf16.mxu0 0
        %1227 = vmatpush2.bf16.xpose.msra.mxu0 0
        %1228 = vmatprep.subr.bf16.mxu0 0
        %1229 = vmatpush2.bf16.xpose.msra.mxu0 0
        %1230 = vmatprep.subr.bf16.mxu0 0
        %1231 = vmatpush2.bf16.xpose.msra.mxu0 0
        %1232 = vmatprep.subr.bf16.mxu0 0
        %1233 = vmatpush2.bf16.xpose.msra.mxu0 0
        %1234 = vmatprep.subr.bf16.mxu0 0
        %1235 = vmatpush2.bf16.xpose.msra.mxu0 0
        %1236 = vmatprep.mubr.bf16.mxu0 0
        %1237 = vmatmul.mubr.bf16.gmra.mxu0 %v1199
        %v1238 = vpop.f32.mrf.mxu0
        %v1239 = vadd.f32 0.0, %v1238
        %v1240 = vpop.f32.mrf.mxu0
        %v1241 = vpop.f32.mrf.mxu0
        %v1242 = vpop.f32.mrf.mxu0
        %1243 = vdwg.mxu0
        %v1244 = vstv %s1193
        %v1245 = vstv %s937
        %v1246 = vmul.f32 %v1239, %v1245
        %v1247 = vstv %s1001
        %v1248 = vmul.f32 %v813, %v1247
        %v1249 = vadd.f32 %v1246, %v1248
        %v1250 = vstv %s1065
        %v1251 = vadd.f32 %v1249, %v1250
        %v1252 = vmax.f32 %v1251, 0.0
        %v1253 = vstv %s1129
        %v1254 = vmul.f32 %v1252, %v1253
        %v1255 = vadd.f32 %v1244, %v1254
        %v1256 = vstv %s938
        %v1257 = vmul.f32 %v1239, %v1256
        %v1258 = vstv %s1002
        %v1259 = vmul.f32 %v813, %v1258
        %v1260 = vadd.f32 %v1257, %v1259
        %v1261 = vstv %s1066
        %v1262 = vadd.f32 %v1260, %v1261
        %v1263 = vmax.f32 %v1262, 0.0
        %v1264 = vstv %s1130
        %v1265 = vmul.f32 %v1263, %v1264
        %v1266 = vadd.f32 %v1255, %v1265
        %v1267 = vstv %s939
        %v1268 = vmul.f32 %v1239, %v1267
        %v1269 = vstv %s1003
        %v1270 = vmul.f32 %v813, %v1269
        %v1271 = vadd.f32 %v1268, %v1270
        %v1272 = vstv %s1067
        %v1273 = vadd.f32 %v1271, %v1272
        %v1274 = vmax.f32 %v1273, 0.0
        %v1275 = vstv %s1131
        %v1276 = vmul.f32 %v1274, %v1275
        %v1277 = vadd.f32 %v1266, %v1276
        %v1278 = vstv %s940
        %v1279 = vmul.f32 %v1239, %v1278
        %v1280 = vstv %s1004
        %v1281 = vmul.f32 %v813, %v1280
        %v1282 = vadd.f32 %v1279, %v1281
        %v1283 = vstv %s1068
        %v1284 = vadd.f32 %v1282, %v1283
        %v1285 = vmax.f32 %v1284, 0.0
        %v1286 = vstv %s1132
        %v1287 = vmul.f32 %v1285, %v1286
        %v1288 = vadd.f32 %v1277, %v1287
        %v1289 = vstv %s941
        %v1290 = vmul.f32 %v1239, %v1289
        %v1291 = vstv %s1005
        %v1292 = vmul.f32 %v813, %v1291
        %v1293 = vadd.f32 %v1290, %v1292
        %v1294 = vstv %s1069
        %v1295 = vadd.f32 %v1293, %v1294
        %v1296 = vmax.f32 %v1295, 0.0
        %v1297 = vstv %s1133
        %v1298 = vmul.f32 %v1296, %v1297
        %v1299 = vadd.f32 %v1288, %v1298
        %v1300 = vstv %s942
        %v1301 = vmul.f32 %v1239, %v1300
        %v1302 = vstv %s1006
        %v1303 = vmul.f32 %v813, %v1302
        %v1304 = vadd.f32 %v1301, %v1303
        %v1305 = vstv %s1070
        %v1306 = vadd.f32 %v1304, %v1305
        %v1307 = vmax.f32 %v1306, 0.0
        %v1308 = vstv %s1134
        %v1309 = vmul.f32 %v1307, %v1308
        %v1310 = vadd.f32 %v1299, %v1309
        %v1311 = vstv %s943
        %v1312 = vmul.f32 %v1239, %v1311
        %v1313 = vstv %s1007
        %v1314 = vmul.f32 %v813, %v1313
        %v1315 = vadd.f32 %v1312, %v1314
        %v1316 = vstv %s1071
        %v1317 = vadd.f32 %v1315, %v1316
        %v1318 = vmax.f32 %v1317, 0.0
        %v1319 = vstv %s1135
        %v1320 = vmul.f32 %v1318, %v1319
        %v1321 = vadd.f32 %v1310, %v1320
        %v1322 = vstv %s944
        %v1323 = vmul.f32 %v1239, %v1322
        %v1324 = vstv %s1008
        %v1325 = vmul.f32 %v813, %v1324
        %v1326 = vadd.f32 %v1323, %v1325
        %v1327 = vstv %s1072
        %v1328 = vadd.f32 %v1326, %v1327
        %v1329 = vmax.f32 %v1328, 0.0
        %v1330 = vstv %s1136
        %v1331 = vmul.f32 %v1329, %v1330
        %v1332 = vadd.f32 %v1321, %v1331
        %v1333 = vstv %s945
        %v1334 = vmul.f32 %v1239, %v1333
        %v1335 = vstv %s1009
        %v1336 = vmul.f32 %v813, %v1335
        %v1337 = vadd.f32 %v1334, %v1336
        %v1338 = vstv %s1073
        %v1339 = vadd.f32 %v1337, %v1338
        %v1340 = vmax.f32 %v1339, 0.0
        %v1341 = vstv %s1137
        %v1342 = vmul.f32 %v1340, %v1341
        %v1343 = vadd.f32 %v1332, %v1342
        %v1344 = vstv %s946
        %v1345 = vmul.f32 %v1239, %v1344
        %v1346 = vstv %s1010
        %v1347 = vmul.f32 %v813, %v1346
        %v1348 = vadd.f32 %v1345, %v1347
        %v1349 = vstv %s1074
        %v1350 = vadd.f32 %v1348, %v1349
        %v1351 = vmax.f32 %v1350, 0.0
        %v1352 = vstv %s1138
        %v1353 = vmul.f32 %v1351, %v1352
        %v1354 = vadd.f32 %v1343, %v1353
        %v1355 = vstv %s947
        %v1356 = vmul.f32 %v1239, %v1355
        %v1357 = vstv %s1011
        %v1358 = vmul.f32 %v813, %v1357
        %v1359 = vadd.f32 %v1356, %v1358
        %v1360 = vstv %s1075
        %v1361 = vadd.f32 %v1359, %v1360
        %v1362 = vmax.f32 %v1361, 0.0
        %v1363 = vstv %s1139
        %v1364 = vmul.f32 %v1362, %v1363
        %v1365 = vadd.f32 %v1354, %v1364
        %v1366 = vstv %s948
        %v1367 = vmul.f32 %v1239, %v1366
        %v1368 = vstv %s1012
        %v1369 = vmul.f32 %v813, %v1368
        %v1370 = vadd.f32 %v1367, %v1369
        %v1371 = vstv %s1076
        %v1372 = vadd.f32 %v1370, %v1371
        %v1373 = vmax.f32 %v1372, 0.0
        %v1374 = vstv %s1140
        %v1375 = vmul.f32 %v1373, %v1374
        %v1376 = vadd.f32 %v1365, %v1375
        %v1377 = vstv %s949
        %v1378 = vmul.f32 %v1239, %v1377
        %v1379 = vstv %s1013
        %v1380 = vmul.f32 %v813, %v1379
        %v1381 = vadd.f32 %v1378, %v1380
        %v1382 = vstv %s1077
        %v1383 = vadd.f32 %v1381, %v1382
        %v1384 = vmax.f32 %v1383, 0.0
        %v1385 = vstv %s1141
        %v1386 = vmul.f32 %v1384, %v1385
        %v1387 = vadd.f32 %v1376, %v1386
        %v1388 = vstv %s950
        %v1389 = vmul.f32 %v1239, %v1388
        %v1390 = vstv %s1014
        %v1391 = vmul.f32 %v813, %v1390
        %v1392 = vadd.f32 %v1389, %v1391
        %v1393 = vstv %s1078
        %v1394 = vadd.f32 %v1392, %v1393
        %v1395 = vmax.f32 %v1394, 0.0
        %v1396 = vstv %s1142
        %v1397 = vmul.f32 %v1395, %v1396
        %v1398 = vadd.f32 %v1387, %v1397
        %v1399 = vstv %s951
        %v1400 = vmul.f32 %v1239, %v1399
        %v1401 = vstv %s1015
        %v1402 = vmul.f32 %v813, %v1401
        %v1403 = vadd.f32 %v1400, %v1402
        %v1404 = vstv %s1079
        %v1405 = vadd.f32 %v1403, %v1404
        %v1406 = vmax.f32 %v1405, 0.0
        %v1407 = vstv %s1143
        %v1408 = vmul.f32 %v1406, %v1407
        %v1409 = vadd.f32 %v1398, %v1408
        %v1410 = vstv %s952
        %v1411 = vmul.f32 %v1239, %v1410
        %v1412 = vstv %s1016
        %v1413 = vmul.f32 %v813, %v1412
        %v1414 = vadd.f32 %v1411, %v1413
        %v1415 = vstv %s1080
        %v1416 = vadd.f32 %v1414, %v1415
        %v1417 = vmax.f32 %v1416, 0.0
        %v1418 = vstv %s1144
        %v1419 = vmul.f32 %v1417, %v1418
        %v1420 = vadd.f32 %v1409, %v1419
        %v1421 = vsel %vm1197, %v1420, -inf
        %1422 = vmax.xlane.f32.xlu0 %v1421
        %v1423 = vpop.xlane.xlu0 %1422
        %v1424 = vsub.f32 %v1420, %v1423
        %v1425 = vmul.f32 %v1424, 1.442695
        %v1426 = vpow.pop %v1425
        %v1427 = vsel %vm1197, %v1426, 0.0
        %1428 = vadd.xlane.f32.xlu0 %v1427
        %v1429 = vpop.xlane.xlu0 %1428
        %v1430 = vrcp.pop %v1429
        %v1431 = vmul.f32 %v1426, %v1430
        %v1432 = vpack.c.bf16 %v1431, %v1431
        %1434 = vrot.lane.b32.xlu0 %v936, 96
        %v1435 = vpop.permute.xlu0 %1434
        %v1437 = vsel %vm1197, %v1432, 0
        %vm1439 = vcmask 1043456
        %v1441 = vsel %vm1439, %v1435, 0
        %1443 = vmatprep.subr.bf16.mxu0 0
        %1444 = vmatpush1.bf16.msra.mxu0 0
        %1445 = vmatprep.subr.bf16.mxu0 0
        %1446 = vmatpush1.bf16.msra.mxu0 0
        %1447 = vmatprep.subr.bf16.mxu0 0
        %1448 = vmatpush1.bf16.msra.mxu0 0
        %1449 = vmatprep.subr.bf16.mxu0 0
        %1450 = vmatpush1.bf16.msra.mxu0 0
        %1451 = vmatprep.subr.bf16.mxu0 0
        %1452 = vmatpush1.bf16.msra.mxu0 0
        %1453 = vmatprep.subr.bf16.mxu0 0
        %1454 = vmatpush1.bf16.msra.mxu0 0
        %1455 = vmatprep.subr.bf16.mxu0 0
        %1456 = vmatpush1.bf16.msra.mxu0 0
        %1457 = vmatprep.subr.bf16.mxu0 0
        %1458 = vmatpush1.bf16.msra.mxu0 %v1441
        %1459 = vmatprep.subr.bf16.mxu0 0
        %1460 = vmatpush2.bf16.msra.mxu0 0
        %1461 = vmatprep.subr.bf16.mxu0 0
        %1462 = vmatpush2.bf16.msra.mxu0 0
        %1463 = vmatprep.subr.bf16.mxu0 0
        %1464 = vmatpush2.bf16.msra.mxu0 0
        %1465 = vmatprep.subr.bf16.mxu0 0
        %1466 = vmatpush2.bf16.msra.mxu0 0
        %1467 = vmatprep.subr.bf16.mxu0 0
        %1468 = vmatpush2.bf16.msra.mxu0 0
        %1469 = vmatprep.subr.bf16.mxu0 0
        %1470 = vmatpush2.bf16.msra.mxu0 0
        %1471 = vmatprep.subr.bf16.mxu0 0
        %1472 = vmatpush2.bf16.msra.mxu0 0
        %1473 = vmatprep.subr.bf16.mxu0 0
        %1474 = vmatpush2.bf16.msra.mxu0 0
        %1475 = vmatprep.mubr.bf16.mxu0 0
        %1476 = vmatmul.mubr.bf16.gmra.mxu0 %v1437
        %v1477 = vpop.f32.mrf.mxu0
        %v1478 = vadd.f32 0.0, %v1477
        %v1479 = vpop.f32.mrf.mxu0
        %v1480 = vpop.f32.mrf.mxu0
        %v1481 = vpop.f32.mrf.mxu0
        %1482 = vdwg.mxu0
        %1483 = vst.msk [vmem:[#allocation2] sm:$0xff] %vm1197, %v1478
        %1485 = vrot.lane.b32.xlu0 %v876, 120
        %v1486 = vpop.permute.xlu0 %1485
        %1487 = vrot.lane.b32.xlu0 %v936, 120
        %v1488 = vpop.permute.xlu0 %1487
        %v1490 = vsel %vm1197, %v1486, 0
        %v1493 = vsel %vm1197, %v1488, 0
        %1495 = vmatprep.subr.bf16.mxu0 0
        %1496 = vmatpush1.bf16.xpose.msra.mxu0 0
        %1497 = vmatprep.subr.bf16.mxu0 0
        %1498 = vmatpush1.bf16.xpose.msra.mxu0 0
        %1499 = vmatprep.subr.bf16.mxu0 0
        %1500 = vmatpush1.bf16.xpose.msra.mxu0 0
        %1501 = vmatprep.subr.bf16.mxu0 0
        %1502 = vmatpush1.bf16.xpose.msra.mxu0 0
        %1503 = vmatprep.subr.bf16.mxu0 0
        %1504 = vmatpush1.bf16.xpose.msra.mxu0 0
        %1505 = vmatprep.subr.bf16.mxu0 0
        %1506 = vmatpush1.bf16.xpose.msra.mxu0 0
        %1507 = vmatprep.subr.bf16.mxu0 0
        %1508 = vmatpush1.bf16.xpose.msra.mxu0 0
        %1509 = vmatprep.subr.bf16.mxu0 0
        %1510 = vmatpush1.bf16.xpose.msra.mxu0 %v1493
        %1511 = vmatprep.subr.bf16.mxu0 0
        %1512 = vmatpush2.bf16.xpose.msra.mxu0 0
        %1513 = vmatprep.subr.bf16.mxu0 0
        %1514 = vmatpush2.bf16.xpose.msra.mxu0 0
        %1515 = vmatprep.subr.bf16.mxu0 0
        %1516 = vmatpush2.bf16.xpose.msra.mxu0 0
        %1517 = vmatprep.subr.bf16.mxu0 0
        %1518 = vmatpush2.bf16.xpose.msra.mxu0 0
        %1519 = vmatprep.subr.bf16.mxu0 0
        %1520 = vmatpush2.bf16.xpose.msra.mxu0 0
        %1521 = vmatprep.subr.bf16.mxu0 0
        %1522 = vmatpush2.bf16.xpose.msra.mxu0 0
        %1523 = vmatprep.subr.bf16.mxu0 0
        %1524 = vmatpush2.bf16.xpose.msra.mxu0 0
        %1525 = vmatprep.subr.bf16.mxu0 0
        %1526 = vmatpush2.bf16.xpose.msra.mxu0 0
        %1527 = vmatprep.mubr.bf16.mxu0 0
        %1528 = vmatmul.mubr.bf16.gmra.mxu0 %v1490
        %v1529 = vpop.f32.mrf.mxu0
        %v1530 = vadd.f32 0.0, %v1529
        %v1531 = vpop.f32.mrf.mxu0
        %v1532 = vpop.f32.mrf.mxu0
        %v1533 = vpop.f32.mrf.mxu0
        %1534 = vdwg.mxu0
        %v1535 = vstv %s1194
        %v1536 = vstv %s953
        %v1537 = vmul.f32 %v1530, %v1536
        %v1538 = vstv %s1017
        %v1539 = vmul.f32 %v813, %v1538
        %v1540 = vadd.f32 %v1537, %v1539
        %v1541 = vstv %s1081
        %v1542 = vadd.f32 %v1540, %v1541
        %v1543 = vmax.f32 %v1542, 0.0
        %v1544 = vstv %s1145
        %v1545 = vmul.f32 %v1543, %v1544
        %v1546 = vadd.f32 %v1535, %v1545
        %v1547 = vstv %s954
        %v1548 = vmul.f32 %v1530, %v1547
        %v1549 = vstv %s1018
        %v1550 = vmul.f32 %v813, %v1549
        %v1551 = vadd.f32 %v1548, %v1550
        %v1552 = vstv %s1082
        %v1553 = vadd.f32 %v1551, %v1552
        %v1554 = vmax.f32 %v1553, 0.0
        %v1555 = vstv %s1146
        %v1556 = vmul.f32 %v1554, %v1555
        %v1557 = vadd.f32 %v1546, %v1556
        %v1558 = vstv %s955
        %v1559 = vmul.f32 %v1530, %v1558
        %v1560 = vstv %s1019
        %v1561 = vmul.f32 %v813, %v1560
        %v1562 = vadd.f32 %v1559, %v1561
        %v1563 = vstv %s1083
        %v1564 = vadd.f32 %v1562, %v1563
        %v1565 = vmax.f32 %v1564, 0.0
        %v1566 = vstv %s1147
        %v1567 = vmul.f32 %v1565, %v1566
        %v1568 = vadd.f32 %v1557, %v1567
        %v1569 = vstv %s956
        %v1570 = vmul.f32 %v1530, %v1569
        %v1571 = vstv %s1020
        %v1572 = vmul.f32 %v813, %v1571
        %v1573 = vadd.f32 %v1570, %v1572
        %v1574 = vstv %s1084
        %v1575 = vadd.f32 %v1573, %v1574
        %v1576 = vmax.f32 %v1575, 0.0
        %v1577 = vstv %s1148
        %v1578 = vmul.f32 %v1576, %v1577
        %v1579 = vadd.f32 %v1568, %v1578
        %v1580 = vstv %s957
        %v1581 = vmul.f32 %v1530, %v1580
        %v1582 = vstv %s1021
        %v1583 = vmul.f32 %v813, %v1582
        %v1584 = vadd.f32 %v1581, %v1583
        %v1585 = vstv %s1085
        %v1586 = vadd.f32 %v1584, %v1585
        %v1587 = vmax.f32 %v1586, 0.0
        %v1588 = vstv %s1149
        %v1589 = vmul.f32 %v1587, %v1588
        %v1590 = vadd.f32 %v1579, %v1589
        %v1591 = vstv %s958
        %v1592 = vmul.f32 %v1530, %v1591
        %v1593 = vstv %s1022
        %v1594 = vmul.f32 %v813, %v1593
        %v1595 = vadd.f32 %v1592, %v1594
        %v1596 = vstv %s1086
        %v1597 = vadd.f32 %v1595, %v1596
        %v1598 = vmax.f32 %v1597, 0.0
        %v1599 = vstv %s1150
        %v1600 = vmul.f32 %v1598, %v1599
        %v1601 = vadd.f32 %v1590, %v1600
        %v1602 = vstv %s959
        %v1603 = vmul.f32 %v1530, %v1602
        %v1604 = vstv %s1023
        %v1605 = vmul.f32 %v813, %v1604
        %v1606 = vadd.f32 %v1603, %v1605
        %v1607 = vstv %s1087
        %v1608 = vadd.f32 %v1606, %v1607
        %v1609 = vmax.f32 %v1608, 0.0
        %v1610 = vstv %s1151
        %v1611 = vmul.f32 %v1609, %v1610
        %v1612 = vadd.f32 %v1601, %v1611
        %v1613 = vstv %s960
        %v1614 = vmul.f32 %v1530, %v1613
        %v1615 = vstv %s1024
        %v1616 = vmul.f32 %v813, %v1615
        %v1617 = vadd.f32 %v1614, %v1616
        %v1618 = vstv %s1088
        %v1619 = vadd.f32 %v1617, %v1618
        %v1620 = vmax.f32 %v1619, 0.0
        %v1621 = vstv %s1152
        %v1622 = vmul.f32 %v1620, %v1621
        %v1623 = vadd.f32 %v1612, %v1622
        %v1624 = vstv %s961
        %v1625 = vmul.f32 %v1530, %v1624
        %v1626 = vstv %s1025
        %v1627 = vmul.f32 %v813, %v1626
        %v1628 = vadd.f32 %v1625, %v1627
        %v1629 = vstv %s1089
        %v1630 = vadd.f32 %v1628, %v1629
        %v1631 = vmax.f32 %v1630, 0.0
        %v1632 = vstv %s1153
        %v1633 = vmul.f32 %v1631, %v1632
        %v1634 = vadd.f32 %v1623, %v1633
        %v1635 = vstv %s962
        %v1636 = vmul.f32 %v1530, %v1635
        %v1637 = vstv %s1026
        %v1638 = vmul.f32 %v813, %v1637
        %v1639 = vadd.f32 %v1636, %v1638
        %v1640 = vstv %s1090
        %v1641 = vadd.f32 %v1639, %v1640
        %v1642 = vmax.f32 %v1641, 0.0
        %v1643 = vstv %s1154
        %v1644 = vmul.f32 %v1642, %v1643
        %v1645 = vadd.f32 %v1634, %v1644
        %v1646 = vstv %s963
        %v1647 = vmul.f32 %v1530, %v1646
        %v1648 = vstv %s1027
        %v1649 = vmul.f32 %v813, %v1648
        %v1650 = vadd.f32 %v1647, %v1649
        %v1651 = vstv %s1091
        %v1652 = vadd.f32 %v1650, %v1651
        %v1653 = vmax.f32 %v1652, 0.0
        %v1654 = vstv %s1155
        %v1655 = vmul.f32 %v1653, %v1654
        %v1656 = vadd.f32 %v1645, %v1655
        %v1657 = vstv %s964
        %v1658 = vmul.f32 %v1530, %v1657
        %v1659 = vstv %s1028
        %v1660 = vmul.f32 %v813, %v1659
        %v1661 = vadd.f32 %v1658, %v1660
        %v1662 = vstv %s1092
        %v1663 = vadd.f32 %v1661, %v1662
        %v1664 = vmax.f32 %v1663, 0.0
        %v1665 = vstv %s1156
        %v1666 = vmul.f32 %v1664, %v1665
        %v1667 = vadd.f32 %v1656, %v1666
        %v1668 = vstv %s965
        %v1669 = vmul.f32 %v1530, %v1668
        %v1670 = vstv %s1029
        %v1671 = vmul.f32 %v813, %v1670
        %v1672 = vadd.f32 %v1669, %v1671
        %v1673 = vstv %s1093
        %v1674 = vadd.f32 %v1672, %v1673
        %v1675 = vmax.f32 %v1674, 0.0
        %v1676 = vstv %s1157
        %v1677 = vmul.f32 %v1675, %v1676
        %v1678 = vadd.f32 %v1667, %v1677
        %v1679 = vstv %s966
        %v1680 = vmul.f32 %v1530, %v1679
        %v1681 = vstv %s1030
        %v1682 = vmul.f32 %v813, %v1681
        %v1683 = vadd.f32 %v1680, %v1682
        %v1684 = vstv %s1094
        %v1685 = vadd.f32 %v1683, %v1684
        %v1686 = vmax.f32 %v1685, 0.0
        %v1687 = vstv %s1158
        %v1688 = vmul.f32 %v1686, %v1687
        %v1689 = vadd.f32 %v1678, %v1688
        %v1690 = vstv %s967
        %v1691 = vmul.f32 %v1530, %v1690
        %v1692 = vstv %s1031
        %v1693 = vmul.f32 %v813, %v1692
        %v1694 = vadd.f32 %v1691, %v1693
        %v1695 = vstv %s1095
        %v1696 = vadd.f32 %v1694, %v1695
        %v1697 = vmax.f32 %v1696, 0.0
        %v1698 = vstv %s1159
        %v1699 = vmul.f32 %v1697, %v1698
        %v1700 = vadd.f32 %v1689, %v1699
        %v1701 = vstv %s968
        %v1702 = vmul.f32 %v1530, %v1701
        %v1703 = vstv %s1032
        %v1704 = vmul.f32 %v813, %v1703
        %v1705 = vadd.f32 %v1702, %v1704
        %v1706 = vstv %s1096
        %v1707 = vadd.f32 %v1705, %v1706
        %v1708 = vmax.f32 %v1707, 0.0
        %v1709 = vstv %s1160
        %v1710 = vmul.f32 %v1708, %v1709
        %v1711 = vadd.f32 %v1700, %v1710
        %v1712 = vsel %vm1197, %v1711, -inf
        %1713 = vmax.xlane.f32.xlu0 %v1712
        %v1714 = vpop.xlane.xlu0 %1713
        %v1715 = vsub.f32 %v1711, %v1714
        %v1716 = vmul.f32 %v1715, 1.442695
        %v1717 = vpow.pop %v1716
        %v1718 = vsel %vm1197, %v1717, 0.0
        %1719 = vadd.xlane.f32.xlu0 %v1718
        %v1720 = vpop.xlane.xlu0 %1719
        %v1721 = vrcp.pop %v1720
        %v1722 = vmul.f32 %v1717, %v1721
        %v1723 = vpack.c.bf16 %v1722, %v1722
        %1724 = vrot.lane.b32.xlu0 %v936, 88
        %v1725 = vpop.permute.xlu0 %1724
        %v1727 = vsel %vm1197, %v1723, 0
        %v1730 = vsel %vm1439, %v1725, 0
        %1732 = vmatprep.subr.bf16.mxu0 0
        %1733 = vmatpush1.bf16.msra.mxu0 0
        %1734 = vmatprep.subr.bf16.mxu0 0
        %1735 = vmatpush1.bf16.msra.mxu0 0
        %1736 = vmatprep.subr.bf16.mxu0 0
        %1737 = vmatpush1.bf16.msra.mxu0 0
        %1738 = vmatprep.subr.bf16.mxu0 0
        %1739 = vmatpush1.bf16.msra.mxu0 0
        %1740 = vmatprep.subr.bf16.mxu0 0
        %1741 = vmatpush1.bf16.msra.mxu0 0
        %1742 = vmatprep.subr.bf16.mxu0 0
        %1743 = vmatpush1.bf16.msra.mxu0 0
        %1744 = vmatprep.subr.bf16.mxu0 0
        %1745 = vmatpush1.bf16.msra.mxu0 0
        %1746 = vmatprep.subr.bf16.mxu0 0
        %1747 = vmatpush1.bf16.msra.mxu0 %v1730
        %1748 = vmatprep.subr.bf16.mxu0 0
        %1749 = vmatpush2.bf16.msra.mxu0 0
        %1750 = vmatprep.subr.bf16.mxu0 0
        %1751 = vmatpush2.bf16.msra.mxu0 0
        %1752 = vmatprep.subr.bf16.mxu0 0
        %1753 = vmatpush2.bf16.msra.mxu0 0
        %1754 = vmatprep.subr.bf16.mxu0 0
        %1755 = vmatpush2.bf16.msra.mxu0 0
        %1756 = vmatprep.subr.bf16.mxu0 0
        %1757 = vmatpush2.bf16.msra.mxu0 0
        %1758 = vmatprep.subr.bf16.mxu0 0
        %1759 = vmatpush2.bf16.msra.mxu0 0
        %1760 = vmatprep.subr.bf16.mxu0 0
        %1761 = vmatpush2.bf16.msra.mxu0 0
        %1762 = vmatprep.subr.bf16.mxu0 0
        %1763 = vmatpush2.bf16.msra.mxu0 0
        %1764 = vmatprep.mubr.bf16.mxu0 0
        %1765 = vmatmul.mubr.bf16.gmra.mxu0 %v1727
        %v1766 = vpop.f32.mrf.mxu0
        %v1767 = vadd.f32 0.0, %v1766
        %v1768 = vpop.f32.mrf.mxu0
        %v1769 = vpop.f32.mrf.mxu0
        %v1770 = vpop.f32.mrf.mxu0
        %1771 = vdwg.mxu0
        %1773 = vrot.lane.b32.xlu0 %v1767, 8
        %v1774 = vpop.permute.xlu0 %1773
        %vm1776 = vcmask 130112
        %1777 = vst.msk [vmem:[#allocation2] sm:$0xff] %vm1776, %v1774
        %1778 = vrot.lane.b32.xlu0 %v876, 112
        %v1779 = vpop.permute.xlu0 %1778
        %1780 = vrot.lane.b32.xlu0 %v936, 112
        %v1781 = vpop.permute.xlu0 %1780
        %v1783 = vsel %vm1197, %v1779, 0
        %v1786 = vsel %vm1197, %v1781, 0
        %1788 = vmatprep.subr.bf16.mxu0 0
        %1789 = vmatpush1.bf16.xpose.msra.mxu0 0
        %1790 = vmatprep.subr.bf16.mxu0 0
        %1791 = vmatpush1.bf16.xpose.msra.mxu0 0
        %1792 = vmatprep.subr.bf16.mxu0 0
        %1793 = vmatpush1.bf16.xpose.msra.mxu0 0
        %1794 = vmatprep.subr.bf16.mxu0 0
        %1795 = vmatpush1.bf16.xpose.msra.mxu0 0
        %1796 = vmatprep.subr.bf16.mxu0 0
        %1797 = vmatpush1.bf16.xpose.msra.mxu0 0
        %1798 = vmatprep.subr.bf16.mxu0 0
        %1799 = vmatpush1.bf16.xpose.msra.mxu0 0
        %1800 = vmatprep.subr.bf16.mxu0 0
        %1801 = vmatpush1.bf16.xpose.msra.mxu0 0
        %1802 = vmatprep.subr.bf16.mxu0 0
        %1803 = vmatpush1.bf16.xpose.msra.mxu0 %v1786
        %1804 = vmatprep.subr.bf16.mxu0 0
        %1805 = vmatpush2.bf16.xpose.msra.mxu0 0
        %1806 = vmatprep.subr.bf16.mxu0 0
        %1807 = vmatpush2.bf16.xpose.msra.mxu0 0
        %1808 = vmatprep.subr.bf16.mxu0 0
        %1809 = vmatpush2.bf16.xpose.msra.mxu0 0
        %1810 = vmatprep.subr.bf16.mxu0 0
        %1811 = vmatpush2.bf16.xpose.msra.mxu0 0
        %1812 = vmatprep.subr.bf16.mxu0 0
        %1813 = vmatpush2.bf16.xpose.msra.mxu0 0
        %1814 = vmatprep.subr.bf16.mxu0 0
        %1815 = vmatpush2.bf16.xpose.msra.mxu0 0
        %1816 = vmatprep.subr.bf16.mxu0 0
        %1817 = vmatpush2.bf16.xpose.msra.mxu0 0
        %1818 = vmatprep.subr.bf16.mxu0 0
        %1819 = vmatpush2.bf16.xpose.msra.mxu0 0
        %1820 = vmatprep.mubr.bf16.mxu0 0
        %1821 = vmatmul.mubr.bf16.gmra.mxu0 %v1783
        %v1822 = vpop.f32.mrf.mxu0
        %v1823 = vadd.f32 0.0, %v1822
        %v1824 = vpop.f32.mrf.mxu0
        %v1825 = vpop.f32.mrf.mxu0
        %v1826 = vpop.f32.mrf.mxu0
        %1827 = vdwg.mxu0
        %v1828 = vstv %s1195
        %v1829 = vstv %s969
        %v1830 = vmul.f32 %v1823, %v1829
        %v1831 = vstv %s1033
        %v1832 = vmul.f32 %v813, %v1831
        %v1833 = vadd.f32 %v1830, %v1832
        %v1834 = vstv %s1097
        %v1835 = vadd.f32 %v1833, %v1834
        %v1836 = vmax.f32 %v1835, 0.0
        %v1837 = vstv %s1161
        %v1838 = vmul.f32 %v1836, %v1837
        %v1839 = vadd.f32 %v1828, %v1838
        %v1840 = vstv %s970
        %v1841 = vmul.f32 %v1823, %v1840
        %v1842 = vstv %s1034
        %v1843 = vmul.f32 %v813, %v1842
        %v1844 = vadd.f32 %v1841, %v1843
        %v1845 = vstv %s1098
        %v1846 = vadd.f32 %v1844, %v1845
        %v1847 = vmax.f32 %v1846, 0.0
        %v1848 = vstv %s1162
        %v1849 = vmul.f32 %v1847, %v1848
        %v1850 = vadd.f32 %v1839, %v1849
        %v1851 = vstv %s971
        %v1852 = vmul.f32 %v1823, %v1851
        %v1853 = vstv %s1035
        %v1854 = vmul.f32 %v813, %v1853
        %v1855 = vadd.f32 %v1852, %v1854
        %v1856 = vstv %s1099
        %v1857 = vadd.f32 %v1855, %v1856
        %v1858 = vmax.f32 %v1857, 0.0
        %v1859 = vstv %s1163
        %v1860 = vmul.f32 %v1858, %v1859
        %v1861 = vadd.f32 %v1850, %v1860
        %v1862 = vstv %s972
        %v1863 = vmul.f32 %v1823, %v1862
        %v1864 = vstv %s1036
        %v1865 = vmul.f32 %v813, %v1864
        %v1866 = vadd.f32 %v1863, %v1865
        %v1867 = vstv %s1100
        %v1868 = vadd.f32 %v1866, %v1867
        %v1869 = vmax.f32 %v1868, 0.0
        %v1870 = vstv %s1164
        %v1871 = vmul.f32 %v1869, %v1870
        %v1872 = vadd.f32 %v1861, %v1871
        %v1873 = vstv %s973
        %v1874 = vmul.f32 %v1823, %v1873
        %v1875 = vstv %s1037
        %v1876 = vmul.f32 %v813, %v1875
        %v1877 = vadd.f32 %v1874, %v1876
        %v1878 = vstv %s1101
        %v1879 = vadd.f32 %v1877, %v1878
        %v1880 = vmax.f32 %v1879, 0.0
        %v1881 = vstv %s1165
        %v1882 = vmul.f32 %v1880, %v1881
        %v1883 = vadd.f32 %v1872, %v1882
        %v1884 = vstv %s974
        %v1885 = vmul.f32 %v1823, %v1884
        %v1886 = vstv %s1038
        %v1887 = vmul.f32 %v813, %v1886
        %v1888 = vadd.f32 %v1885, %v1887
        %v1889 = vstv %s1102
        %v1890 = vadd.f32 %v1888, %v1889
        %v1891 = vmax.f32 %v1890, 0.0
        %v1892 = vstv %s1166
        %v1893 = vmul.f32 %v1891, %v1892
        %v1894 = vadd.f32 %v1883, %v1893
        %v1895 = vstv %s975
        %v1896 = vmul.f32 %v1823, %v1895
        %v1897 = vstv %s1039
        %v1898 = vmul.f32 %v813, %v1897
        %v1899 = vadd.f32 %v1896, %v1898
        %v1900 = vstv %s1103
        %v1901 = vadd.f32 %v1899, %v1900
        %v1902 = vmax.f32 %v1901, 0.0
        %v1903 = vstv %s1167
        %v1904 = vmul.f32 %v1902, %v1903
        %v1905 = vadd.f32 %v1894, %v1904
        %v1906 = vstv %s976
        %v1907 = vmul.f32 %v1823, %v1906
        %v1908 = vstv %s1040
        %v1909 = vmul.f32 %v813, %v1908
        %v1910 = vadd.f32 %v1907, %v1909
        %v1911 = vstv %s1104
        %v1912 = vadd.f32 %v1910, %v1911
        %v1913 = vmax.f32 %v1912, 0.0
        %v1914 = vstv %s1168
        %v1915 = vmul.f32 %v1913, %v1914
        %v1916 = vadd.f32 %v1905, %v1915
        %v1917 = vstv %s977
        %v1918 = vmul.f32 %v1823, %v1917
        %v1919 = vstv %s1041
        %v1920 = vmul.f32 %v813, %v1919
        %v1921 = vadd.f32 %v1918, %v1920
        %v1922 = vstv %s1105
        %v1923 = vadd.f32 %v1921, %v1922
        %v1924 = vmax.f32 %v1923, 0.0
        %v1925 = vstv %s1169
        %v1926 = vmul.f32 %v1924, %v1925
        %v1927 = vadd.f32 %v1916, %v1926
        %v1928 = vstv %s978
        %v1929 = vmul.f32 %v1823, %v1928
        %v1930 = vstv %s1042
        %v1931 = vmul.f32 %v813, %v1930
        %v1932 = vadd.f32 %v1929, %v1931
        %v1933 = vstv %s1106
        %v1934 = vadd.f32 %v1932, %v1933
        %v1935 = vmax.f32 %v1934, 0.0
        %v1936 = vstv %s1170
        %v1937 = vmul.f32 %v1935, %v1936
        %v1938 = vadd.f32 %v1927, %v1937
        %v1939 = vstv %s979
        %v1940 = vmul.f32 %v1823, %v1939
        %v1941 = vstv %s1043
        %v1942 = vmul.f32 %v813, %v1941
        %v1943 = vadd.f32 %v1940, %v1942
        %v1944 = vstv %s1107
        %v1945 = vadd.f32 %v1943, %v1944
        %v1946 = vmax.f32 %v1945, 0.0
        %v1947 = vstv %s1171
        %v1948 = vmul.f32 %v1946, %v1947
        %v1949 = vadd.f32 %v1938, %v1948
        %v1950 = vstv %s980
        %v1951 = vmul.f32 %v1823, %v1950
        %v1952 = vstv %s1044
        %v1953 = vmul.f32 %v813, %v1952
        %v1954 = vadd.f32 %v1951, %v1953
        %v1955 = vstv %s1108
        %v1956 = vadd.f32 %v1954, %v1955
        %v1957 = vmax.f32 %v1956, 0.0
        %v1958 = vstv %s1172
        %v1959 = vmul.f32 %v1957, %v1958
        %v1960 = vadd.f32 %v1949, %v1959
        %v1961 = vstv %s981
        %v1962 = vmul.f32 %v1823, %v1961
        %v1963 = vstv %s1045
        %v1964 = vmul.f32 %v813, %v1963
        %v1965 = vadd.f32 %v1962, %v1964
        %v1966 = vstv %s1109
        %v1967 = vadd.f32 %v1965, %v1966
        %v1968 = vmax.f32 %v1967, 0.0
        %v1969 = vstv %s1173
        %v1970 = vmul.f32 %v1968, %v1969
        %v1971 = vadd.f32 %v1960, %v1970
        %v1972 = vstv %s982
        %v1973 = vmul.f32 %v1823, %v1972
        %v1974 = vstv %s1046
        %v1975 = vmul.f32 %v813, %v1974
        %v1976 = vadd.f32 %v1973, %v1975
        %v1977 = vstv %s1110
        %v1978 = vadd.f32 %v1976, %v1977
        %v1979 = vmax.f32 %v1978, 0.0
        %v1980 = vstv %s1174
        %v1981 = vmul.f32 %v1979, %v1980
        %v1982 = vadd.f32 %v1971, %v1981
        %v1983 = vstv %s983
        %v1984 = vmul.f32 %v1823, %v1983
        %v1985 = vstv %s1047
        %v1986 = vmul.f32 %v813, %v1985
        %v1987 = vadd.f32 %v1984, %v1986
        %v1988 = vstv %s1111
        %v1989 = vadd.f32 %v1987, %v1988
        %v1990 = vmax.f32 %v1989, 0.0
        %v1991 = vstv %s1175
        %v1992 = vmul.f32 %v1990, %v1991
        %v1993 = vadd.f32 %v1982, %v1992
        %v1994 = vstv %s984
        %v1995 = vmul.f32 %v1823, %v1994
        %v1996 = vstv %s1048
        %v1997 = vmul.f32 %v813, %v1996
        %v1998 = vadd.f32 %v1995, %v1997
        %v1999 = vstv %s1112
        %v2000 = vadd.f32 %v1998, %v1999
        %v2001 = vmax.f32 %v2000, 0.0
        %v2002 = vstv %s1176
        %v2003 = vmul.f32 %v2001, %v2002
        %v2004 = vadd.f32 %v1993, %v2003
        %v2005 = vsel %vm1197, %v2004, -inf
        %2006 = vmax.xlane.f32.xlu0 %v2005
        %v2007 = vpop.xlane.xlu0 %2006
        %v2008 = vsub.f32 %v2004, %v2007
        %v2009 = vmul.f32 %v2008, 1.442695
        %v2010 = vpow.pop %v2009
        %v2011 = vsel %vm1197, %v2010, 0.0
        %2012 = vadd.xlane.f32.xlu0 %v2011
        %v2013 = vpop.xlane.xlu0 %2012
        %v2014 = vrcp.pop %v2013
        %v2015 = vmul.f32 %v2010, %v2014
        %v2016 = vpack.c.bf16 %v2015, %v2015
        %2017 = vrot.lane.b32.xlu0 %v936, 80
        %v2018 = vpop.permute.xlu0 %2017
        %v2020 = vsel %vm1197, %v2016, 0
        %v2023 = vsel %vm1439, %v2018, 0
        %2025 = vmatprep.subr.bf16.mxu0 0
        %2026 = vmatpush1.bf16.msra.mxu0 0
        %2027 = vmatprep.subr.bf16.mxu0 0
        %2028 = vmatpush1.bf16.msra.mxu0 0
        %2029 = vmatprep.subr.bf16.mxu0 0
        %2030 = vmatpush1.bf16.msra.mxu0 0
        %2031 = vmatprep.subr.bf16.mxu0 0
        %2032 = vmatpush1.bf16.msra.mxu0 0
        %2033 = vmatprep.subr.bf16.mxu0 0
        %2034 = vmatpush1.bf16.msra.mxu0 0
        %2035 = vmatprep.subr.bf16.mxu0 0
        %2036 = vmatpush1.bf16.msra.mxu0 0
        %2037 = vmatprep.subr.bf16.mxu0 0
        %2038 = vmatpush1.bf16.msra.mxu0 0
        %2039 = vmatprep.subr.bf16.mxu0 0
        %2040 = vmatpush1.bf16.msra.mxu0 %v2023
        %2041 = vmatprep.subr.bf16.mxu0 0
        %2042 = vmatpush2.bf16.msra.mxu0 0
        %2043 = vmatprep.subr.bf16.mxu0 0
        %2044 = vmatpush2.bf16.msra.mxu0 0
        %2045 = vmatprep.subr.bf16.mxu0 0
        %2046 = vmatpush2.bf16.msra.mxu0 0
        %2047 = vmatprep.subr.bf16.mxu0 0
        %2048 = vmatpush2.bf16.msra.mxu0 0
        %2049 = vmatprep.subr.bf16.mxu0 0
        %2050 = vmatpush2.bf16.msra.mxu0 0
        %2051 = vmatprep.subr.bf16.mxu0 0
        %2052 = vmatpush2.bf16.msra.mxu0 0
        %2053 = vmatprep.subr.bf16.mxu0 0
        %2054 = vmatpush2.bf16.msra.mxu0 0
        %2055 = vmatprep.subr.bf16.mxu0 0
        %2056 = vmatpush2.bf16.msra.mxu0 0
        %2057 = vmatprep.mubr.bf16.mxu0 0
        %2058 = vmatmul.mubr.bf16.gmra.mxu0 %v2020
        %v2059 = vpop.f32.mrf.mxu0
        %v2060 = vadd.f32 0.0, %v2059
        %v2061 = vpop.f32.mrf.mxu0
        %v2062 = vpop.f32.mrf.mxu0
        %v2063 = vpop.f32.mrf.mxu0
        %2064 = vdwg.mxu0
        %2066 = vrot.lane.b32.xlu0 %v2060, 16
        %v2067 = vpop.permute.xlu0 %2066
        %vm2069 = vcmask 195712
        %2070 = vst.msk [vmem:[#allocation2] sm:$0xff] %vm2069, %v2067
        %2071 = vrot.lane.b32.xlu0 %v876, 104
        %v2072 = vpop.permute.xlu0 %2071
        %2073 = vrot.lane.b32.xlu0 %v936, 104
        %v2074 = vpop.permute.xlu0 %2073
        %v2076 = vsel %vm1197, %v2072, 0
        %v2079 = vsel %vm1197, %v2074, 0
        %2081 = vmatprep.subr.bf16.mxu0 0
        %2082 = vmatpush1.bf16.xpose.msra.mxu0 0
        %2083 = vmatprep.subr.bf16.mxu0 0
        %2084 = vmatpush1.bf16.xpose.msra.mxu0 0
        %2085 = vmatprep.subr.bf16.mxu0 0
        %2086 = vmatpush1.bf16.xpose.msra.mxu0 0
        %2087 = vmatprep.subr.bf16.mxu0 0
        %2088 = vmatpush1.bf16.xpose.msra.mxu0 0
        %2089 = vmatprep.subr.bf16.mxu0 0
        %2090 = vmatpush1.bf16.xpose.msra.mxu0 0
        %2091 = vmatprep.subr.bf16.mxu0 0
        %2092 = vmatpush1.bf16.xpose.msra.mxu0 0
        %2093 = vmatprep.subr.bf16.mxu0 0
        %2094 = vmatpush1.bf16.xpose.msra.mxu0 0
        %2095 = vmatprep.subr.bf16.mxu0 0
        %2096 = vmatpush1.bf16.xpose.msra.mxu0 %v2079
        %2097 = vmatprep.subr.bf16.mxu0 0
        %2098 = vmatpush2.bf16.xpose.msra.mxu0 0
        %2099 = vmatprep.subr.bf16.mxu0 0
        %2100 = vmatpush2.bf16.xpose.msra.mxu0 0
        %2101 = vmatprep.subr.bf16.mxu0 0
        %2102 = vmatpush2.bf16.xpose.msra.mxu0 0
        %2103 = vmatprep.subr.bf16.mxu0 0
        %2104 = vmatpush2.bf16.xpose.msra.mxu0 0
        %2105 = vmatprep.subr.bf16.mxu0 0
        %2106 = vmatpush2.bf16.xpose.msra.mxu0 0
        %2107 = vmatprep.subr.bf16.mxu0 0
        %2108 = vmatpush2.bf16.xpose.msra.mxu0 0
        %2109 = vmatprep.subr.bf16.mxu0 0
        %2110 = vmatpush2.bf16.xpose.msra.mxu0 0
        %2111 = vmatprep.subr.bf16.mxu0 0
        %2112 = vmatpush2.bf16.xpose.msra.mxu0 0
        %2113 = vmatprep.mubr.bf16.mxu0 0
        %2114 = vmatmul.mubr.bf16.gmra.mxu0 %v2076
        %v2115 = vpop.f32.mrf.mxu0
        %v2116 = vadd.f32 0.0, %v2115
        %v2117 = vpop.f32.mrf.mxu0
        %v2118 = vpop.f32.mrf.mxu0
        %v2119 = vpop.f32.mrf.mxu0
        %2120 = vdwg.mxu0
        %v2121 = vstv %s1196
        %v2122 = vstv %s985
        %v2123 = vmul.f32 %v2116, %v2122
        %v2124 = vstv %s1049
        %v2125 = vmul.f32 %v813, %v2124
        %v2126 = vadd.f32 %v2123, %v2125
        %v2127 = vstv %s1113
        %v2128 = vadd.f32 %v2126, %v2127
        %v2129 = vmax.f32 %v2128, 0.0
        %v2130 = vstv %s1177
        %v2131 = vmul.f32 %v2129, %v2130
        %v2132 = vadd.f32 %v2121, %v2131
        %v2133 = vstv %s986
        %v2134 = vmul.f32 %v2116, %v2133
        %v2135 = vstv %s1050
        %v2136 = vmul.f32 %v813, %v2135
        %v2137 = vadd.f32 %v2134, %v2136
        %v2138 = vstv %s1114
        %v2139 = vadd.f32 %v2137, %v2138
        %v2140 = vmax.f32 %v2139, 0.0
        %v2141 = vstv %s1178
        %v2142 = vmul.f32 %v2140, %v2141
        %v2143 = vadd.f32 %v2132, %v2142
        %v2144 = vstv %s987
        %v2145 = vmul.f32 %v2116, %v2144
        %v2146 = vstv %s1051
        %v2147 = vmul.f32 %v813, %v2146
        %v2148 = vadd.f32 %v2145, %v2147
        %v2149 = vstv %s1115
        %v2150 = vadd.f32 %v2148, %v2149
        %v2151 = vmax.f32 %v2150, 0.0
        %v2152 = vstv %s1179
        %v2153 = vmul.f32 %v2151, %v2152
        %v2154 = vadd.f32 %v2143, %v2153
        %v2155 = vstv %s988
        %v2156 = vmul.f32 %v2116, %v2155
        %v2157 = vstv %s1052
        %v2158 = vmul.f32 %v813, %v2157
        %v2159 = vadd.f32 %v2156, %v2158
        %v2160 = vstv %s1116
        %v2161 = vadd.f32 %v2159, %v2160
        %v2162 = vmax.f32 %v2161, 0.0
        %v2163 = vstv %s1180
        %v2164 = vmul.f32 %v2162, %v2163
        %v2165 = vadd.f32 %v2154, %v2164
        %v2166 = vstv %s989
        %v2167 = vmul.f32 %v2116, %v2166
        %v2168 = vstv %s1053
        %v2169 = vmul.f32 %v813, %v2168
        %v2170 = vadd.f32 %v2167, %v2169
        %v2171 = vstv %s1117
        %v2172 = vadd.f32 %v2170, %v2171
        %v2173 = vmax.f32 %v2172, 0.0
        %v2174 = vstv %s1181
        %v2175 = vmul.f32 %v2173, %v2174
        %v2176 = vadd.f32 %v2165, %v2175
        %v2177 = vstv %s990
        %v2178 = vmul.f32 %v2116, %v2177
        %v2179 = vstv %s1054
        %v2180 = vmul.f32 %v813, %v2179
        %v2181 = vadd.f32 %v2178, %v2180
        %v2182 = vstv %s1118
        %v2183 = vadd.f32 %v2181, %v2182
        %v2184 = vmax.f32 %v2183, 0.0
        %v2185 = vstv %s1182
        %v2186 = vmul.f32 %v2184, %v2185
        %v2187 = vadd.f32 %v2176, %v2186
        %v2188 = vstv %s991
        %v2189 = vmul.f32 %v2116, %v2188
        %v2190 = vstv %s1055
        %v2191 = vmul.f32 %v813, %v2190
        %v2192 = vadd.f32 %v2189, %v2191
        %v2193 = vstv %s1119
        %v2194 = vadd.f32 %v2192, %v2193
        %v2195 = vmax.f32 %v2194, 0.0
        %v2196 = vstv %s1183
        %v2197 = vmul.f32 %v2195, %v2196
        %v2198 = vadd.f32 %v2187, %v2197
        %v2199 = vstv %s992
        %v2200 = vmul.f32 %v2116, %v2199
        %v2201 = vstv %s1056
        %v2202 = vmul.f32 %v813, %v2201
        %v2203 = vadd.f32 %v2200, %v2202
        %v2204 = vstv %s1120
        %v2205 = vadd.f32 %v2203, %v2204
        %v2206 = vmax.f32 %v2205, 0.0
        %v2207 = vstv %s1184
        %v2208 = vmul.f32 %v2206, %v2207
        %v2209 = vadd.f32 %v2198, %v2208
        %v2210 = vstv %s993
        %v2211 = vmul.f32 %v2116, %v2210
        %v2212 = vstv %s1057
        %v2213 = vmul.f32 %v813, %v2212
        %v2214 = vadd.f32 %v2211, %v2213
        %v2215 = vstv %s1121
        %v2216 = vadd.f32 %v2214, %v2215
        %v2217 = vmax.f32 %v2216, 0.0
        %v2218 = vstv %s1185
        %v2219 = vmul.f32 %v2217, %v2218
        %v2220 = vadd.f32 %v2209, %v2219
        %v2221 = vstv %s994
        %v2222 = vmul.f32 %v2116, %v2221
        %v2223 = vstv %s1058
        %v2224 = vmul.f32 %v813, %v2223
        %v2225 = vadd.f32 %v2222, %v2224
        %v2226 = vstv %s1122
        %v2227 = vadd.f32 %v2225, %v2226
        %v2228 = vmax.f32 %v2227, 0.0
        %v2229 = vstv %s1186
        %v2230 = vmul.f32 %v2228, %v2229
        %v2231 = vadd.f32 %v2220, %v2230
        %v2232 = vstv %s995
        %v2233 = vmul.f32 %v2116, %v2232
        %v2234 = vstv %s1059
        %v2235 = vmul.f32 %v813, %v2234
        %v2236 = vadd.f32 %v2233, %v2235
        %v2237 = vstv %s1123
        %v2238 = vadd.f32 %v2236, %v2237
        %v2239 = vmax.f32 %v2238, 0.0
        %v2240 = vstv %s1187
        %v2241 = vmul.f32 %v2239, %v2240
        %v2242 = vadd.f32 %v2231, %v2241
        %v2243 = vstv %s996
        %v2244 = vmul.f32 %v2116, %v2243
        %v2245 = vstv %s1060
        %v2246 = vmul.f32 %v813, %v2245
        %v2247 = vadd.f32 %v2244, %v2246
        %v2248 = vstv %s1124
        %v2249 = vadd.f32 %v2247, %v2248
        %v2250 = vmax.f32 %v2249, 0.0
        %v2251 = vstv %s1188
        %v2252 = vmul.f32 %v2250, %v2251
        %v2253 = vadd.f32 %v2242, %v2252
        %v2254 = vstv %s997
        %v2255 = vmul.f32 %v2116, %v2254
        %v2256 = vstv %s1061
        %v2257 = vmul.f32 %v813, %v2256
        %v2258 = vadd.f32 %v2255, %v2257
        %v2259 = vstv %s1125
        %v2260 = vadd.f32 %v2258, %v2259
        %v2261 = vmax.f32 %v2260, 0.0
        %v2262 = vstv %s1189
        %v2263 = vmul.f32 %v2261, %v2262
        %v2264 = vadd.f32 %v2253, %v2263
        %v2265 = vstv %s998
        %v2266 = vmul.f32 %v2116, %v2265
        %v2267 = vstv %s1062
        %v2268 = vmul.f32 %v813, %v2267
        %v2269 = vadd.f32 %v2266, %v2268
        %v2270 = vstv %s1126
        %v2271 = vadd.f32 %v2269, %v2270
        %v2272 = vmax.f32 %v2271, 0.0
        %v2273 = vstv %s1190
        %v2274 = vmul.f32 %v2272, %v2273
        %v2275 = vadd.f32 %v2264, %v2274
        %v2276 = vstv %s999
        %v2277 = vmul.f32 %v2116, %v2276
        %v2278 = vstv %s1063
        %v2279 = vmul.f32 %v813, %v2278
        %v2280 = vadd.f32 %v2277, %v2279
        %v2281 = vstv %s1127
        %v2282 = vadd.f32 %v2280, %v2281
        %v2283 = vmax.f32 %v2282, 0.0
        %v2284 = vstv %s1191
        %v2285 = vmul.f32 %v2283, %v2284
        %v2286 = vadd.f32 %v2275, %v2285
        %v2287 = vstv %s1000
        %v2288 = vmul.f32 %v2116, %v2287
        %v2289 = vstv %s1064
        %v2290 = vmul.f32 %v813, %v2289
        %v2291 = vadd.f32 %v2288, %v2290
        %v2292 = vstv %s1128
        %v2293 = vadd.f32 %v2291, %v2292
        %v2294 = vmax.f32 %v2293, 0.0
        %v2295 = vstv %s1192
        %v2296 = vmul.f32 %v2294, %v2295
        %v2297 = vadd.f32 %v2286, %v2296
        %v2298 = vsel %vm1197, %v2297, -inf
        %2299 = vmax.xlane.f32.xlu0 %v2298
        %v2300 = vpop.xlane.xlu0 %2299
        %v2301 = vsub.f32 %v2297, %v2300
        %v2302 = vmul.f32 %v2301, 1.442695
        %v2303 = vpow.pop %v2302
        %v2304 = vsel %vm1197, %v2303, 0.0
        %2305 = vadd.xlane.f32.xlu0 %v2304
        %v2306 = vpop.xlane.xlu0 %2305
        %v2307 = vrcp.pop %v2306
        %v2308 = vmul.f32 %v2303, %v2307
        %v2309 = vpack.c.bf16 %v2308, %v2308
        %2310 = vrot.lane.b32.xlu0 %v936, 72
        %v2311 = vpop.permute.xlu0 %2310
        %v2313 = vsel %vm1197, %v2309, 0
        %v2316 = vsel %vm1439, %v2311, 0
        %2318 = vmatprep.subr.bf16.mxu0 0
        %2319 = vmatpush1.bf16.msra.mxu0 0
        %2320 = vmatprep.subr.bf16.mxu0 0
        %2321 = vmatpush1.bf16.msra.mxu0 0
        %2322 = vmatprep.subr.bf16.mxu0 0
        %2323 = vmatpush1.bf16.msra.mxu0 0
        %2324 = vmatprep.subr.bf16.mxu0 0
        %2325 = vmatpush1.bf16.msra.mxu0 0
        %2326 = vmatprep.subr.bf16.mxu0 0
        %2327 = vmatpush1.bf16.msra.mxu0 0
        %2328 = vmatprep.subr.bf16.mxu0 0
        %2329 = vmatpush1.bf16.msra.mxu0 0
        %2330 = vmatprep.subr.bf16.mxu0 0
        %2331 = vmatpush1.bf16.msra.mxu0 0
        %2332 = vmatprep.subr.bf16.mxu0 0
        %2333 = vmatpush1.bf16.msra.mxu0 %v2316
        %2334 = vmatprep.subr.bf16.mxu0 0
        %2335 = vmatpush2.bf16.msra.mxu0 0
        %2336 = vmatprep.subr.bf16.mxu0 0
        %2337 = vmatpush2.bf16.msra.mxu0 0
        %2338 = vmatprep.subr.bf16.mxu0 0
        %2339 = vmatpush2.bf16.msra.mxu0 0
        %2340 = vmatprep.subr.bf16.mxu0 0
        %2341 = vmatpush2.bf16.msra.mxu0 0
        %2342 = vmatprep.subr.bf16.mxu0 0
        %2343 = vmatpush2.bf16.msra.mxu0 0
        %2344 = vmatprep.subr.bf16.mxu0 0
        %2345 = vmatpush2.bf16.msra.mxu0 0
        %2346 = vmatprep.subr.bf16.mxu0 0
        %2347 = vmatpush2.bf16.msra.mxu0 0
        %2348 = vmatprep.subr.bf16.mxu0 0
        %2349 = vmatpush2.bf16.msra.mxu0 0
        %2350 = vmatprep.mubr.bf16.mxu0 0
        %2351 = vmatmul.mubr.bf16.gmra.mxu0 %v2313
        %v2352 = vpop.f32.mrf.mxu0
        %v2353 = vadd.f32 0.0, %v2352
        %v2354 = vpop.f32.mrf.mxu0
        %v2355 = vpop.f32.mrf.mxu0
        %v2356 = vpop.f32.mrf.mxu0
        %2357 = vdwg.mxu0
        %2359 = vrot.lane.b32.xlu0 %v2353, 24
        %v2360 = vpop.permute.xlu0 %2359
        %vm2362 = vcmask 261312
        %2363 = vst.msk [vmem:[#allocation2] sm:$0xff] %vm2362, %v2360
        %v2364 = vld [vmem:[#allocation2] sm:$0xff]
        %v2365 = vpack.c.bf16 %v2364, %v2364
        %v2366 = vld [vmem:[%s10] sm:$0xf]
        %v2367 = vld [vmem:[%s10 + $0x4] sm:$0xf]
        %v2368 = vld [vmem:[%s10 + $0x8] sm:$0xf]
        %v2369 = vld [vmem:[%s10 + $0xc] sm:$0xf]
        %v2370 = vld [vmem:[#allocation17] sm:$0x1]
        %v2372 = vlaneseq
        %v2373 = vshrl.u32 %v2372, 7
        %v2374 = vsub.s32 0, %v2373
        %v2375 = vrot.slane %v2370, %v2374
        %v2381 = vunpack.c.l.b16 %v2366
        %v2382 = vunpack.c.l.b16 %v2367
        %v2383 = vunpack.c.l.b16 %v2368
        %v2384 = vunpack.c.l.b16 %v2369
        %v2385 = vpack.c.b16 %v2382, %v2381
        %v2386 = vpack.c.b16 %v2384, %v2383
        %v2390 = vsel %vm832, %v2365, 0
        %2392 = vmatprep.subr.bf16.mxu0 0
        %2393 = vmatpush1.bf16.msra.mxu0 0
        %2394 = vmatprep.subr.bf16.mxu0 0
        %2395 = vmatpush1.bf16.msra.mxu0 0
        %2396 = vmatprep.subr.bf16.mxu0 0
        %2397 = vmatpush1.bf16.msra.mxu0 0
        %2398 = vmatprep.subr.bf16.mxu0 0
        %2399 = vmatpush1.bf16.msra.mxu0 0
        %2400 = vmatprep.subr.bf16.mxu0 0
        %2401 = vmatpush1.bf16.msra.mxu0 0
        %2402 = vmatprep.subr.bf16.mxu0 0
        %2403 = vmatpush1.bf16.msra.mxu0 0
        %2404 = vmatprep.subr.bf16.mxu0 0
        %2405 = vmatpush1.bf16.msra.mxu0 %v2386
        %2406 = vmatprep.subr.bf16.mxu0 0
        %2407 = vmatpush1.bf16.msra.mxu0 %v2385
        %2408 = vmatprep.subr.bf16.mxu0 0
        %2409 = vmatpush2.bf16.msra.mxu0 0
        %2410 = vmatprep.subr.bf16.mxu0 0
        %2411 = vmatpush2.bf16.msra.mxu0 0
        %2412 = vmatprep.subr.bf16.mxu0 0
        %2413 = vmatpush2.bf16.msra.mxu0 0
        %2414 = vmatprep.subr.bf16.mxu0 0
        %2415 = vmatpush2.bf16.msra.mxu0 0
        %2416 = vmatprep.subr.bf16.mxu0 0
        %2417 = vmatpush2.bf16.msra.mxu0 0
        %2418 = vmatprep.subr.bf16.mxu0 0
        %2419 = vmatpush2.bf16.msra.mxu0 0
        %2420 = vmatprep.subr.bf16.mxu0 0
        %2421 = vmatpush2.bf16.msra.mxu0 0
        %2422 = vmatprep.subr.bf16.mxu0 0
        %2423 = vmatpush2.bf16.msra.mxu0 0
        %2424 = vmatprep.mubr.bf16.mxu0 0
        %2425 = vmatmul.mubr.bf16.gmra.mxu0 %v2390
        %v2426 = vpop.f32.mrf.mxu0
        %v2427 = vadd.f32 %v2375, %v2426
        %v2428 = vpop.f32.mrf.mxu0
        %v2429 = vpop.f32.mrf.mxu0
        %v2430 = vpop.f32.mrf.mxu0
        %2431 = vdwg.mxu0
        %v2432 = vadd.f32 %v811, %v2427
        %v2433 = vld [vmem:[#allocation18] sm:$0x1]
        %v2434 = vld [vmem:[#allocation20] sm:$0x1]
        %v2435 = vsel %vm832, %v2432, 0.0
        %v2436 = vrot.slane %v2435, 4
        %v2437 = vadd.f32 %v2435, %v2436
        %v2438 = vrot.slane %v2437, 2
        %v2439 = vadd.f32 %v2437, %v2438
        %v2440 = vrot.slane %v2439, 1
        %v2441 = vadd.f32 %v2439, %v2440
        %v2442 = vrcp.pop 8.0
        %v2443 = vmul.f32 %v2441, %v2442
        %v2444 = vsub.f32 %v2432, %v2443
        %v2445 = vmul.f32 %v2444, %v2444
        %v2446 = vsel %vm832, %v2445, 0.0
        %v2447 = vrot.slane %v2446, 4
        %v2448 = vadd.f32 %v2446, %v2447
        %v2449 = vrot.slane %v2448, 2
        %v2450 = vadd.f32 %v2448, %v2449
        %v2451 = vrot.slane %v2450, 1
        %v2452 = vadd.f32 %v2450, %v2451
        %v2453 = vmul.f32 %v2452, %v2442
        %v2454 = vadd.f32 %v2453, 1e-05
        %v2455 = vrsqrt.pop %v2454
        %v2456 = vmul.f32 %v2455, %v2433
        %v2457 = vlaneseq
        %v2458 = vshrl.u32 %v2457, 7
        %v2459 = vsub.s32 0, %v2458
        %v2460 = vrot.slane %v2456, %v2459
        %v2461 = vmul.f32 %v2444, %v2460
        %v2463 = vlaneseq
        %v2464 = vshrl.u32 %v2463, 7
        %v2465 = vsub.s32 0, %v2464
        %v2466 = vrot.slane %v2434, %v2465
        %v2468 = vadd.f32 %v2461, %v2466
        %v2469 = vpack.c.bf16 %v2468, %v2468
        %v2470 = vld [vmem:[#allocation21] sm:$0xf]
        %v2471 = vld [vmem:[#allocation21 + $0x4] sm:$0xf]
        %v2472 = vld [vmem:[#allocation21 + $0x8] sm:$0xf]
        %v2473 = vld [vmem:[#allocation21 + $0xc] sm:$0xf]
        %v2474 = vld [vmem:[#allocation23] sm:$0x1]
        %v2476 = vlaneseq
        %v2477 = vshrl.u32 %v2476, 7
        %v2478 = vsub.s32 0, %v2477
        %v2479 = vrot.slane %v2474, %v2478
        %v2485 = vunpack.c.l.b16 %v2470
        %v2486 = vunpack.c.l.b16 %v2471
        %v2487 = vunpack.c.l.b16 %v2472
        %v2488 = vunpack.c.l.b16 %v2473
        %v2489 = vpack.c.b16 %v2486, %v2485
        %v2490 = vpack.c.b16 %v2488, %v2487
        %v2494 = vsel %vm832, %v2469, 0
        %2496 = vmatprep.subr.bf16.mxu0 0
        %2497 = vmatpush1.bf16.msra.mxu0 0
        %2498 = vmatprep.subr.bf16.mxu0 0
        %2499 = vmatpush1.bf16.msra.mxu0 0
        %2500 = vmatprep.subr.bf16.mxu0 0
        %2501 = vmatpush1.bf16.msra.mxu0 0
        %2502 = vmatprep.subr.bf16.mxu0 0
        %2503 = vmatpush1.bf16.msra.mxu0 0
        %2504 = vmatprep.subr.bf16.mxu0 0
        %2505 = vmatpush1.bf16.msra.mxu0 0
        %2506 = vmatprep.subr.bf16.mxu0 0
        %2507 = vmatpush1.bf16.msra.mxu0 0
        %2508 = vmatprep.subr.bf16.mxu0 0
        %2509 = vmatpush1.bf16.msra.mxu0 %v2490
        %2510 = vmatprep.subr.bf16.mxu0 0
        %2511 = vmatpush1.bf16.msra.mxu0 %v2489
        %2512 = vmatprep.subr.bf16.mxu0 0
        %2513 = vmatpush2.bf16.msra.mxu0 0
        %2514 = vmatprep.subr.bf16.mxu0 0
        %2515 = vmatpush2.bf16.msra.mxu0 0
        %2516 = vmatprep.subr.bf16.mxu0 0
        %2517 = vmatpush2.bf16.msra.mxu0 0
        %2518 = vmatprep.subr.bf16.mxu0 0
        %2519 = vmatpush2.bf16.msra.mxu0 0
        %2520 = vmatprep.subr.bf16.mxu0 0
        %2521 = vmatpush2.bf16.msra.mxu0 0
        %2522 = vmatprep.subr.bf16.mxu0 0
        %2523 = vmatpush2.bf16.msra.mxu0 0
        %2524 = vmatprep.subr.bf16.mxu0 0
        %2525 = vmatpush2.bf16.msra.mxu0 0
        %2526 = vmatprep.subr.bf16.mxu0 0
        %2527 = vmatpush2.bf16.msra.mxu0 0
        %2528 = vmatprep.mubr.bf16.mxu0 0
        %2529 = vmatmul.mubr.bf16.gmra.mxu0 %v2494
        %v2530 = vpop.f32.mrf.mxu0
        %v2531 = vadd.f32 %v2479, %v2530
        %v2532 = vpop.f32.mrf.mxu0
        %v2533 = vpop.f32.mrf.mxu0
        %v2534 = vpop.f32.mrf.mxu0
        %2535 = vdwg.mxu0
        %v2536 = vmax.f32 %v2531, 0.0
        %v2537 = vpack.c.bf16 %v2536, %v2536
        %v2538 = vld [vmem:[%s16] sm:$0xf]
        %v2539 = vld [vmem:[%s16 + $0x4] sm:$0xf]
        %v2540 = vld [vmem:[%s16 + $0x8] sm:$0xf]
        %v2541 = vld [vmem:[%s16 + $0xc] sm:$0xf]
        %v2542 = vld [vmem:[%s16 + $0x10] sm:$0xf]
        %v2543 = vld [vmem:[%s16 + $0x14] sm:$0xf]
        %v2544 = vld [vmem:[%s16 + $0x18] sm:$0xf]
        %v2545 = vld [vmem:[%s16 + $0x1c] sm:$0xf]
        %v2546 = vld [vmem:[%s17] sm:$0x1]
        %v2548 = vlaneseq
        %v2549 = vshrl.u32 %v2548, 7
        %v2550 = vsub.s32 0, %v2549
        %v2551 = vrot.slane %v2546, %v2550
        %v2561 = vunpack.c.l.b16 %v2538
        %v2562 = vunpack.c.l.b16 %v2539
        %v2563 = vunpack.c.l.b16 %v2540
        %v2564 = vunpack.c.l.b16 %v2541
        %v2565 = vunpack.c.l.b16 %v2542
        %v2566 = vunpack.c.l.b16 %v2543
        %v2567 = vunpack.c.l.b16 %v2544
        %v2568 = vunpack.c.l.b16 %v2545
        %v2569 = vpack.c.b16 %v2562, %v2561
        %v2570 = vpack.c.b16 %v2564, %v2563
        %v2571 = vpack.c.b16 %v2566, %v2565
        %v2572 = vpack.c.b16 %v2568, %v2567
        %vm2577 = vcmask 523264
        %v2579 = vsel %vm2577, %v2537, 0
        %2581 = vmatprep.subr.bf16.mxu0 0
        %2582 = vmatpush1.bf16.msra.mxu0 0
        %2583 = vmatprep.subr.bf16.mxu0 0
        %2584 = vmatpush1.bf16.msra.mxu0 0
        %2585 = vmatprep.subr.bf16.mxu0 0
        %2586 = vmatpush1.bf16.msra.mxu0 0
        %2587 = vmatprep.subr.bf16.mxu0 0
        %2588 = vmatpush1.bf16.msra.mxu0 0
        %2589 = vmatprep.subr.bf16.mxu0 0
        %2590 = vmatpush1.bf16.msra.mxu0 %v2572
        %2591 = vmatprep.subr.bf16.mxu0 0
        %2592 = vmatpush1.bf16.msra.mxu0 %v2571
        %2593 = vmatprep.subr.bf16.mxu0 0
        %2594 = vmatpush1.bf16.msra.mxu0 %v2570
        %2595 = vmatprep.subr.bf16.mxu0 0
        %2596 = vmatpush1.bf16.msra.mxu0 %v2569
        %2597 = vmatprep.subr.bf16.mxu0 0
        %2598 = vmatpush2.bf16.msra.mxu0 0
        %2599 = vmatprep.subr.bf16.mxu0 0
        %2600 = vmatpush2.bf16.msra.mxu0 0
        %2601 = vmatprep.subr.bf16.mxu0 0
        %2602 = vmatpush2.bf16.msra.mxu0 0
        %2603 = vmatprep.subr.bf16.mxu0 0
        %2604 = vmatpush2.bf16.msra.mxu0 0
        %2605 = vmatprep.subr.bf16.mxu0 0
        %2606 = vmatpush2.bf16.msra.mxu0 0
        %2607 = vmatprep.subr.bf16.mxu0 0
        %2608 = vmatpush2.bf16.msra.mxu0 0
        %2609 = vmatprep.subr.bf16.mxu0 0
        %2610 = vmatpush2.bf16.msra.mxu0 0
        %2611 = vmatprep.subr.bf16.mxu0 0
        %2612 = vmatpush2.bf16.msra.mxu0 0
        %2613 = vmatprep.mubr.bf16.mxu0 0
        %2614 = vmatmul.mubr.bf16.gmra.mxu0 %v2579
        %v2615 = vpop.f32.mrf.mxu0
        %v2616 = vadd.f32 %v2551, %v2615
        %v2617 = vpop.f32.mrf.mxu0
        %v2618 = vpop.f32.mrf.mxu0
        %v2619 = vpop.f32.mrf.mxu0
        %2620 = vdwg.mxu0
        %v2621 = vadd.f32 %v2468, %v2616
        %v2622 = vld [vmem:[%s18] sm:$0x1]
        %v2623 = vld [vmem:[%s19] sm:$0x1]
        %v2624 = vsel %vm832, %v2621, 0.0
        %v2625 = vrot.slane %v2624, 4
        %v2626 = vadd.f32 %v2624, %v2625
        %v2627 = vrot.slane %v2626, 2
        %v2628 = vadd.f32 %v2626, %v2627
        %v2629 = vrot.slane %v2628, 1
        %v2630 = vadd.f32 %v2628, %v2629
        %v2631 = vmul.f32 %v2630, %v2442
        %v2632 = vsub.f32 %v2621, %v2631
        %v2633 = vmul.f32 %v2632, %v2632
        %v2634 = vsel %vm832, %v2633, 0.0
        %v2635 = vrot.slane %v2634, 4
        %v2636 = vadd.f32 %v2634, %v2635
        %v2637 = vrot.slane %v2636, 2
        %v2638 = vadd.f32 %v2636, %v2637
        %v2639 = vrot.slane %v2638, 1
        %v2640 = vadd.f32 %v2638, %v2639
        %v2641 = vmul.f32 %v2640, %v2442
        %v2642 = vadd.f32 %v2641, 1e-05
        %v2643 = vrsqrt.pop %v2642
        %v2644 = vmul.f32 %v2643, %v2622
        %v2645 = vlaneseq
        %v2646 = vshrl.u32 %v2645, 7
        %v2647 = vsub.s32 0, %v2646
        %v2648 = vrot.slane %v2644, %v2647
        %v2649 = vmul.f32 %v2632, %v2648
        %v2651 = vlaneseq
        %v2652 = vshrl.u32 %v2651, 7
        %v2653 = vsub.s32 0, %v2652
        %v2654 = vrot.slane %v2623, %v2653
        %v2656 = vadd.f32 %v2649, %v2654
        %2657 = vst.msk [vmem:[%s797] sm:$0xff] %vm832, %v2656
        %s2658 = sand.u32 %s485, 1
        %s2659 = scalar_lea.sflag [#allocation5], %s2658
        %s2660 = sand.u32 %s485, 1
        %s2661 = smul.addr %s2660, 8
        %s2662 = scalar_lea.vmem [#allocation24], %s2661
        // Predicated region
        $region149: #{tpu_custom_call.1} parent=99 // pred_check
          %p2663 = pneg %p495
        $region150: #{tpu_custom_call.1} parent=99 // pred_check_branch
          %2665 = sbr.rel (%p2663) target = $region152
        $region151: #{tpu_custom_call.1} parent=99 // pred_region
          %s2667 = ssub.s32 128, 128
          %2668 = vsyncadd %s2659, %s2667
          %s2669 = smul.addr %s42, 128
          %s2670 = scalar_lea.hbm %s20, %s2669
          %s2672 = sshll.u32 %s2662, 4
          %s2673 = int_to_ptr.vmem [resolvable:$true] %s2672
          %2675 = dma.vmem_to_hbm [thread:$0]  %s2673, 128, %s2670, %s2659
        $region152: #{tpu_custom_call.1} parent=99 // pred_fallthru
          _
      $region100: #{tpu_custom_call.1} parent=5 // pred_fallthru
        _
      %p2676 = scmp.le.s32.totalorder 2, %s37
      // Predicated region
      $region153: #{tpu_custom_call.1} parent=5 // pred_check
        %p2677 = pneg %p2676
      $region154: #{tpu_custom_call.1} parent=5 // pred_check_branch
        %2679 = sbr.rel (%p2677) target = $region156
      $region155: #{tpu_custom_call.1} parent=5 // pred_region
        %s2680 = ssub.s32 %s37, 2
        // Predicated region
        $region157: #{tpu_custom_call.1} parent=155 // pred_check
          %p2681 = pneg %p501
        $region158: #{tpu_custom_call.1} parent=155 // pred_check_branch
          %2683 = sbr.rel (%p2681) target = $region160
        $region159: #{tpu_custom_call.1} parent=155 // pred_region
          %s2684 = sand.u32 %s486, 1
          %s2685 = scalar_lea.sflag [#allocation5], %s2684
          %s2686 = sand.u32 %s486, 1
          %s2687 = smul.addr %s2686, 8
          %s2688 = scalar_lea.vmem [#allocation24], %s2687
          %2689 = dma.done %s2685, 128
        $region160: #{tpu_custom_call.1} parent=155 // pred_fallthru
          _
      $region156: #{tpu_custom_call.1} parent=5 // pred_fallthru
        _
    $region6: #{tpu_custom_call.1} parent=1 // loop_footer
      %s41 = sadd.s32 1, %s37
    $region7: #{tpu_custom_call.1} parent=1 // loop_footer_branch
      %36 = sbr.rel target = $region3
    $region8: #{tpu_custom_call.1} parent=1 // loop_exit
      _
    %2690 = vsyncpa [#allocation4], 1
    %s2691 = scalar_lea.sflag [#allocation4], 1
    %2692 = vsyncpa %s2691, 1
    %2693 = vsyncpa [#allocation9], 1
    %2694 = vsyncpa [#allocation19], 1
    %2695 = vsyncpa [#allocation22], 1
    %2696 = vsyncpa [#allocation5], 1
    %s2697 = scalar_lea.sflag [#allocation5], 1
    %2698 = vsyncpa %s2697, 1
    %2699 = vsyncpa [#allocation6], 1
    %s2700 = scalar_lea.sflag [#allocation6], 1
    %2701 = vsyncpa %s2700, 1
    %2702 = vsyncpa [#allocation12], 1
    %2703 = vsyncpa [#allocation15], 1
    %2704 = vsyncpa [#allocation7], 1
    %s2705 = scalar_lea.sflag [#allocation7], 1
    %2706 = vsyncpa %s2705, 1

</llo_original>
